<compile_context>
chip_gen: v5e
topology: v5e:2x2
jax: 0.10.0
libtpu: 0.0.40
codegen_flags: <defaults>
</compile_context>

<pallas_src>
import math
import functools

import jax
import jax.numpy as jnp
from jax.experimental import pallas as pl
from jax.experimental.pallas import tpu as pltpu

EPS = 1e-5  # torch.nn.LayerNorm default eps


def _layernorm(x, gamma, beta):
    mu = jnp.mean(x, axis=-1, keepdims=True)
    var = jnp.mean((x - mu) ** 2, axis=-1, keepdims=True)
    return (x - mu) * jax.lax.rsqrt(var + EPS) * gamma + beta


# -----------------------------------------------------------------------------
# Kernel: one (batch_block, layer) grid step of the fused decoder forward
# -----------------------------------------------------------------------------
def decoder_kernel(num_layers, n_heads, d_numerical, categories, t_real,
                   z_ref,
                   g0_ref, b0_ref, wqkv_ref, bqkv_ref, wo_ref, bo_ref,
                   g1_ref, b1_ref, wf0_ref, bf0_ref, wf1_ref, bf1_ref,
                   wnum_ref, wcat_ref, bcat_ref,
                   out_ref,
                   x_scr):
    li = pl.program_id(1)
    bf16 = jnp.bfloat16

    # Load the residual stream from z at the first layer step of this batch block.
    @pl.when(li == 0)
    def _():
        x_scr[...] = z_ref[...]

    Bblk, T_pad, D = x_scr.shape
    BT = Bblk * T_pad
    dh = D // n_heads
    scale = 1.0 / math.sqrt(dh)

    x = x_scr[...]                                              # (Bblk, T_pad, D) f32

    # ---------------- attention block (prenorm; layer 0 has no norm0) ----------------
    x_n = _layernorm(x, g0_ref[0], b0_ref[0])
    use_n0 = (li > 0).astype(jnp.float32)                       # dynamic per-layer gate
    x_r = x + use_n0 * (x_n - x)

    # packed QKV: one (B*T, D) @ (D, 3D) bf16 MXU matmul, f32 accumulation
    qkv = jnp.dot(x_r.reshape(BT, D).astype(bf16), wqkv_ref[0],
                  preferred_element_type=jnp.float32) + bqkv_ref[0]

    def stack_heads(base):
        # head-major stack along the (leading) batch axis -> single-batch-dim einsums
        return jnp.concatenate(
            [qkv[:, base + h * dh: base + (h + 1) * dh].reshape(Bblk, T_pad, dh)
             for h in range(n_heads)], axis=0)                  # (H*Bblk, T_pad, dh)

    q_bh = stack_heads(0)
    k_bh = stack_heads(D)
    v_bh = stack_heads(2 * D)

    s = jnp.einsum('bqd,bkd->bqk', q_bh.astype(bf16), k_bh.astype(bf16),
                   preferred_element_type=jnp.float32) * scale
    key_ok = jax.lax.broadcasted_iota(jnp.int32, s.shape, 2) < t_real
    s = jnp.where(key_ok, s, -1e30)                             # mask padded key tokens
    s = s - jnp.max(s, axis=-1, keepdims=True)
    p = jnp.exp(s)
    p = p * pl.reciprocal(jnp.sum(p, axis=-1, keepdims=True), approx=True)
    o_bh = jnp.einsum('bqk,bkd->bqd', p.astype(bf16), v_bh.astype(bf16),
                      preferred_element_type=jnp.float32)       # (H*Bblk, T_pad, dh)

    # lane-concat heads back to (Bblk, T_pad, D), then ONE W_out matmul
    att = jnp.concatenate([o_bh[h * Bblk:(h + 1) * Bblk] for h in range(n_heads)],
                          axis=-1)
    if n_heads > 1:                                             # module: W_out only if n_heads > 1
        att = (jnp.dot(att.reshape(BT, D).astype(bf16), wo_ref[0],
                       preferred_element_type=jnp.float32)
               + bo_ref[0]).reshape(Bblk, T_pad, D)
    x = x + att

    # ---------------- FFN block ------------------------------------------------------
    x_r = _layernorm(x, g1_ref[0], b1_ref[0])
    hdn = jnp.maximum(
        jnp.dot(x_r.reshape(BT, D).astype(bf16), wf0_ref[0],
                preferred_element_type=jnp.float32) + bf0_ref[0], 0.0)
    ffn = jnp.dot(hdn.astype(bf16), wf1_ref[0],
                  preferred_element_type=jnp.float32) + bf1_ref[0]
    x = x + ffn.reshape(Bblk, T_pad, D)

    x_scr[...] = x                                              # carry to the next layer

    # ---------------- Reconstructor heads (last layer only) --------------------------
    @pl.when(li == num_layers - 1)
    def _():
        n_cat = len(categories)
        csum = sum(categories)
        # numerical part: (h_num * W).sum(-1)
        x_num = jnp.sum(x[:, :d_numerical, :] * wnum_ref[...], axis=-1)   # (Bblk, d_num)
        # categorical heads: one (Bblk*n_cat, D) @ (D, csum) matmul, diagonal blocks kept
        cat_tok = x[:, d_numerical:d_numerical + n_cat, :]                # (Bblk, n_cat, D)
        logits = (jnp.dot(cat_tok.reshape(Bblk * n_cat, D).astype(bf16), wcat_ref[...],
                          preferred_element_type=jnp.float32)
                  .reshape(Bblk, n_cat, csum) + bcat_ref[...])
        pieces = [x_num]
        off = 0
        for i, c in enumerate(categories):
            pieces.append(logits[:, i, off:off + c])
            off += c
        pad = out_ref.shape[-1] - d_numerical - csum
        if pad > 0:
            pieces.append(jnp.zeros((Bblk, pad), jnp.float32))
        out_ref[...] = jnp.concatenate(pieces, axis=-1)         # one lane-dense store


# -----------------------------------------------------------------------------
# Wrapper
# -----------------------------------------------------------------------------
def _pick_block(n, cap):
    b = min(n, cap)
    while n % b:
        b -= 1
    return b


def decoder_forward(z, kp, n_heads, d_numerical, categories, *, block_b=None):
    B, T, D = z.shape
    n_cat = len(categories)
    csum = int(sum(categories))
    assert T == d_numerical + n_cat
    L = kp['wqkv'].shape[0]
    Hf = kp['wf0'].shape[-1]

    T_pad = ((T + 7) // 8) * 8                       # sublane-aligned token count
    P = ((d_numerical + csum + 127) // 128) * 128    # lane-dense packed output width

    if block_b is None:
        block_b = _pick_block(B, 16)
    assert B % block_b == 0
    nb = B // block_b

    # pad tokens with zeros; padded keys are masked inside the softmax
    z_pad = jnp.zeros((B, T_pad, D), jnp.float32).at[:, :T, :].set(z.astype(jnp.float32))

    def layer_spec(shape):
        n = len(shape)
        return pl.BlockSpec((1,) + tuple(shape), lambda b, li: (li,) + (0,) * n)

    def const_spec(shape):
        n = len(shape)
        return pl.BlockSpec(tuple(shape), lambda b, li: (0,) * n)

    kernel = functools.partial(decoder_kernel, L, n_heads, d_numerical,
                               tuple(int(c) for c in categories), T)

    operands = (z_pad, kp['g0'], kp['b0'], kp['wqkv'], kp['bqkv'],
                kp['wo'], kp['bo'], kp['g1'], kp['b1'],
                kp['wf0'], kp['bf0'], kp['wf1'], kp['bf1'],
                kp['w_num'], kp['wcat'], kp['bcat'])

    flops = int(B * T_pad * L * (8 * D * D + 4 * D * Hf + 4 * T_pad * D)
                + 2 * B * n_cat * D * csum + 2 * B * d_numerical * D)
    bytes_accessed = int(sum(int(a.size) * a.dtype.itemsize for a in operands) + B * P * 4)

    out = pl.pallas_call(
        kernel,
        out_shape=jax.ShapeDtypeStruct((B, P), jnp.float32),
        grid_spec=pltpu.PrefetchScalarGridSpec(
            num_scalar_prefetch=0,
            grid=(nb, L),                                        # (batch blocks, layers)
            in_specs=[
                pl.BlockSpec((block_b, T_pad, D), lambda b, li: (b, 0, 0)),  # z
                layer_spec((1, D)), layer_spec((1, D)),                      # norm0 g/b
                layer_spec((D, 3 * D)), layer_spec((1, 3 * D)),              # packed QKV
                layer_spec((D, D)), layer_spec((1, D)),                      # W_out, b_out
                layer_spec((1, D)), layer_spec((1, D)),                      # norm1 g/b
                layer_spec((D, Hf)), layer_spec((1, Hf)),                    # linear0
                layer_spec((Hf, D)), layer_spec((1, D)),                     # linear1
                const_spec((d_numerical, D)),                                # recon num W
                const_spec((D, csum)), const_spec((1, csum)),                # cat heads
            ],
            out_specs=pl.BlockSpec((block_b, P), lambda b, li: (b, 0)),
            scratch_shapes=[pltpu.VMEM((block_b, T_pad, D), jnp.float32)],   # residual
        ),
        compiler_params=pltpu.CompilerParams(
            # batch axis shards across cores; layer axis carries the residual scratch.
            # Per-layer weight blocks bound VMEM residency (~2 layers), so the default
            # scoped VMEM limit is sufficient on v5e/v6e/v7x.
            dimension_semantics=("parallel", "arbitrary")),
        cost_estimate=pl.CostEstimate(
            flops=flops,
            transcendentals=int(L * B * n_heads * T_pad * T_pad),
            bytes_accessed=bytes_accessed),
    )(*operands)

    x_num = out[:, :d_numerical]
    x_cat, off = [], d_numerical
    for c in categories:
        x_cat.append(out[:, off:off + c])
        off += c
    return x_num, x_cat


# -----------------------------------------------------------------------------
# Deterministic parameter init (synthetic; matches module shapes, not a ckpt)
# -----------------------------------------------------------------------------
def _xavier(key, fan_in, fan_out, gain=1.0):
    a = gain * math.sqrt(6.0 / (fan_in + fan_out))
    return jax.random.uniform(key, (fan_in, fan_out), jnp.float32, -a, a)


def init_params(key, num_layers, d_numerical, categories, d_token, factor):
    D = d_token
    Hf = int(d_token * factor)
    g0, b0, wqkv, bqkv, wo, bo = [], [], [], [], [], []
    g1, b1, wf0, bf0, wf1, bf1 = [], [], [], [], [], []
    for _ in range(num_layers):
        key, *ks = jax.random.split(key, 8)
        wq, wk, wv = _xavier(ks[0], D, D), _xavier(ks[1], D, D), _xavier(ks[2], D, D)
        g0.append(jnp.ones((1, D), jnp.float32)); b0.append(jnp.zeros((1, D), jnp.float32))
        wqkv.append(jnp.concatenate([wq, wk, wv], axis=1))       # (D, 3D) packed
        bqkv.append(jnp.zeros((1, 3 * D), jnp.float32))
        wo.append(_xavier(ks[3], D, D)); bo.append(jnp.zeros((1, D), jnp.float32))
        g1.append(jnp.ones((1, D), jnp.float32)); b1.append(jnp.zeros((1, D), jnp.float32))
        wf0.append(_xavier(ks[4], D, Hf)); bf0.append(0.01 * jnp.ones((1, Hf), jnp.float32))
        wf1.append(_xavier(ks[5], Hf, D)); bf1.append(0.01 * jnp.ones((1, D), jnp.float32))
    key, kn = jax.random.split(key)
    w_num = _xavier(kn, d_numerical, D, gain=1.0 / math.sqrt(2))
    cat_w, cat_b = [], []
    for c in categories:
        key, kc = jax.random.split(key)
        cat_w.append(_xavier(kc, D, c, gain=1.0 / math.sqrt(2)))  # (in, out)
        cat_b.append(jnp.zeros((1, c), jnp.float32))
    st = lambda xs: jnp.stack(xs, axis=0)
    return dict(g0=st(g0), b0=st(b0), wqkv=st(wqkv), bqkv=st(bqkv), wo=st(wo), bo=st(bo),
                g1=st(g1), b1=st(b1), wf0=st(wf0), bf0=st(bf0), wf1=st(wf1), bf1=st(bf1),
                w_num=w_num, cat_w=cat_w, cat_b=cat_b)


def prepare_kernel_params(raw):
    """Kernel-ready params: bf16 matmul weights + packed categorical head, built ONCE."""
    bf16 = jnp.bfloat16
    return dict(
        g0=raw['g0'], b0=raw['b0'],
        wqkv=raw['wqkv'].astype(bf16), bqkv=raw['bqkv'],
        wo=raw['wo'].astype(bf16), bo=raw['bo'],
        g1=raw['g1'], b1=raw['b1'],
        wf0=raw['wf0'].astype(bf16), bf0=raw['bf0'],
        wf1=raw['wf1'].astype(bf16), bf1=raw['bf1'],
        w_num=raw['w_num'],
        wcat=jnp.concatenate(raw['cat_w'], axis=1).astype(bf16),   # (D, sum(C))
        bcat=jnp.concatenate(raw['cat_b'], axis=1))                # (1, sum(C))


# -----------------------------------------------------------------------------
# Pure-JAX f32 reference (mirrors the PyTorch forward) for a correctness check
# -----------------------------------------------------------------------------
def reference_forward(z, raw, n_heads, d_numerical, categories):
    def ln(x, g, b):
        mu = x.mean(-1, keepdims=True)
        var = ((x - mu) ** 2).mean(-1, keepdims=True)
        return (x - mu) / jnp.sqrt(var + EPS) * g + b

    x = z.astype(jnp.float32)
    B, T, D = x.shape
    dh = D // n_heads
    L = raw['wqkv'].shape[0]
    for li in range(L):
        x_r = ln(x, raw['g0'][li, 0], raw['b0'][li, 0]) if li > 0 else x
        qkv = x_r @ raw['wqkv'][li] + raw['bqkv'][li, 0]
        q, k, v = qkv[..., :D], qkv[..., D:2 * D], qkv[..., 2 * D:]
        qh = q.reshape(B, T, n_heads, dh).transpose(0, 2, 1, 3)
        kh = k.reshape(B, T, n_heads, dh).transpose(0, 2, 1, 3)
        vh = v.reshape(B, T, n_heads, dh).transpose(0, 2, 1, 3)
        a = jnp.einsum('bhqd,bhkd->bhqk', qh, kh) / math.sqrt(dh)
        att = jnp.einsum('bhqk,bhkd->bhqd', jax.nn.softmax(a, -1), vh)
        att = att.transpose(0, 2, 1, 3).reshape(B, T, D)
        if n_heads > 1:
            att = att @ raw['wo'][li] + raw['bo'][li, 0]
        x = x + att
        x_r = ln(x, raw['g1'][li, 0], raw['b1'][li, 0])
        ffn = (jnp.maximum(x_r @ raw['wf0'][li] + raw['bf0'][li, 0], 0.0)
               @ raw['wf1'][li] + raw['bf1'][li, 0])
        x = x + ffn
    x_num = jnp.sum(x[:, :d_numerical] * raw['w_num'][None], -1)
    x_cat = [x[:, d_numerical + i] @ w + b[0]
             for i, (w, b) in enumerate(zip(raw['cat_w'], raw['cat_b']))]
    return x_num, x_cat


if __name__ == "__main__":
    # Small config consistent with the module
    num_layers = 2
    d_numerical = 3
    categories = [4, 5]
    d_token = 32
    n_head = 4
    factor = 2
    batch = 16
    n_tokens = d_numerical + len(categories)        # Reconstructor expects this token count

    key = jax.random.PRNGKey(0)
    key, kz = jax.random.split(key)
    z = jax.random.normal(kz, (batch, n_tokens, d_token), jnp.float32)

    raw = init_params(key, num_layers, d_numerical, categories, d_token, factor)
    kparams = prepare_kernel_params(raw)

    # block_b=8 exercises >1 batch block on the "parallel" grid axis
    x_num, x_cat = decoder_forward(z, kparams, n_head, d_numerical, categories, block_b=8)
    x_num = jax.block_until_ready(x_num)
    x_cat = [jax.block_until_ready(c) for c in x_cat]

    # correctness check vs pure-JAX f32 reference (tolerance covers bf16 matmul operands
    # and pl.reciprocal(approx=True) in the softmax denominator)
    r_num, r_cat = reference_forward(z, raw, n_head, d_numerical, categories)
    assert x_num.shape == (batch, d_numerical)
    assert jnp.allclose(x_num, r_num, atol=1e-1, rtol=1e-1), \
        float(jnp.max(jnp.abs(x_num - r_num)))
    for c, rc, d in zip(x_cat, r_cat, categories):
        assert c.shape == (batch, d)
        assert jnp.allclose(c, rc, atol=1e-1, rtol=1e-1), float(jnp.max(jnp.abs(c - rc)))

    print("KERNEL_OK")
</pallas_src>

<mosaic_0001>
module attributes {stable_mosaic.version = 11 : i64} {
  func.func @decoder_kernel(%arg0: i32, %arg1: i32, %arg2: memref<8x8x32xf32, #tpu.memory_space<vmem>>, %arg3: memref<1x1x32xf32, #tpu.memory_space<vmem>>, %arg4: memref<1x1x32xf32, #tpu.memory_space<vmem>>, %arg5: memref<1x32x96xbf16, #tpu.memory_space<vmem>>, %arg6: memref<1x1x96xf32, #tpu.memory_space<vmem>>, %arg7: memref<1x32x32xbf16, #tpu.memory_space<vmem>>, %arg8: memref<1x1x32xf32, #tpu.memory_space<vmem>>, %arg9: memref<1x1x32xf32, #tpu.memory_space<vmem>>, %arg10: memref<1x1x32xf32, #tpu.memory_space<vmem>>, %arg11: memref<1x32x64xbf16, #tpu.memory_space<vmem>>, %arg12: memref<1x1x64xf32, #tpu.memory_space<vmem>>, %arg13: memref<1x64x32xbf16, #tpu.memory_space<vmem>>, %arg14: memref<1x1x32xf32, #tpu.memory_space<vmem>>, %arg15: memref<3x32xf32, #tpu.memory_space<vmem>>, %arg16: memref<32x9xbf16, #tpu.memory_space<vmem>>, %arg17: memref<1x9xf32, #tpu.memory_space<vmem>>, %arg18: memref<8x128xf32, #tpu.memory_space<vmem>>, %arg19: memref<8x8x32xf32, #tpu.memory_space<vmem>>) attributes {dimension_semantics = [#tpu.dimension_semantics<parallel>, #tpu.dimension_semantics<arbitrary>], iteration_bounds = array<i64: 2, 2>, scalar_prefetch = 0 : i64, scratch_operands = 1 : i64, tpu.core_type = #tpu.core_type<tc>, window_params = [{transform_indices = @transform_0, window_bounds = array<i64: 8, 8, 32>}, {transform_indices = @transform_1, window_bounds = array<i64: 1, 1, 32>}, {transform_indices = @transform_2, window_bounds = array<i64: 1, 1, 32>}, {transform_indices = @transform_3, window_bounds = array<i64: 1, 32, 96>}, {transform_indices = @transform_4, window_bounds = array<i64: 1, 1, 96>}, {transform_indices = @transform_5, window_bounds = array<i64: 1, 32, 32>}, {transform_indices = @transform_6, window_bounds = array<i64: 1, 1, 32>}, {transform_indices = @transform_7, window_bounds = array<i64: 1, 1, 32>}, {transform_indices = @transform_8, window_bounds = array<i64: 1, 1, 32>}, {transform_indices = @transform_9, window_bounds = array<i64: 1, 32, 64>}, {transform_indices = @transform_10, window_bounds = array<i64: 1, 1, 64>}, {transform_indices = @transform_11, window_bounds = array<i64: 1, 64, 32>}, {transform_indices = @transform_12, window_bounds = array<i64: 1, 1, 32>}, {pipeline_mode = #tpu.pipeline_mode<synchronous>, transform_indices = @transform_13, window_bounds = array<i64: 3, 32>}, {pipeline_mode = #tpu.pipeline_mode<synchronous>, transform_indices = @transform_14, window_bounds = array<i64: 32, 9>}, {pipeline_mode = #tpu.pipeline_mode<synchronous>, transform_indices = @transform_15, window_bounds = array<i64: 1, 9>}, {transform_indices = @transform_16, window_bounds = array<i64: 8, 128>}]} {
    %c0_i32 = arith.constant 0 : i32
    %0 = arith.cmpi eq, %arg1, %c0_i32 : i32
    %1 = arith.extui %0 : i1 to i32
    %c0_i32_0 = arith.constant 0 : i32
    %2 = arith.cmpi ne, %1, %c0_i32_0 : i32
    scf.if %2 {
      %c0_64 = arith.constant 0 : index
      %c0_65 = arith.constant 0 : index
      %c0_66 = arith.constant 0 : index
      %167 = vector.load %arg2[%c0_64, %c0_65, %c0_66] : memref<8x8x32xf32, #tpu.memory_space<vmem>>, vector<8x8x32xf32>
      %c0_67 = arith.constant 0 : index
      %c0_68 = arith.constant 0 : index
      %c0_69 = arith.constant 0 : index
      %168 = vector.load %arg19[%c0_67, %c0_68, %c0_69] : memref<8x8x32xf32, #tpu.memory_space<vmem>>, vector<8x8x32xf32>
      tpu.vector_store %arg19[%c0_67, %c0_68, %c0_69], %167 {strides = array<i32>} : memref<8x8x32xf32, #tpu.memory_space<vmem>>, vector<8x8x32xf32>,
    } else {
    }
    %c0 = arith.constant 0 : index
    %c0_1 = arith.constant 0 : index
    %c0_2 = arith.constant 0 : index
    %3 = vector.load %arg19[%c0, %c0_1, %c0_2] : memref<8x8x32xf32, #tpu.memory_space<vmem>>, vector<8x8x32xf32>
    %c0_3 = arith.constant 0 : index
    %c0_4 = arith.constant 0 : index
    %c0_5 = arith.constant 0 : index
    %4 = vector.load %arg3[%c0_3, %c0_4, %c0_5] : memref<1x1x32xf32, #tpu.memory_space<vmem>>, vector<1x1x32xf32>
    %5 = vector.shape_cast %4 : vector<1x1x32xf32> to vector<1x32xf32>
    %c0_6 = arith.constant 0 : index
    %c0_7 = arith.constant 0 : index
    %c0_8 = arith.constant 0 : index
    %6 = vector.load %arg4[%c0_6, %c0_7, %c0_8] : memref<1x1x32xf32, #tpu.memory_space<vmem>>, vector<1x1x32xf32>
    %7 = vector.shape_cast %6 : vector<1x1x32xf32> to vector<1x32xf32>
    %cst = arith.constant dense<0.000000e+00> : vector<8x8xf32>
    %8 = vector.multi_reduction <add>, %3, %cst [2] : vector<8x8x32xf32> to vector<8x8xf32>
    %9 = vector.shape_cast %8 : vector<8x8xf32> to vector<8x8x1xf32>
    %cst_9 = arith.constant 3.200000e+01 : f32
    %10 = vector.broadcast %cst_9 : f32 to vector<8x8x1xf32>
    %11 = arith.divf %9, %10 : vector<8x8x1xf32>
    %12 = vector.broadcast %11 : vector<8x8x1xf32> to vector<8x8x32xf32>
    %13 = arith.subf %3, %12 : vector<8x8x32xf32>
    %14 = arith.mulf %13, %13 : vector<8x8x32xf32>
    %cst_10 = arith.constant dense<0.000000e+00> : vector<8x8xf32>
    %15 = vector.multi_reduction <add>, %14, %cst_10 [2] : vector<8x8x32xf32> to vector<8x8xf32>
    %16 = vector.shape_cast %15 : vector<8x8xf32> to vector<8x8x1xf32>
    %cst_11 = arith.constant 3.200000e+01 : f32
    %17 = vector.broadcast %cst_11 : f32 to vector<8x8x1xf32>
    %18 = arith.divf %16, %17 : vector<8x8x1xf32>
    %19 = vector.broadcast %11 : vector<8x8x1xf32> to vector<8x8x32xf32>
    %20 = arith.subf %3, %19 : vector<8x8x32xf32>
    %cst_12 = arith.constant 9.99999974E-6 : f32
    %21 = vector.broadcast %cst_12 : f32 to vector<8x8x1xf32>
    %22 = arith.addf %18, %21 : vector<8x8x1xf32>
    %23 = math.rsqrt %22 : vector<8x8x1xf32>
    %24 = vector.broadcast %23 : vector<8x8x1xf32> to vector<8x8x32xf32>
    %25 = arith.mulf %20, %24 : vector<8x8x32xf32>
    %26 = vector.shape_cast %5 : vector<1x32xf32> to vector<1x1x32xf32>
    %27 = vector.broadcast %26 : vector<1x1x32xf32> to vector<8x8x32xf32>
    %28 = arith.mulf %25, %27 : vector<8x8x32xf32>
    %29 = vector.shape_cast %7 : vector<1x32xf32> to vector<1x1x32xf32>
    %30 = vector.broadcast %29 : vector<1x1x32xf32> to vector<8x8x32xf32>
    %31 = arith.addf %28, %30 : vector<8x8x32xf32>
    %c0_i32_13 = arith.constant 0 : i32
    %32 = arith.cmpi sgt, %arg1, %c0_i32_13 : i32
    %33 = arith.extui %32 : i1 to i32
    %34 = arith.sitofp %33 : i32 to f32
    %35 = arith.subf %31, %3 : vector<8x8x32xf32>
    %36 = vector.broadcast %34 : f32 to vector<8x8x32xf32>
    %37 = arith.mulf %36, %35 : vector<8x8x32xf32>
    %38 = arith.addf %3, %37 : vector<8x8x32xf32>
    %39 = vector.shape_cast %38 : vector<8x8x32xf32> to vector<64x32xf32>
    %40 = arith.truncf %39 : vector<64x32xf32> to vector<64x32xbf16>
    %c0_14 = arith.constant 0 : index
    %c0_15 = arith.constant 0 : index
    %c0_16 = arith.constant 0 : index
    %41 = vector.load %arg5[%c0_14, %c0_15, %c0_16] : memref<1x32x96xbf16, #tpu.memory_space<vmem>>, vector<1x32x96xbf16>
    %42 = vector.shape_cast %41 : vector<1x32x96xbf16> to vector<32x96xbf16>
    %cst_17 = arith.constant dense<0.000000e+00> : vector<64x96xf32>
    %43 = tpu.matmul %40, %42, %cst_17 {dimension_numbers = #tpu.dot_dimension_numbers<[1], [0], [0], [1], [0, 0, 1, 1], [], []>} : vector<64x32xbf16>, vector<32x96xbf16>, vector<64x96xf32> -> vector<64x96xf32>
    %c0_18 = arith.constant 0 : index
    %c0_19 = arith.constant 0 : index
    %c0_20 = arith.constant 0 : index
    %44 = vector.load %arg6[%c0_18, %c0_19, %c0_20] : memref<1x1x96xf32, #tpu.memory_space<vmem>>, vector<1x1x96xf32>
    %45 = vector.shape_cast %44 : vector<1x1x96xf32> to vector<1x96xf32>
    %46 = vector.broadcast %45 : vector<1x96xf32> to vector<64x96xf32>
    %47 = arith.addf %43, %46 : vector<64x96xf32>
    %48 = vector.extract_strided_slice %47 {offsets = [0, 0], sizes = [64, 8], strides = [1, 1]} : vector<64x96xf32> to vector<64x8xf32>
    %49 = vector.shape_cast %48 : vector<64x8xf32> to vector<8x8x8xf32>
    %50 = vector.extract_strided_slice %47 {offsets = [0, 8], sizes = [64, 8], strides = [1, 1]} : vector<64x96xf32> to vector<64x8xf32>
    %51 = vector.shape_cast %50 : vector<64x8xf32> to vector<8x8x8xf32>
    %52 = vector.extract_strided_slice %47 {offsets = [0, 16], sizes = [64, 8], strides = [1, 1]} : vector<64x96xf32> to vector<64x8xf32>
    %53 = vector.shape_cast %52 : vector<64x8xf32> to vector<8x8x8xf32>
    %54 = vector.extract_strided_slice %47 {offsets = [0, 24], sizes = [64, 8], strides = [1, 1]} : vector<64x96xf32> to vector<64x8xf32>
    %55 = vector.shape_cast %54 : vector<64x8xf32> to vector<8x8x8xf32>
    %56 = tpu.concatenate %49, %51, %53, %55 in 0 : vector<8x8x8xf32>, vector<8x8x8xf32>, vector<8x8x8xf32>, vector<8x8x8xf32> -> vector<32x8x8xf32>
    %57 = vector.extract_strided_slice %47 {offsets = [0, 32], sizes = [64, 8], strides = [1, 1]} : vector<64x96xf32> to vector<64x8xf32>
    %58 = vector.shape_cast %57 : vector<64x8xf32> to vector<8x8x8xf32>
    %59 = vector.extract_strided_slice %47 {offsets = [0, 40], sizes = [64, 8], strides = [1, 1]} : vector<64x96xf32> to vector<64x8xf32>
    %60 = vector.shape_cast %59 : vector<64x8xf32> to vector<8x8x8xf32>
    %61 = vector.extract_strided_slice %47 {offsets = [0, 48], sizes = [64, 8], strides = [1, 1]} : vector<64x96xf32> to vector<64x8xf32>
    %62 = vector.shape_cast %61 : vector<64x8xf32> to vector<8x8x8xf32>
    %63 = vector.extract_strided_slice %47 {offsets = [0, 56], sizes = [64, 8], strides = [1, 1]} : vector<64x96xf32> to vector<64x8xf32>
    %64 = vector.shape_cast %63 : vector<64x8xf32> to vector<8x8x8xf32>
    %65 = tpu.concatenate %58, %60, %62, %64 in 0 : vector<8x8x8xf32>, vector<8x8x8xf32>, vector<8x8x8xf32>, vector<8x8x8xf32> -> vector<32x8x8xf32>
    %66 = vector.extract_strided_slice %47 {offsets = [0, 64], sizes = [64, 8], strides = [1, 1]} : vector<64x96xf32> to vector<64x8xf32>
    %67 = vector.shape_cast %66 : vector<64x8xf32> to vector<8x8x8xf32>
    %68 = vector.extract_strided_slice %47 {offsets = [0, 72], sizes = [64, 8], strides = [1, 1]} : vector<64x96xf32> to vector<64x8xf32>
    %69 = vector.shape_cast %68 : vector<64x8xf32> to vector<8x8x8xf32>
    %70 = vector.extract_strided_slice %47 {offsets = [0, 80], sizes = [64, 8], strides = [1, 1]} : vector<64x96xf32> to vector<64x8xf32>
    %71 = vector.shape_cast %70 : vector<64x8xf32> to vector<8x8x8xf32>
    %72 = vector.extract_strided_slice %47 {offsets = [0, 88], sizes = [64, 8], strides = [1, 1]} : vector<64x96xf32> to vector<64x8xf32>
    %73 = vector.shape_cast %72 : vector<64x8xf32> to vector<8x8x8xf32>
    %74 = tpu.concatenate %67, %69, %71, %73 in 0 : vector<8x8x8xf32>, vector<8x8x8xf32>, vector<8x8x8xf32>, vector<8x8x8xf32> -> vector<32x8x8xf32>
    %75 = arith.truncf %56 : vector<32x8x8xf32> to vector<32x8x8xbf16>
    %76 = arith.truncf %65 : vector<32x8x8xf32> to vector<32x8x8xbf16>
    "tpu.trace_start"() <{level = 10 : i32, message = "bqd,bkd->bqk"}> : () -> ()
    %cst_21 = arith.constant dense<0.000000e+00> : vector<32x8x8xf32>
    %77 = tpu.matmul %75, %76, %cst_21 {dimension_numbers = #tpu.dot_dimension_numbers<[2], [2], [1], [1], [0, 0, 0, 1, 1, 1], [0], [0]>} : vector<32x8x8xbf16>, vector<32x8x8xbf16>, vector<32x8x8xf32> -> vector<32x8x8xf32>
    "tpu.trace_stop"() : () -> ()
    %cst_22 = arith.constant 0.353553385 : f32
    %78 = vector.broadcast %cst_22 : f32 to vector<32x8x8xf32>
    %79 = arith.mulf %77, %78 : vector<32x8x8xf32>
    %80 = tpu.iota {dimensions = array<i32: 2>} : vector<32x8x8xi32>
    %c5_i32 = arith.constant 5 : i32
    %81 = vector.broadcast %c5_i32 : i32 to vector<32x8x8xi32>
    %82 = arith.cmpi slt, %80, %81 : vector<32x8x8xi32>
    %cst_23 = arith.constant -1.000000e+30 : f32
    %83 = vector.broadcast %cst_23 : f32 to vector<32x8x8xf32>
    %84 = arith.select %82, %79, %83 : vector<32x8x8xi1>, vector<32x8x8xf32>
    %cst_24 = arith.constant dense<0xFF800000> : vector<32x8xf32>
    %85 = vector.multi_reduction <maximumf>, %84, %cst_24 [2] : vector<32x8x8xf32> to vector<32x8xf32>
    %86 = vector.shape_cast %85 : vector<32x8xf32> to vector<32x8x1xf32>
    %87 = vector.broadcast %86 : vector<32x8x1xf32> to vector<32x8x8xf32>
    %88 = arith.subf %84, %87 : vector<32x8x8xf32>
    %89 = math.exp %88 : vector<32x8x8xf32>
    %cst_25 = arith.constant dense<0.000000e+00> : vector<32x8xf32>
    %90 = vector.multi_reduction <add>, %89, %cst_25 [2] : vector<32x8x8xf32> to vector<32x8xf32>
    %91 = vector.shape_cast %90 : vector<32x8xf32> to vector<32x8x1xf32>
    %92 = tpu.reciprocal %91 {approx = true} : vector<32x8x1xf32> -> vector<32x8x1xf32>
    %93 = vector.broadcast %92 : vector<32x8x1xf32> to vector<32x8x8xf32>
    %94 = arith.mulf %89, %93 : vector<32x8x8xf32>
    %95 = arith.truncf %94 : vector<32x8x8xf32> to vector<32x8x8xbf16>
    %96 = arith.truncf %74 : vector<32x8x8xf32> to vector<32x8x8xbf16>
    "tpu.trace_start"() <{level = 10 : i32, message = "bqk,bkd->bqd"}> : () -> ()
    %cst_26 = arith.constant dense<0.000000e+00> : vector<32x8x8xf32>
    %97 = tpu.matmul %95, %96, %cst_26 {dimension_numbers = #tpu.dot_dimension_numbers<[2], [1], [1], [2], [0, 0, 0, 1, 1, 2], [0], [0]>} : vector<32x8x8xbf16>, vector<32x8x8xbf16>, vector<32x8x8xf32> -> vector<32x8x8xf32>
    "tpu.trace_stop"() : () -> ()
    %98 = vector.extract_strided_slice %97 {offsets = [0, 0, 0], sizes = [8, 8, 8], strides = [1, 1, 1]} : vector<32x8x8xf32> to vector<8x8x8xf32>
    %99 = vector.extract_strided_slice %97 {offsets = [8, 0, 0], sizes = [8, 8, 8], strides = [1, 1, 1]} : vector<32x8x8xf32> to vector<8x8x8xf32>
    %100 = vector.extract_strided_slice %97 {offsets = [16, 0, 0], sizes = [8, 8, 8], strides = [1, 1, 1]} : vector<32x8x8xf32> to vector<8x8x8xf32>
    %101 = vector.extract_strided_slice %97 {offsets = [24, 0, 0], sizes = [8, 8, 8], strides = [1, 1, 1]} : vector<32x8x8xf32> to vector<8x8x8xf32>
    %102 = tpu.concatenate %98, %99, %100, %101 in 2 : vector<8x8x8xf32>, vector<8x8x8xf32>, vector<8x8x8xf32>, vector<8x8x8xf32> -> vector<8x8x32xf32>
    %103 = vector.shape_cast %102 : vector<8x8x32xf32> to vector<64x32xf32>
    %104 = arith.truncf %103 : vector<64x32xf32> to vector<64x32xbf16>
    %c0_27 = arith.constant 0 : index
    %c0_28 = arith.constant 0 : index
    %c0_29 = arith.constant 0 : index
    %105 = vector.load %arg7[%c0_27, %c0_28, %c0_29] : memref<1x32x32xbf16, #tpu.memory_space<vmem>>, vector<1x32x32xbf16>
    %106 = vector.shape_cast %105 : vector<1x32x32xbf16> to vector<32x32xbf16>
    %cst_30 = arith.constant dense<0.000000e+00> : vector<64x32xf32>
    %107 = tpu.matmul %104, %106, %cst_30 {dimension_numbers = #tpu.dot_dimension_numbers<[1], [0], [0], [1], [0, 0, 1, 1], [], []>} : vector<64x32xbf16>, vector<32x32xbf16>, vector<64x32xf32> -> vector<64x32xf32>
    %c0_31 = arith.constant 0 : index
    %c0_32 = arith.constant 0 : index
    %c0_33 = arith.constant 0 : index
    %108 = vector.load %arg8[%c0_31, %c0_32, %c0_33] : memref<1x1x32xf32, #tpu.memory_space<vmem>>, vector<1x1x32xf32>
    %109 = vector.shape_cast %108 : vector<1x1x32xf32> to vector<1x32xf32>
    %110 = vector.broadcast %109 : vector<1x32xf32> to vector<64x32xf32>
    %111 = arith.addf %107, %110 : vector<64x32xf32>
    %112 = vector.shape_cast %111 : vector<64x32xf32> to vector<8x8x32xf32>
    %113 = arith.addf %3, %112 : vector<8x8x32xf32>
    %c0_34 = arith.constant 0 : index
    %c0_35 = arith.constant 0 : index
    %c0_36 = arith.constant 0 : index
    %114 = vector.load %arg9[%c0_34, %c0_35, %c0_36] : memref<1x1x32xf32, #tpu.memory_space<vmem>>, vector<1x1x32xf32>
    %115 = vector.shape_cast %114 : vector<1x1x32xf32> to vector<1x32xf32>
    %c0_37 = arith.constant 0 : index
    %c0_38 = arith.constant 0 : index
    %c0_39 = arith.constant 0 : index
    %116 = vector.load %arg10[%c0_37, %c0_38, %c0_39] : memref<1x1x32xf32, #tpu.memory_space<vmem>>, vector<1x1x32xf32>
    %117 = vector.shape_cast %116 : vector<1x1x32xf32> to vector<1x32xf32>
    %cst_40 = arith.constant dense<0.000000e+00> : vector<8x8xf32>
    %118 = vector.multi_reduction <add>, %113, %cst_40 [2] : vector<8x8x32xf32> to vector<8x8xf32>
    %119 = vector.shape_cast %118 : vector<8x8xf32> to vector<8x8x1xf32>
    %cst_41 = arith.constant 3.200000e+01 : f32
    %120 = vector.broadcast %cst_41 : f32 to vector<8x8x1xf32>
    %121 = arith.divf %119, %120 : vector<8x8x1xf32>
    %122 = vector.broadcast %121 : vector<8x8x1xf32> to vector<8x8x32xf32>
    %123 = arith.subf %113, %122 : vector<8x8x32xf32>
    %124 = arith.mulf %123, %123 : vector<8x8x32xf32>
    %cst_42 = arith.constant dense<0.000000e+00> : vector<8x8xf32>
    %125 = vector.multi_reduction <add>, %124, %cst_42 [2] : vector<8x8x32xf32> to vector<8x8xf32>
    %126 = vector.shape_cast %125 : vector<8x8xf32> to vector<8x8x1xf32>
    %cst_43 = arith.constant 3.200000e+01 : f32
    %127 = vector.broadcast %cst_43 : f32 to vector<8x8x1xf32>
    %128 = arith.divf %126, %127 : vector<8x8x1xf32>
    %129 = vector.broadcast %121 : vector<8x8x1xf32> to vector<8x8x32xf32>
    %130 = arith.subf %113, %129 : vector<8x8x32xf32>
    %cst_44 = arith.constant 9.99999974E-6 : f32
    %131 = vector.broadcast %cst_44 : f32 to vector<8x8x1xf32>
    %132 = arith.addf %128, %131 : vector<8x8x1xf32>
    %133 = math.rsqrt %132 : vector<8x8x1xf32>
    %134 = vector.broadcast %133 : vector<8x8x1xf32> to vector<8x8x32xf32>
    %135 = arith.mulf %130, %134 : vector<8x8x32xf32>
    %136 = vector.shape_cast %115 : vector<1x32xf32> to vector<1x1x32xf32>
    %137 = vector.broadcast %136 : vector<1x1x32xf32> to vector<8x8x32xf32>
    %138 = arith.mulf %135, %137 : vector<8x8x32xf32>
    %139 = vector.shape_cast %117 : vector<1x32xf32> to vector<1x1x32xf32>
    %140 = vector.broadcast %139 : vector<1x1x32xf32> to vector<8x8x32xf32>
    %141 = arith.addf %138, %140 : vector<8x8x32xf32>
    %142 = vector.shape_cast %141 : vector<8x8x32xf32> to vector<64x32xf32>
    %143 = arith.truncf %142 : vector<64x32xf32> to vector<64x32xbf16>
    %c0_45 = arith.constant 0 : index
    %c0_46 = arith.constant 0 : index
    %c0_47 = arith.constant 0 : index
    %144 = vector.load %arg11[%c0_45, %c0_46, %c0_47] : memref<1x32x64xbf16, #tpu.memory_space<vmem>>, vector<1x32x64xbf16>
    %145 = vector.shape_cast %144 : vector<1x32x64xbf16> to vector<32x64xbf16>
    %cst_48 = arith.constant dense<0.000000e+00> : vector<64x64xf32>
    %146 = tpu.matmul %143, %145, %cst_48 {dimension_numbers = #tpu.dot_dimension_numbers<[1], [0], [0], [1], [0, 0, 1, 1], [], []>} : vector<64x32xbf16>, vector<32x64xbf16>, vector<64x64xf32> -> vector<64x64xf32>
    %c0_49 = arith.constant 0 : index
    %c0_50 = arith.constant 0 : index
    %c0_51 = arith.constant 0 : index
    %147 = vector.load %arg12[%c0_49, %c0_50, %c0_51] : memref<1x1x64xf32, #tpu.memory_space<vmem>>, vector<1x1x64xf32>
    %148 = vector.shape_cast %147 : vector<1x1x64xf32> to vector<1x64xf32>
    %149 = vector.broadcast %148 : vector<1x64xf32> to vector<64x64xf32>
    %150 = arith.addf %146, %149 : vector<64x64xf32>
    %cst_52 = arith.constant 0.000000e+00 : f32
    %151 = vector.broadcast %cst_52 : f32 to vector<64x64xf32>
    %152 = arith.maximumf %150, %151 : vector<64x64xf32>
    %153 = arith.truncf %152 : vector<64x64xf32> to vector<64x64xbf16>
    %c0_53 = arith.constant 0 : index
    %c0_54 = arith.constant 0 : index
    %c0_55 = arith.constant 0 : index
    %154 = vector.load %arg13[%c0_53, %c0_54, %c0_55] : memref<1x64x32xbf16, #tpu.memory_space<vmem>>, vector<1x64x32xbf16>
    %155 = vector.shape_cast %154 : vector<1x64x32xbf16> to vector<64x32xbf16>
    %cst_56 = arith.constant dense<0.000000e+00> : vector<64x32xf32>
    %156 = tpu.matmul %153, %155, %cst_56 {dimension_numbers = #tpu.dot_dimension_numbers<[1], [0], [0], [1], [0, 0, 1, 1], [], []>} : vector<64x64xbf16>, vector<64x32xbf16>, vector<64x32xf32> -> vector<64x32xf32>
    %c0_57 = arith.constant 0 : index
    %c0_58 = arith.constant 0 : index
    %c0_59 = arith.constant 0 : index
    %157 = vector.load %arg14[%c0_57, %c0_58, %c0_59] : memref<1x1x32xf32, #tpu.memory_space<vmem>>, vector<1x1x32xf32>
    %158 = vector.shape_cast %157 : vector<1x1x32xf32> to vector<1x32xf32>
    %159 = vector.broadcast %158 : vector<1x32xf32> to vector<64x32xf32>
    %160 = arith.addf %156, %159 : vector<64x32xf32>
    %161 = vector.shape_cast %160 : vector<64x32xf32> to vector<8x8x32xf32>
    %162 = arith.addf %113, %161 : vector<8x8x32xf32>
    %c0_60 = arith.constant 0 : index
    %c0_61 = arith.constant 0 : index
    %c0_62 = arith.constant 0 : index
    %163 = vector.load %arg19[%c0_60, %c0_61, %c0_62] : memref<8x8x32xf32, #tpu.memory_space<vmem>>, vector<8x8x32xf32>
    tpu.vector_store %arg19[%c0_60, %c0_61, %c0_62], %162 {strides = array<i32>} : memref<8x8x32xf32, #tpu.memory_space<vmem>>, vector<8x8x32xf32>,
    %c1_i32 = arith.constant 1 : i32
    %164 = arith.cmpi eq, %arg1, %c1_i32 : i32
    %165 = arith.extui %164 : i1 to i32
    %c0_i32_63 = arith.constant 0 : i32
    %166 = arith.cmpi ne, %165, %c0_i32_63 : i32
    scf.if %166 {
      %167 = vector.extract_strided_slice %162 {offsets = [0, 0, 0], sizes = [8, 3, 32], strides = [1, 1, 1]} : vector<8x8x32xf32> to vector<8x3x32xf32>
      %c0_64 = arith.constant 0 : index
      %c0_65 = arith.constant 0 : index
      %168 = vector.load %arg15[%c0_64, %c0_65] : memref<3x32xf32, #tpu.memory_space<vmem>>, vector<3x32xf32>
      %169 = vector.shape_cast %168 : vector<3x32xf32> to vector<1x3x32xf32>
      %170 = vector.broadcast %169 : vector<1x3x32xf32> to vector<8x3x32xf32>
      %171 = arith.mulf %167, %170 : vector<8x3x32xf32>
      %cst_66 = arith.constant dense<0.000000e+00> : vector<8x3xf32>
      %172 = vector.multi_reduction <add>, %171, %cst_66 [2] : vector<8x3x32xf32> to vector<8x3xf32>
      %173 = vector.extract_strided_slice %162 {offsets = [0, 3, 0], sizes = [8, 2, 32], strides = [1, 1, 1]} : vector<8x8x32xf32> to vector<8x2x32xf32>
      %174 = vector.shape_cast %173 : vector<8x2x32xf32> to vector<16x32xf32>
      %175 = arith.truncf %174 : vector<16x32xf32> to vector<16x32xbf16>
      %c0_67 = arith.constant 0 : index
      %c0_68 = arith.constant 0 : index
      %176 = vector.load %arg16[%c0_67, %c0_68] : memref<32x9xbf16, #tpu.memory_space<vmem>>, vector<32x9xbf16>
      %cst_69 = arith.constant dense<0.000000e+00> : vector<16x9xf32>
      %177 = tpu.matmul %175, %176, %cst_69 {dimension_numbers = #tpu.dot_dimension_numbers<[1], [0], [0], [1], [0, 0, 1, 1], [], []>} : vector<16x32xbf16>, vector<32x9xbf16>, vector<16x9xf32> -> vector<16x9xf32>
      %178 = vector.shape_cast %177 : vector<16x9xf32> to vector<8x2x9xf32>
      %c0_70 = arith.constant 0 : index
      %c0_71 = arith.constant 0 : index
      %179 = vector.load %arg17[%c0_70, %c0_71] : memref<1x9xf32, #tpu.memory_space<vmem>>, vector<1x9xf32>
      %180 = vector.shape_cast %179 : vector<1x9xf32> to vector<1x1x9xf32>
      %181 = vector.broadcast %180 : vector<1x1x9xf32> to vector<8x2x9xf32>
      %182 = arith.addf %178, %181 : vector<8x2x9xf32>
      %183 = vector.extract_strided_slice %182 {offsets = [0, 0, 0], sizes = [8, 1, 4], strides = [1, 1, 1]} : vector<8x2x9xf32> to vector<8x1x4xf32>
      %184 = vector.shape_cast %183 : vector<8x1x4xf32> to vector<8x4xf32>
      %185 = vector.extract_strided_slice %182 {offsets = [0, 1, 4], sizes = [8, 1, 5], strides = [1, 1, 1]} : vector<8x2x9xf32> to vector<8x1x5xf32>
      %186 = vector.shape_cast %185 : vector<8x1x5xf32> to vector<8x5xf32>
      %cst_72 = arith.constant 0.000000e+00 : f32
      %187 = vector.broadcast %cst_72 : f32 to vector<8x116xf32>
      %188 = tpu.concatenate %172, %184, %186, %187 in 1 : vector<8x3xf32>, vector<8x4xf32>, vector<8x5xf32>, vector<8x116xf32> -> vector<8x128xf32>
      %c0_73 = arith.constant 0 : index
      %c0_74 = arith.constant 0 : index
      %189 = vector.load %arg18[%c0_73, %c0_74] : memref<8x128xf32, #tpu.memory_space<vmem>>, vector<8x128xf32>
      tpu.vector_store %arg18[%c0_73, %c0_74], %188 {strides = array<i32>} : memref<8x128xf32, #tpu.memory_space<vmem>>, vector<8x128xf32>,
    } else {
    }
    return
  }
  func.func @transform_0(%arg0: i32, %arg1: i32) -> (i32, i32, i32) {
    %c0_i32 = arith.constant 0 : i32
    %c0_i32_0 = arith.constant 0 : i32
    %c0_i32_1 = arith.constant 0 : i32
    return %arg0, %c0_i32, %c0_i32_0 : i32, i32, i32
  }
  func.func @transform_1(%arg0: i32, %arg1: i32) -> (i32, i32, i32) {
    %c0_i32 = arith.constant 0 : i32
    %c0_i32_0 = arith.constant 0 : i32
    %c0_i32_1 = arith.constant 0 : i32
    return %arg1, %c0_i32, %c0_i32_0 : i32, i32, i32
  }
  func.func @transform_2(%arg0: i32, %arg1: i32) -> (i32, i32, i32) {
    %c0_i32 = arith.constant 0 : i32
    %c0_i32_0 = arith.constant 0 : i32
    %c0_i32_1 = arith.constant 0 : i32
    return %arg1, %c0_i32, %c0_i32_0 : i32, i32, i32
  }
  func.func @transform_3(%arg0: i32, %arg1: i32) -> (i32, i32, i32) {
    %c0_i32 = arith.constant 0 : i32
    %c0_i32_0 = arith.constant 0 : i32
    %c0_i32_1 = arith.constant 0 : i32
    return %arg1, %c0_i32, %c0_i32_0 : i32, i32, i32
  }
  func.func @transform_4(%arg0: i32, %arg1: i32) -> (i32, i32, i32) {
    %c0_i32 = arith.constant 0 : i32
    %c0_i32_0 = arith.constant 0 : i32
    %c0_i32_1 = arith.constant 0 : i32
    return %arg1, %c0_i32, %c0_i32_0 : i32, i32, i32
  }
  func.func @transform_5(%arg0: i32, %arg1: i32) -> (i32, i32, i32) {
    %c0_i32 = arith.constant 0 : i32
    %c0_i32_0 = arith.constant 0 : i32
    %c0_i32_1 = arith.constant 0 : i32
    return %arg1, %c0_i32, %c0_i32_0 : i32, i32, i32
  }
  func.func @transform_6(%arg0: i32, %arg1: i32) -> (i32, i32, i32) {
    %c0_i32 = arith.constant 0 : i32
    %c0_i32_0 = arith.constant 0 : i32
    %c0_i32_1 = arith.constant 0 : i32
    return %arg1, %c0_i32, %c0_i32_0 : i32, i32, i32
  }
  func.func @transform_7(%arg0: i32, %arg1: i32) -> (i32, i32, i32) {
    %c0_i32 = arith.constant 0 : i32
    %c0_i32_0 = arith.constant 0 : i32
    %c0_i32_1 = arith.constant 0 : i32
    return %arg1, %c0_i32, %c0_i32_0 : i32, i32, i32
  }
  func.func @transform_8(%arg0: i32, %arg1: i32) -> (i32, i32, i32) {
    %c0_i32 = arith.constant 0 : i32
    %c0_i32_0 = arith.constant 0 : i32
    %c0_i32_1 = arith.constant 0 : i32
    return %arg1, %c0_i32, %c0_i32_0 : i32, i32, i32
  }
  func.func @transform_9(%arg0: i32, %arg1: i32) -> (i32, i32, i32) {
    %c0_i32 = arith.constant 0 : i32
    %c0_i32_0 = arith.constant 0 : i32
    %c0_i32_1 = arith.constant 0 : i32
    return %arg1, %c0_i32, %c0_i32_0 : i32, i32, i32
  }
  func.func @transform_10(%arg0: i32, %arg1: i32) -> (i32, i32, i32) {
    %c0_i32 = arith.constant 0 : i32
    %c0_i32_0 = arith.constant 0 : i32
    %c0_i32_1 = arith.constant 0 : i32
    return %arg1, %c0_i32, %c0_i32_0 : i32, i32, i32
  }
  func.func @transform_11(%arg0: i32, %arg1: i32) -> (i32, i32, i32) {
    %c0_i32 = arith.constant 0 : i32
    %c0_i32_0 = arith.constant 0 : i32
    %c0_i32_1 = arith.constant 0 : i32
    return %arg1, %c0_i32, %c0_i32_0 : i32, i32, i32
  }
  func.func @transform_12(%arg0: i32, %arg1: i32) -> (i32, i32, i32) {
    %c0_i32 = arith.constant 0 : i32
    %c0_i32_0 = arith.constant 0 : i32
    %c0_i32_1 = arith.constant 0 : i32
    return %arg1, %c0_i32, %c0_i32_0 : i32, i32, i32
  }
  func.func @transform_13(%arg0: i32, %arg1: i32) -> (i32, i32) {
    %c0_i32 = arith.constant 0 : i32
    %c0_i32_0 = arith.constant 0 : i32
    %c0_i32_1 = arith.constant 0 : i32
    return %c0_i32, %c0_i32_0 : i32, i32
  }
  func.func @transform_14(%arg0: i32, %arg1: i32) -> (i32, i32) {
    %c0_i32 = arith.constant 0 : i32
    %c0_i32_0 = arith.constant 0 : i32
    %c0_i32_1 = arith.constant 0 : i32
    return %c0_i32, %c0_i32_0 : i32, i32
  }
  func.func @transform_15(%arg0: i32, %arg1: i32) -> (i32, i32) {
    %c0_i32 = arith.constant 0 : i32
    %c0_i32_0 = arith.constant 0 : i32
    %c0_i32_1 = arith.constant 0 : i32
    return %c0_i32, %c0_i32_0 : i32, i32
  }
  func.func @transform_16(%arg0: i32, %arg1: i32) -> (i32, i32) {
    %c0_i32 = arith.constant 0 : i32
    %c0_i32_0 = arith.constant 0 : i32
    return %arg0, %c0_i32 : i32, i32
  }
}

</mosaic_0001>

<llo_original>
// kernel: tpu_custom_call.1
$region0: #{tpu_custom_call.1}
  #allocation0 [shape = 'u32[]', space=smem, size = 0x4, offset = 0x4, fixed_abs, tag = 'smem constant byte address 0x4 - core index']
  #allocation1 [shape = 'u32[72,128]{1,0:T(1,128)}', space=vmem, size = 0x9000, scoped, tag = 'internal scratch']
  #allocation2 [shape = 'f32[8,8,32]{2,1,0:T(8,128)}', space=vmem, size = 0x8000, scoped, tag = 'scratch operand']
  %s0 = inlined_call_operand.hbm [shape: f32[16,8,32], index: 0, kind: input, shape index: {}]
  %s1 = inlined_call_operand.vmem [shape: f32[2,1,32], index: 1, kind: input, shape index: {}]
  %s2 = inlined_call_operand.hbm [shape: f32[2,1,32], index: 2, kind: input, shape index: {}]
  %s3 = inlined_call_operand.vmem [shape: bf16[2,32,96], index: 3, kind: input, shape index: {}]
  %s4 = inlined_call_operand.hbm [shape: f32[2,1,96], index: 4, kind: input, shape index: {}]
  %s5 = inlined_call_operand.vmem [shape: bf16[2,32,32], index: 5, kind: input, shape index: {}]
  %s6 = inlined_call_operand.hbm [shape: f32[2,1,32], index: 6, kind: input, shape index: {}]
  %s7 = inlined_call_operand.hbm [shape: f32[2,1,32], index: 7, kind: input, shape index: {}]
  %s8 = inlined_call_operand.hbm [shape: f32[2,1,32], index: 8, kind: input, shape index: {}]
  %s9 = inlined_call_operand.vmem [shape: bf16[2,32,64], index: 9, kind: input, shape index: {}]
  %s10 = inlined_call_operand.hbm [shape: f32[2,1,64], index: 10, kind: input, shape index: {}]
  %s11 = inlined_call_operand.vmem [shape: bf16[2,64,32], index: 11, kind: input, shape index: {}]
  %s12 = inlined_call_operand.hbm [shape: f32[2,1,32], index: 12, kind: input, shape index: {}]
  %s13 = inlined_call_operand.hbm [shape: f32[3,32], index: 13, kind: input, shape index: {}]
  %s14 = inlined_call_operand.vmem [shape: bf16[32,9], index: 14, kind: input, shape index: {}]
  %s15 = inlined_call_operand.vmem [shape: f32[1,9], index: 15, kind: input, shape index: {}]
  %s16 = inlined_call_operand.hbm [shape: f32[16,128], index: 16, kind: output, shape index: {}]
  %s17 = sld [smem:[#allocation0]]
  $region141: #{tpu_custom_call.1} parent=0
    _
  %s19 = ssub.s32 1, %s17
  %s20 = scalar_select 0, %s19, %s17
  $region1: #{tpu_custom_call.1} parent=0
    #allocation3 [shape = 'u8[65536]{0}', space=vmem, size = 0x10000, scoped, tag = 'input window, operand 0']
    #allocation4 [shape = 's32[2]{0}', space=sflag, size = 0x8, scoped, tag = 'scoped memory for tpu_custom_call.1']
    #allocation5 [shape = 's32[2]{0}', space=sflag, size = 0x8, scoped, tag = 'scoped memory for tpu_custom_call.1']
    #allocation6 [shape = 'u8[1024]{0}', space=vmem, size = 0x400, scoped, tag = 'input window, operand 2']
    #allocation7 [shape = 's32[2]{0}', space=sflag, size = 0x8, scoped, tag = 'scoped memory for tpu_custom_call.1']
    #allocation8 [shape = 'u8[1024]{0}', space=vmem, size = 0x400, scoped, tag = 'input window, operand 4']
    #allocation9 [shape = 'u8[1024]{0}', space=vmem, size = 0x400, scoped, tag = 'input window, operand 6']
    #allocation10 [shape = 's32[2]{0}', space=sflag, size = 0x8, scoped, tag = 'scoped memory for tpu_custom_call.1']
    #allocation11 [shape = 'u8[1024]{0}', space=vmem, size = 0x400, scoped, tag = 'input window, operand 7']
    #allocation12 [shape = 'u8[1024]{0}', space=vmem, size = 0x400, scoped, tag = 'input window, operand 8']
    #allocation13 [shape = 's32[2]{0}', space=sflag, size = 0x8, scoped, tag = 'scoped memory for tpu_custom_call.1']
    #allocation14 [shape = 'u8[1024]{0}', space=vmem, size = 0x400, scoped, tag = 'input window, operand 10']
    #allocation15 [shape = 'u8[1024]{0}', space=vmem, size = 0x400, scoped, tag = 'input window, operand 12']
    #allocation16 [shape = 's32[2]{0}', space=sflag, size = 0x8, scoped, tag = 'scoped memory for tpu_custom_call.1']
    #allocation17 [shape = 'u8[2048]{0}', space=vmem, size = 0x800, scoped, tag = 'input window, operand 13, single buffered']
    #allocation18 [shape = 'u8[8192]{0}', space=vmem, size = 0x2000, scoped, tag = 'output window, operand 0']
    %21 = vsyncpa [#allocation4], 0
    %s22 = scalar_lea.sflag [#allocation4], 1
    %23 = vsyncpa %s22, 0
    %24 = vsyncpa [#allocation7], 0
    %s25 = scalar_lea.sflag [#allocation7], 1
    %26 = vsyncpa %s25, 0
    %27 = vsyncpa [#allocation10], 0
    %s28 = scalar_lea.sflag [#allocation10], 1
    %29 = vsyncpa %s28, 0
    %30 = vsyncpa [#allocation13], 0
    %s31 = scalar_lea.sflag [#allocation13], 1
    %32 = vsyncpa %s31, 0
    %33 = vsyncpa [#allocation16], 0
    %s34 = scalar_lea.sflag [#allocation16], 1
    %35 = vsyncpa %s34, 0
    %36 = vsyncpa [#allocation5], 0
    %s37 = scalar_lea.sflag [#allocation5], 1
    %38 = vsyncpa %s37, 0
    loop: start=0, step=1, limit=6
    $region2: #{tpu_custom_call.1} parent=1 // loop_pre_header
      _
    $region3: #{tpu_custom_call.1} parent=1 // loop_header
      %s40 = sphi 0, %s44
      %p41 = scmp.ge.s32.totalorder %s40, 6
      %s47 = sphi 0, %s59
      %s48 = sphi 0, %s55
      %s49 = sphi 0, %s47
      %s50 = sphi 0, %s48
      %s51 = sphi 0, %s49
      %s52 = sphi 0, %s50
      %s62 = sphi 0, %s64
      %s65 = sphi 0, %s62
      %s66 = sphi 0, %s65
      %s82 = sphi 0, %s66
      %s88 = sphi 0, %s90
      %s91 = sphi 0, %s88
      %s92 = sphi 0, %s91
      %s108 = sphi 0, %s92
      %s114 = sphi 0, %s116
      %s117 = sphi 0, %s114
      %s118 = sphi 0, %s117
      %s134 = sphi 0, %s118
      %s140 = sphi 0, %s142
      %s143 = sphi 0, %s140
      %s144 = sphi 0, %s143
      %s160 = sphi 0, %s144
      %s166 = sphi 0, %s168
      %s169 = sphi 0, %s166
      %s170 = sphi 0, %s169
      %s186 = sphi 0, %s170
      %s192 = sphi 0, %s194
      %s195 = sphi 0, %s192
      %s196 = sphi 0, %s195
      %s212 = sphi 0, %s196
      %s218 = sphi 0, %s220
      %s221 = sphi 0, %s218
      %s222 = sphi 0, %s221
      %s238 = sphi 0, %s222
      %s244 = sphi 0, %s246
      %s247 = sphi 0, %s244
      %s248 = sphi 0, %s247
      %s264 = sphi 0, %s248
      %s270 = sphi 0, %s272
      %s273 = sphi 0, %s270
      %s274 = sphi 0, %s273
      %s290 = sphi 0, %s274
      %s296 = sphi 0, %s298
      %s299 = sphi 0, %s296
      %s300 = sphi 0, %s299
      %s316 = sphi 0, %s300
      %s322 = sphi 0, %s324
      %s325 = sphi 0, %s322
      %s326 = sphi 0, %s325
      %s342 = sphi 0, %s326
      %s348 = sphi 0, %s350
      %s351 = sphi 0, %s348
      %s352 = sphi 0, %s351
      %s368 = sphi 0, %s352
      %s374 = sphi 0, %s376
      %s377 = sphi 0, %s374
      %s378 = sphi 0, %s377
      %s394 = sphi 0, %s378
      %s398 = sphi 0, %s398
      %s400 = sphi 0, %s398
      %s401 = sphi 0, %s400
      %s415 = sphi 0, %s401
      %s419 = sphi 0, %s419
      %s421 = sphi 0, %s419
      %s422 = sphi 0, %s421
      %s436 = sphi 0, %s422
      %s440 = sphi 0, %s440
      %s442 = sphi 0, %s440
      %s443 = sphi 0, %s442
      %s457 = sphi 0, %s443
      %s463 = sphi 0, %s465
      %s466 = sphi 0, %s463
      %s467 = sphi 0, %s466
      %s483 = sphi 0, %s467
    $region4: #{tpu_custom_call.1} parent=1 // loop_header_branch
      %43 = sbr.rel (%p41) target = $region8
    $region5: #{tpu_custom_call.1} parent=1 // loop_body
      %s45 = ssub.s32 %s40, 1
      %s46 = ssub.s32 %s40, 2
      %s53 = sadd.s32 1, %s48
      %p54 = scmp.ge.s32.totalorder %s53, 2
      %s55 = scalar_select %p54, 0, %s53
      %s56 = sadd.s32 1, %s47
      %s57 = scalar_select %p54, %s56, %s47
      %p58 = scmp.ge.s32.totalorder %s57, 2
      %s59 = scalar_select %p58, 0, %s57
      %s60 = ssub.s32 %s47, %s59
      %p61 = scmp.eq.s32.totalorder %s60, 0
      %s63 = sadd.s32 %s62, 1
      %s64 = scalar_select %p61, %s62, %s63
      %p67 = pneg %p61
      %p68 = scmp.eq.s32.totalorder %s40, 3
      %p69 = por %p67, %p68
      %p70 = scmp.ne.s32.totalorder %s62, %s65
      %p71 = scmp.eq.s32.totalorder %s40, 0
      %p72 = por %p70, %p71
      %p73 = scmp.ne.s32.totalorder %s62, %s65
      %p74 = scmp.eq.s32.totalorder %s45, 3
      %p75 = por %p73, %p74
      %p76 = scmp.ne.s32.totalorder %s65, %s66
      %p77 = scmp.eq.s32.totalorder %s45, 0
      %p78 = por %p76, %p77
      %p79 = scmp.ne.s32.totalorder %s65, %s66
      %p80 = scmp.eq.s32.totalorder %s46, 3
      %p81 = por %p79, %p80
      %p83 = scmp.ne.s32.totalorder %s66, %s82
      %p84 = scmp.eq.s32.totalorder %s46, 0
      %p85 = por %p83, %p84
      %s86 = ssub.s32 %s48, %s55
      %p87 = scmp.eq.s32.totalorder %s86, 0
      %s89 = sadd.s32 %s88, 1
      %s90 = scalar_select %p87, %s88, %s89
      %p93 = pneg %p87
      %p94 = scmp.eq.s32.totalorder %s40, 3
      %p95 = por %p93, %p94
      %p96 = scmp.ne.s32.totalorder %s88, %s91
      %p97 = scmp.eq.s32.totalorder %s40, 0
      %p98 = por %p96, %p97
      %p99 = scmp.ne.s32.totalorder %s88, %s91
      %p100 = scmp.eq.s32.totalorder %s45, 3
      %p101 = por %p99, %p100
      %p102 = scmp.ne.s32.totalorder %s91, %s92
      %p103 = scmp.eq.s32.totalorder %s45, 0
      %p104 = por %p102, %p103
      %p105 = scmp.ne.s32.totalorder %s91, %s92
      %p106 = scmp.eq.s32.totalorder %s46, 3
      %p107 = por %p105, %p106
      %p109 = scmp.ne.s32.totalorder %s92, %s108
      %p110 = scmp.eq.s32.totalorder %s46, 0
      %p111 = por %p109, %p110
      %s112 = ssub.s32 %s48, %s55
      %p113 = scmp.eq.s32.totalorder %s112, 0
      %s115 = sadd.s32 %s114, 1
      %s116 = scalar_select %p113, %s114, %s115
      %p119 = pneg %p113
      %p120 = scmp.eq.s32.totalorder %s40, 3
      %p121 = por %p119, %p120
      %p122 = scmp.ne.s32.totalorder %s114, %s117
      %p123 = scmp.eq.s32.totalorder %s40, 0
      %p124 = por %p122, %p123
      %p125 = scmp.ne.s32.totalorder %s114, %s117
      %p126 = scmp.eq.s32.totalorder %s45, 3
      %p127 = por %p125, %p126
      %p128 = scmp.ne.s32.totalorder %s117, %s118
      %p129 = scmp.eq.s32.totalorder %s45, 0
      %p130 = por %p128, %p129
      %p131 = scmp.ne.s32.totalorder %s117, %s118
      %p132 = scmp.eq.s32.totalorder %s46, 3
      %p133 = por %p131, %p132
      %p135 = scmp.ne.s32.totalorder %s118, %s134
      %p136 = scmp.eq.s32.totalorder %s46, 0
      %p137 = por %p135, %p136
      %s138 = ssub.s32 %s48, %s55
      %p139 = scmp.eq.s32.totalorder %s138, 0
      %s141 = sadd.s32 %s140, 1
      %s142 = scalar_select %p139, %s140, %s141
      %p145 = pneg %p139
      %p146 = scmp.eq.s32.totalorder %s40, 3
      %p147 = por %p145, %p146
      %p148 = scmp.ne.s32.totalorder %s140, %s143
      %p149 = scmp.eq.s32.totalorder %s40, 0
      %p150 = por %p148, %p149
      %p151 = scmp.ne.s32.totalorder %s140, %s143
      %p152 = scmp.eq.s32.totalorder %s45, 3
      %p153 = por %p151, %p152
      %p154 = scmp.ne.s32.totalorder %s143, %s144
      %p155 = scmp.eq.s32.totalorder %s45, 0
      %p156 = por %p154, %p155
      %p157 = scmp.ne.s32.totalorder %s143, %s144
      %p158 = scmp.eq.s32.totalorder %s46, 3
      %p159 = por %p157, %p158
      %p161 = scmp.ne.s32.totalorder %s144, %s160
      %p162 = scmp.eq.s32.totalorder %s46, 0
      %p163 = por %p161, %p162
      %s164 = ssub.s32 %s48, %s55
      %p165 = scmp.eq.s32.totalorder %s164, 0
      %s167 = sadd.s32 %s166, 1
      %s168 = scalar_select %p165, %s166, %s167
      %p171 = pneg %p165
      %p172 = scmp.eq.s32.totalorder %s40, 3
      %p173 = por %p171, %p172
      %p174 = scmp.ne.s32.totalorder %s166, %s169
      %p175 = scmp.eq.s32.totalorder %s40, 0
      %p176 = por %p174, %p175
      %p177 = scmp.ne.s32.totalorder %s166, %s169
      %p178 = scmp.eq.s32.totalorder %s45, 3
      %p179 = por %p177, %p178
      %p180 = scmp.ne.s32.totalorder %s169, %s170
      %p181 = scmp.eq.s32.totalorder %s45, 0
      %p182 = por %p180, %p181
      %p183 = scmp.ne.s32.totalorder %s169, %s170
      %p184 = scmp.eq.s32.totalorder %s46, 3
      %p185 = por %p183, %p184
      %p187 = scmp.ne.s32.totalorder %s170, %s186
      %p188 = scmp.eq.s32.totalorder %s46, 0
      %p189 = por %p187, %p188
      %s190 = ssub.s32 %s48, %s55
      %p191 = scmp.eq.s32.totalorder %s190, 0
      %s193 = sadd.s32 %s192, 1
      %s194 = scalar_select %p191, %s192, %s193
      %p197 = pneg %p191
      %p198 = scmp.eq.s32.totalorder %s40, 3
      %p199 = por %p197, %p198
      %p200 = scmp.ne.s32.totalorder %s192, %s195
      %p201 = scmp.eq.s32.totalorder %s40, 0
      %p202 = por %p200, %p201
      %p203 = scmp.ne.s32.totalorder %s192, %s195
      %p204 = scmp.eq.s32.totalorder %s45, 3
      %p205 = por %p203, %p204
      %p206 = scmp.ne.s32.totalorder %s195, %s196
      %p207 = scmp.eq.s32.totalorder %s45, 0
      %p208 = por %p206, %p207
      %p209 = scmp.ne.s32.totalorder %s195, %s196
      %p210 = scmp.eq.s32.totalorder %s46, 3
      %p211 = por %p209, %p210
      %p213 = scmp.ne.s32.totalorder %s196, %s212
      %p214 = scmp.eq.s32.totalorder %s46, 0
      %p215 = por %p213, %p214
      %s216 = ssub.s32 %s48, %s55
      %p217 = scmp.eq.s32.totalorder %s216, 0
      %s219 = sadd.s32 %s218, 1
      %s220 = scalar_select %p217, %s218, %s219
      %p223 = pneg %p217
      %p224 = scmp.eq.s32.totalorder %s40, 3
      %p225 = por %p223, %p224
      %p226 = scmp.ne.s32.totalorder %s218, %s221
      %p227 = scmp.eq.s32.totalorder %s40, 0
      %p228 = por %p226, %p227
      %p229 = scmp.ne.s32.totalorder %s218, %s221
      %p230 = scmp.eq.s32.totalorder %s45, 3
      %p231 = por %p229, %p230
      %p232 = scmp.ne.s32.totalorder %s221, %s222
      %p233 = scmp.eq.s32.totalorder %s45, 0
      %p234 = por %p232, %p233
      %p235 = scmp.ne.s32.totalorder %s221, %s222
      %p236 = scmp.eq.s32.totalorder %s46, 3
      %p237 = por %p235, %p236
      %p239 = scmp.ne.s32.totalorder %s222, %s238
      %p240 = scmp.eq.s32.totalorder %s46, 0
      %p241 = por %p239, %p240
      %s242 = ssub.s32 %s48, %s55
      %p243 = scmp.eq.s32.totalorder %s242, 0
      %s245 = sadd.s32 %s244, 1
      %s246 = scalar_select %p243, %s244, %s245
      %p249 = pneg %p243
      %p250 = scmp.eq.s32.totalorder %s40, 3
      %p251 = por %p249, %p250
      %p252 = scmp.ne.s32.totalorder %s244, %s247
      %p253 = scmp.eq.s32.totalorder %s40, 0
      %p254 = por %p252, %p253
      %p255 = scmp.ne.s32.totalorder %s244, %s247
      %p256 = scmp.eq.s32.totalorder %s45, 3
      %p257 = por %p255, %p256
      %p258 = scmp.ne.s32.totalorder %s247, %s248
      %p259 = scmp.eq.s32.totalorder %s45, 0
      %p260 = por %p258, %p259
      %p261 = scmp.ne.s32.totalorder %s247, %s248
      %p262 = scmp.eq.s32.totalorder %s46, 3
      %p263 = por %p261, %p262
      %p265 = scmp.ne.s32.totalorder %s248, %s264
      %p266 = scmp.eq.s32.totalorder %s46, 0
      %p267 = por %p265, %p266
      %s268 = ssub.s32 %s48, %s55
      %p269 = scmp.eq.s32.totalorder %s268, 0
      %s271 = sadd.s32 %s270, 1
      %s272 = scalar_select %p269, %s270, %s271
      %p275 = pneg %p269
      %p276 = scmp.eq.s32.totalorder %s40, 3
      %p277 = por %p275, %p276
      %p278 = scmp.ne.s32.totalorder %s270, %s273
      %p279 = scmp.eq.s32.totalorder %s40, 0
      %p280 = por %p278, %p279
      %p281 = scmp.ne.s32.totalorder %s270, %s273
      %p282 = scmp.eq.s32.totalorder %s45, 3
      %p283 = por %p281, %p282
      %p284 = scmp.ne.s32.totalorder %s273, %s274
      %p285 = scmp.eq.s32.totalorder %s45, 0
      %p286 = por %p284, %p285
      %p287 = scmp.ne.s32.totalorder %s273, %s274
      %p288 = scmp.eq.s32.totalorder %s46, 3
      %p289 = por %p287, %p288
      %p291 = scmp.ne.s32.totalorder %s274, %s290
      %p292 = scmp.eq.s32.totalorder %s46, 0
      %p293 = por %p291, %p292
      %s294 = ssub.s32 %s48, %s55
      %p295 = scmp.eq.s32.totalorder %s294, 0
      %s297 = sadd.s32 %s296, 1
      %s298 = scalar_select %p295, %s296, %s297
      %p301 = pneg %p295
      %p302 = scmp.eq.s32.totalorder %s40, 3
      %p303 = por %p301, %p302
      %p304 = scmp.ne.s32.totalorder %s296, %s299
      %p305 = scmp.eq.s32.totalorder %s40, 0
      %p306 = por %p304, %p305
      %p307 = scmp.ne.s32.totalorder %s296, %s299
      %p308 = scmp.eq.s32.totalorder %s45, 3
      %p309 = por %p307, %p308
      %p310 = scmp.ne.s32.totalorder %s299, %s300
      %p311 = scmp.eq.s32.totalorder %s45, 0
      %p312 = por %p310, %p311
      %p313 = scmp.ne.s32.totalorder %s299, %s300
      %p314 = scmp.eq.s32.totalorder %s46, 3
      %p315 = por %p313, %p314
      %p317 = scmp.ne.s32.totalorder %s300, %s316
      %p318 = scmp.eq.s32.totalorder %s46, 0
      %p319 = por %p317, %p318
      %s320 = ssub.s32 %s48, %s55
      %p321 = scmp.eq.s32.totalorder %s320, 0
      %s323 = sadd.s32 %s322, 1
      %s324 = scalar_select %p321, %s322, %s323
      %p327 = pneg %p321
      %p328 = scmp.eq.s32.totalorder %s40, 3
      %p329 = por %p327, %p328
      %p330 = scmp.ne.s32.totalorder %s322, %s325
      %p331 = scmp.eq.s32.totalorder %s40, 0
      %p332 = por %p330, %p331
      %p333 = scmp.ne.s32.totalorder %s322, %s325
      %p334 = scmp.eq.s32.totalorder %s45, 3
      %p335 = por %p333, %p334
      %p336 = scmp.ne.s32.totalorder %s325, %s326
      %p337 = scmp.eq.s32.totalorder %s45, 0
      %p338 = por %p336, %p337
      %p339 = scmp.ne.s32.totalorder %s325, %s326
      %p340 = scmp.eq.s32.totalorder %s46, 3
      %p341 = por %p339, %p340
      %p343 = scmp.ne.s32.totalorder %s326, %s342
      %p344 = scmp.eq.s32.totalorder %s46, 0
      %p345 = por %p343, %p344
      %s346 = ssub.s32 %s48, %s55
      %p347 = scmp.eq.s32.totalorder %s346, 0
      %s349 = sadd.s32 %s348, 1
      %s350 = scalar_select %p347, %s348, %s349
      %p353 = pneg %p347
      %p354 = scmp.eq.s32.totalorder %s40, 3
      %p355 = por %p353, %p354
      %p356 = scmp.ne.s32.totalorder %s348, %s351
      %p357 = scmp.eq.s32.totalorder %s40, 0
      %p358 = por %p356, %p357
      %p359 = scmp.ne.s32.totalorder %s348, %s351
      %p360 = scmp.eq.s32.totalorder %s45, 3
      %p361 = por %p359, %p360
      %p362 = scmp.ne.s32.totalorder %s351, %s352
      %p363 = scmp.eq.s32.totalorder %s45, 0
      %p364 = por %p362, %p363
      %p365 = scmp.ne.s32.totalorder %s351, %s352
      %p366 = scmp.eq.s32.totalorder %s46, 3
      %p367 = por %p365, %p366
      %p369 = scmp.ne.s32.totalorder %s352, %s368
      %p370 = scmp.eq.s32.totalorder %s46, 0
      %p371 = por %p369, %p370
      %s372 = ssub.s32 %s48, %s55
      %p373 = scmp.eq.s32.totalorder %s372, 0
      %s375 = sadd.s32 %s374, 1
      %s376 = scalar_select %p373, %s374, %s375
      %p379 = pneg %p373
      %p380 = scmp.eq.s32.totalorder %s40, 3
      %p381 = por %p379, %p380
      %p382 = scmp.ne.s32.totalorder %s374, %s377
      %p383 = scmp.eq.s32.totalorder %s40, 0
      %p384 = por %p382, %p383
      %p385 = scmp.ne.s32.totalorder %s374, %s377
      %p386 = scmp.eq.s32.totalorder %s45, 3
      %p387 = por %p385, %p386
      %p388 = scmp.ne.s32.totalorder %s377, %s378
      %p389 = scmp.eq.s32.totalorder %s45, 0
      %p390 = por %p388, %p389
      %p391 = scmp.ne.s32.totalorder %s377, %s378
      %p392 = scmp.eq.s32.totalorder %s46, 3
      %p393 = por %p391, %p392
      %p395 = scmp.ne.s32.totalorder %s378, %s394
      %p396 = scmp.eq.s32.totalorder %s46, 0
      %p397 = por %p395, %p396
      %s399 = sadd.s32 %s398, 1
      %p402 = scmp.eq.s32.totalorder %s40, 3
      %p403 = scmp.ne.s32.totalorder %s398, %s400
      %p404 = scmp.eq.s32.totalorder %s40, 0
      %p405 = por %p403, %p404
      %p406 = scmp.ne.s32.totalorder %s398, %s400
      %p407 = scmp.eq.s32.totalorder %s45, 3
      %p408 = por %p406, %p407
      %p409 = scmp.ne.s32.totalorder %s400, %s401
      %p410 = scmp.eq.s32.totalorder %s45, 0
      %p411 = por %p409, %p410
      %p412 = scmp.ne.s32.totalorder %s400, %s401
      %p413 = scmp.eq.s32.totalorder %s46, 3
      %p414 = por %p412, %p413
      %p416 = scmp.ne.s32.totalorder %s401, %s415
      %p417 = scmp.eq.s32.totalorder %s46, 0
      %p418 = por %p416, %p417
      %s420 = sadd.s32 %s419, 1
      %p423 = scmp.eq.s32.totalorder %s40, 3
      %p424 = scmp.ne.s32.totalorder %s419, %s421
      %p425 = scmp.eq.s32.totalorder %s40, 0
      %p426 = por %p424, %p425
      %p427 = scmp.ne.s32.totalorder %s419, %s421
      %p428 = scmp.eq.s32.totalorder %s45, 3
      %p429 = por %p427, %p428
      %p430 = scmp.ne.s32.totalorder %s421, %s422
      %p431 = scmp.eq.s32.totalorder %s45, 0
      %p432 = por %p430, %p431
      %p433 = scmp.ne.s32.totalorder %s421, %s422
      %p434 = scmp.eq.s32.totalorder %s46, 3
      %p435 = por %p433, %p434
      %p437 = scmp.ne.s32.totalorder %s422, %s436
      %p438 = scmp.eq.s32.totalorder %s46, 0
      %p439 = por %p437, %p438
      %s441 = sadd.s32 %s440, 1
      %p444 = scmp.eq.s32.totalorder %s40, 3
      %p445 = scmp.ne.s32.totalorder %s440, %s442
      %p446 = scmp.eq.s32.totalorder %s40, 0
      %p447 = por %p445, %p446
      %p448 = scmp.ne.s32.totalorder %s440, %s442
      %p449 = scmp.eq.s32.totalorder %s45, 3
      %p450 = por %p448, %p449
      %p451 = scmp.ne.s32.totalorder %s442, %s443
      %p452 = scmp.eq.s32.totalorder %s45, 0
      %p453 = por %p451, %p452
      %p454 = scmp.ne.s32.totalorder %s442, %s443
      %p455 = scmp.eq.s32.totalorder %s46, 3
      %p456 = por %p454, %p455
      %p458 = scmp.ne.s32.totalorder %s443, %s457
      %p459 = scmp.eq.s32.totalorder %s46, 0
      %p460 = por %p458, %p459
      %s461 = ssub.s32 %s47, %s59
      %p462 = scmp.eq.s32.totalorder %s461, 0
      %s464 = sadd.s32 %s463, 1
      %s465 = scalar_select %p462, %s463, %s464
      %p468 = pneg %p462
      %p469 = scmp.eq.s32.totalorder %s40, 3
      %p470 = por %p468, %p469
      %p471 = scmp.ne.s32.totalorder %s463, %s466
      %p472 = scmp.eq.s32.totalorder %s40, 0
      %p473 = por %p471, %p472
      %p474 = scmp.ne.s32.totalorder %s463, %s466
      %p475 = scmp.eq.s32.totalorder %s45, 3
      %p476 = por %p474, %p475
      %p477 = scmp.ne.s32.totalorder %s466, %s467
      %p478 = scmp.eq.s32.totalorder %s45, 0
      %p479 = por %p477, %p478
      %p480 = scmp.ne.s32.totalorder %s466, %s467
      %p481 = scmp.eq.s32.totalorder %s46, 3
      %p482 = por %p480, %p481
      %p484 = scmp.ne.s32.totalorder %s467, %s483
      %p485 = scmp.eq.s32.totalorder %s46, 0
      %p486 = por %p484, %p485
      %p487 = scmp.le.s32.totalorder 1, %s40
      %p488 = scmp.lt.s32.totalorder %s40, 5
      %p489 = pnand %p487, %p488
      %p490 = pneg %p489
      // Predicated region
      $region9: #{tpu_custom_call.1} parent=5 // pred_check
        _
      $region10: #{tpu_custom_call.1} parent=5 // pred_check_branch
        %492 = sbr.rel (%p489) target = $region12
      $region11: #{tpu_custom_call.1} parent=5 // pred_region
        %s493 = ssub.s32 %s40, 1
        // Predicated region
        $region13: #{tpu_custom_call.1} parent=11 // pred_check
          %p494 = pneg %p411
        $region14: #{tpu_custom_call.1} parent=11 // pred_check_branch
          %496 = sbr.rel (%p494) target = $region16
        $region15: #{tpu_custom_call.1} parent=11 // pred_region
          %498 = vsyncadd [#allocation16], 0
          %s500 = sshll.u32 %s13, 4
          %s501 = int_to_ptr.hbm [resolvable:$true] %s500
          %s502 = sshll.u32 [#allocation17], 4
          %s503 = int_to_ptr.vmem [resolvable:$true] %s502
          %505 = dma.hbm_to_vmem [thread:$0]  %s501, 64, %s503, [#allocation16]
        $region16: #{tpu_custom_call.1} parent=11 // pred_fallthru
          _
        // Predicated region
        $region17: #{tpu_custom_call.1} parent=11 // pred_check
          %p506 = pneg %p432
        $region18: #{tpu_custom_call.1} parent=11 // pred_check_branch
          %508 = sbr.rel (%p506) target = $region20
        $region19: #{tpu_custom_call.1} parent=11 // pred_region
          _
        $region20: #{tpu_custom_call.1} parent=11 // pred_fallthru
          _
        // Predicated region
        $region21: #{tpu_custom_call.1} parent=11 // pred_check
          %p509 = pneg %p453
        $region22: #{tpu_custom_call.1} parent=11 // pred_check_branch
          %511 = sbr.rel (%p509) target = $region24
        $region23: #{tpu_custom_call.1} parent=11 // pred_region
          _
        $region24: #{tpu_custom_call.1} parent=11 // pred_fallthru
          _
      $region12: #{tpu_custom_call.1} parent=5 // pred_fallthru
        _
      %p512 = scmp.lt.s32.totalorder %s40, 4
      // Predicated region
      $region25: #{tpu_custom_call.1} parent=5 // pred_check
        %p513 = pneg %p512
      $region26: #{tpu_custom_call.1} parent=5 // pred_check_branch
        %515 = sbr.rel (%p513) target = $region28
      $region27: #{tpu_custom_call.1} parent=5 // pred_region
        // Predicated region
        $region29: #{tpu_custom_call.1} parent=27 // pred_check
          %p516 = pneg %p72
        $region30: #{tpu_custom_call.1} parent=27 // pred_check_branch
          %518 = sbr.rel (%p516) target = $region32
        $region31: #{tpu_custom_call.1} parent=27 // pred_region
          %s519 = sand.u32 %s62, 1
          %s520 = scalar_lea.sflag [#allocation4], %s519
          %s521 = sand.u32 %s62, 1
          %s522 = smul.addr %s521, 64
          %s523 = scalar_lea.vmem [#allocation3], %s522
          %s524 = smul.u32 8, %s47
          %526 = vsyncadd %s520, 0
          %s527 = smul.addr %s524, 8
          %s528 = scalar_lea.hbm %s0, %s527
          %s529 = sshll.u32 %s528, 4
          %s530 = int_to_ptr.hbm [resolvable:$true] %s529
          %s531 = sshll.u32 %s523, 4
          %s532 = int_to_ptr.vmem [resolvable:$true] %s531
          %537 = dma.hbm_to_vmem [thread:$0]  %s530, 1024, %s532, %s520, 128, 128, 8
        $region32: #{tpu_custom_call.1} parent=27 // pred_fallthru
          _
        // Predicated region
        $region33: #{tpu_custom_call.1} parent=27 // pred_check
          %p538 = pneg %p98
        $region34: #{tpu_custom_call.1} parent=27 // pred_check_branch
          %540 = sbr.rel (%p538) target = $region36
        $region35: #{tpu_custom_call.1} parent=27 // pred_region
          %p541 = scmp.lt.s32.totalorder %s48, 1
          %s542 = scalar_select %p541, %s48, 1
          %s543 = scalar_lea.vmem %s1, %s542
        $region36: #{tpu_custom_call.1} parent=27 // pred_fallthru
          _
        // Predicated region
        $region37: #{tpu_custom_call.1} parent=27 // pred_check
          %p544 = pneg %p124
        $region38: #{tpu_custom_call.1} parent=27 // pred_check_branch
          %546 = sbr.rel (%p544) target = $region40
        $region39: #{tpu_custom_call.1} parent=27 // pred_region
          %s547 = sand.u32 %s40, 1
          %s548 = scalar_lea.sflag [#allocation7], %s547
          %s549 = sand.u32 %s114, 1
          %s550 = scalar_lea.vmem [#allocation6], %s549
          %552 = vsyncadd %s548, 0
          %s553 = scalar_lea.hbm %s2, %s48
          %s555 = sshll.u32 %s553, 4
          %s556 = int_to_ptr.hbm [resolvable:$true] %s555
          %s557 = sshll.u32 %s550, 4
          %s558 = int_to_ptr.vmem [resolvable:$true] %s557
          %560 = dma.hbm_to_vmem [thread:$0]  %s556, 16, %s558, %s548
        $region40: #{tpu_custom_call.1} parent=27 // pred_fallthru
          _
        // Predicated region
        $region41: #{tpu_custom_call.1} parent=27 // pred_check
          %p561 = pneg %p150
        $region42: #{tpu_custom_call.1} parent=27 // pred_check_branch
          %563 = sbr.rel (%p561) target = $region44
        $region43: #{tpu_custom_call.1} parent=27 // pred_region
          %p564 = scmp.lt.s32.totalorder %s48, 1
          %s565 = scalar_select %p564, %s48, 1
          %s566 = smul.addr %s565, 4
          %s567 = smul.addr %s566, 4
          %s568 = scalar_lea.vmem %s3, %s567
        $region44: #{tpu_custom_call.1} parent=27 // pred_fallthru
          _
        // Predicated region
        $region45: #{tpu_custom_call.1} parent=27 // pred_check
          %p569 = pneg %p176
        $region46: #{tpu_custom_call.1} parent=27 // pred_check_branch
          %571 = sbr.rel (%p569) target = $region48
        $region47: #{tpu_custom_call.1} parent=27 // pred_region
          %s572 = sand.u32 %s40, 1
          %s573 = scalar_lea.sflag [#allocation7], %s572
          %s574 = sand.u32 %s166, 1
          %s575 = scalar_lea.vmem [#allocation8], %s574
          %577 = vsyncadd %s573, 0
          %s578 = scalar_lea.hbm %s4, %s48
          %s580 = sshll.u32 %s578, 4
          %s581 = int_to_ptr.hbm [resolvable:$true] %s580
          %s582 = sshll.u32 %s575, 4
          %s583 = int_to_ptr.vmem [resolvable:$true] %s582
          %585 = dma.hbm_to_vmem [thread:$0]  %s581, 16, %s583, %s573
        $region48: #{tpu_custom_call.1} parent=27 // pred_fallthru
          _
        // Predicated region
        $region49: #{tpu_custom_call.1} parent=27 // pred_check
          %p586 = pneg %p202
        $region50: #{tpu_custom_call.1} parent=27 // pred_check_branch
          %588 = sbr.rel (%p586) target = $region52
        $region51: #{tpu_custom_call.1} parent=27 // pred_region
          %p589 = scmp.lt.s32.totalorder %s48, 1
          %s590 = scalar_select %p589, %s48, 1
          %s591 = smul.addr %s590, 4
          %s592 = smul.addr %s591, 4
          %s593 = scalar_lea.vmem %s5, %s592
        $region52: #{tpu_custom_call.1} parent=27 // pred_fallthru
          _
        // Predicated region
        $region53: #{tpu_custom_call.1} parent=27 // pred_check
          %p594 = pneg %p228
        $region54: #{tpu_custom_call.1} parent=27 // pred_check_branch
          %596 = sbr.rel (%p594) target = $region56
        $region55: #{tpu_custom_call.1} parent=27 // pred_region
          %s597 = sand.u32 %s40, 1
          %s598 = scalar_lea.sflag [#allocation10], %s597
          %s599 = sand.u32 %s218, 1
          %s600 = scalar_lea.vmem [#allocation9], %s599
          %602 = vsyncadd %s598, 0
          %s603 = scalar_lea.hbm %s6, %s48
          %s605 = sshll.u32 %s603, 4
          %s606 = int_to_ptr.hbm [resolvable:$true] %s605
          %s607 = sshll.u32 %s600, 4
          %s608 = int_to_ptr.vmem [resolvable:$true] %s607
          %610 = dma.hbm_to_vmem [thread:$0]  %s606, 16, %s608, %s598
        $region56: #{tpu_custom_call.1} parent=27 // pred_fallthru
          _
        // Predicated region
        $region57: #{tpu_custom_call.1} parent=27 // pred_check
          %p611 = pneg %p254
        $region58: #{tpu_custom_call.1} parent=27 // pred_check_branch
          %613 = sbr.rel (%p611) target = $region60
        $region59: #{tpu_custom_call.1} parent=27 // pred_region
          %s614 = sand.u32 %s40, 1
          %s615 = scalar_lea.sflag [#allocation10], %s614
          %s616 = sand.u32 %s244, 1
          %s617 = scalar_lea.vmem [#allocation11], %s616
          %619 = vsyncadd %s615, 0
          %s620 = scalar_lea.hbm %s7, %s48
          %s622 = sshll.u32 %s620, 4
          %s623 = int_to_ptr.hbm [resolvable:$true] %s622
          %s624 = sshll.u32 %s617, 4
          %s625 = int_to_ptr.vmem [resolvable:$true] %s624
          %627 = dma.hbm_to_vmem [thread:$0]  %s623, 16, %s625, %s615
        $region60: #{tpu_custom_call.1} parent=27 // pred_fallthru
          _
        // Predicated region
        $region61: #{tpu_custom_call.1} parent=27 // pred_check
          %p628 = pneg %p280
        $region62: #{tpu_custom_call.1} parent=27 // pred_check_branch
          %630 = sbr.rel (%p628) target = $region64
        $region63: #{tpu_custom_call.1} parent=27 // pred_region
          %s631 = sand.u32 %s40, 1
          %s632 = scalar_lea.sflag [#allocation13], %s631
          %s633 = sand.u32 %s270, 1
          %s634 = scalar_lea.vmem [#allocation12], %s633
          %636 = vsyncadd %s632, 0
          %s637 = scalar_lea.hbm %s8, %s48
          %s639 = sshll.u32 %s637, 4
          %s640 = int_to_ptr.hbm [resolvable:$true] %s639
          %s641 = sshll.u32 %s634, 4
          %s642 = int_to_ptr.vmem [resolvable:$true] %s641
          %644 = dma.hbm_to_vmem [thread:$0]  %s640, 16, %s642, %s632
        $region64: #{tpu_custom_call.1} parent=27 // pred_fallthru
          _
        // Predicated region
        $region65: #{tpu_custom_call.1} parent=27 // pred_check
          %p645 = pneg %p306
        $region66: #{tpu_custom_call.1} parent=27 // pred_check_branch
          %647 = sbr.rel (%p645) target = $region68
        $region67: #{tpu_custom_call.1} parent=27 // pred_region
          %p648 = scmp.lt.s32.totalorder %s48, 1
          %s649 = scalar_select %p648, %s48, 1
          %s650 = smul.addr %s649, 4
          %s651 = smul.addr %s650, 4
          %s652 = scalar_lea.vmem %s9, %s651
        $region68: #{tpu_custom_call.1} parent=27 // pred_fallthru
          _
        // Predicated region
        $region69: #{tpu_custom_call.1} parent=27 // pred_check
          %p653 = pneg %p332
        $region70: #{tpu_custom_call.1} parent=27 // pred_check_branch
          %655 = sbr.rel (%p653) target = $region72
        $region71: #{tpu_custom_call.1} parent=27 // pred_region
          %s656 = sand.u32 %s40, 1
          %s657 = scalar_lea.sflag [#allocation13], %s656
          %s658 = sand.u32 %s322, 1
          %s659 = scalar_lea.vmem [#allocation14], %s658
          %661 = vsyncadd %s657, 0
          %s662 = scalar_lea.hbm %s10, %s48
          %s664 = sshll.u32 %s662, 4
          %s665 = int_to_ptr.hbm [resolvable:$true] %s664
          %s666 = sshll.u32 %s659, 4
          %s667 = int_to_ptr.vmem [resolvable:$true] %s666
          %669 = dma.hbm_to_vmem [thread:$0]  %s665, 16, %s667, %s657
        $region72: #{tpu_custom_call.1} parent=27 // pred_fallthru
          _
        // Predicated region
        $region73: #{tpu_custom_call.1} parent=27 // pred_check
          %p670 = pneg %p358
        $region74: #{tpu_custom_call.1} parent=27 // pred_check_branch
          %672 = sbr.rel (%p670) target = $region76
        $region75: #{tpu_custom_call.1} parent=27 // pred_region
          %p673 = scmp.lt.s32.totalorder %s48, 1
          %s674 = scalar_select %p673, %s48, 1
          %s675 = smul.addr %s674, 8
          %s676 = smul.addr %s675, 4
          %s677 = scalar_lea.vmem %s11, %s676
        $region76: #{tpu_custom_call.1} parent=27 // pred_fallthru
          _
        // Predicated region
        $region77: #{tpu_custom_call.1} parent=27 // pred_check
          %p678 = pneg %p384
        $region78: #{tpu_custom_call.1} parent=27 // pred_check_branch
          %680 = sbr.rel (%p678) target = $region80
        $region79: #{tpu_custom_call.1} parent=27 // pred_region
          %s681 = sand.u32 %s40, 1
          %s682 = scalar_lea.sflag [#allocation16], %s681
          %s683 = sand.u32 %s374, 1
          %s684 = scalar_lea.vmem [#allocation15], %s683
          %686 = vsyncadd %s682, 0
          %s687 = scalar_lea.hbm %s12, %s48
          %s689 = sshll.u32 %s687, 4
          %s690 = int_to_ptr.hbm [resolvable:$true] %s689
          %s691 = sshll.u32 %s684, 4
          %s692 = int_to_ptr.vmem [resolvable:$true] %s691
          %694 = dma.hbm_to_vmem [thread:$0]  %s690, 16, %s692, %s682
        $region80: #{tpu_custom_call.1} parent=27 // pred_fallthru
          _
      $region28: #{tpu_custom_call.1} parent=5 // pred_fallthru
        _
      %p695 = scmp.le.s32.totalorder 1, %s40
      %p696 = scmp.lt.s32.totalorder %s40, 5
      %p697 = pnand %p695, %p696
      %p698 = pneg %p697
      // Predicated region
      $region81: #{tpu_custom_call.1} parent=5 // pred_check
        _
      $region82: #{tpu_custom_call.1} parent=5 // pred_check_branch
        %700 = sbr.rel (%p697) target = $region84
      $region83: #{tpu_custom_call.1} parent=5 // pred_region
        %s701 = ssub.s32 %s40, 1
        %s702 = sand.u32 %s65, 1
        %s703 = scalar_lea.sflag [#allocation4], %s702
        %s704 = sand.u32 %s65, 1
        %s705 = smul.addr %s704, 64
        %s706 = scalar_lea.vmem [#allocation3], %s705
        // Predicated region
        $region85: #{tpu_custom_call.1} parent=83 // pred_check
          %p707 = pneg %p78
        $region86: #{tpu_custom_call.1} parent=83 // pred_check_branch
          %709 = sbr.rel (%p707) target = $region88
        $region87: #{tpu_custom_call.1} parent=83 // pred_region
          %711 = dma.done %s703, 1024
        $region88: #{tpu_custom_call.1} parent=83 // pred_fallthru
          _
        %s712 = sand.u32 %s45, 1
        %s713 = scalar_lea.sflag [#allocation7], %s712
        %s714 = sand.u32 %s117, 1
        %s715 = scalar_lea.vmem [#allocation6], %s714
        // Predicated region
        $region89: #{tpu_custom_call.1} parent=83 // pred_check
          %p716 = pneg %p130
        $region90: #{tpu_custom_call.1} parent=83 // pred_check_branch
          %718 = sbr.rel (%p716) target = $region92
        $region91: #{tpu_custom_call.1} parent=83 // pred_region
          %720 = dma.done %s713, 16
        $region92: #{tpu_custom_call.1} parent=83 // pred_fallthru
          _
        %s721 = sand.u32 %s45, 1
        %s722 = scalar_lea.sflag [#allocation7], %s721
        %s723 = sand.u32 %s169, 1
        %s724 = scalar_lea.vmem [#allocation8], %s723
        // Predicated region
        $region93: #{tpu_custom_call.1} parent=83 // pred_check
          %p725 = pneg %p182
        $region94: #{tpu_custom_call.1} parent=83 // pred_check_branch
          %727 = sbr.rel (%p725) target = $region96
        $region95: #{tpu_custom_call.1} parent=83 // pred_region
          %729 = dma.done %s722, 16
        $region96: #{tpu_custom_call.1} parent=83 // pred_fallthru
          _
        %s730 = sand.u32 %s45, 1
        %s731 = scalar_lea.sflag [#allocation10], %s730
        %s732 = sand.u32 %s221, 1
        %s733 = scalar_lea.vmem [#allocation9], %s732
        // Predicated region
        $region97: #{tpu_custom_call.1} parent=83 // pred_check
          %p734 = pneg %p234
        $region98: #{tpu_custom_call.1} parent=83 // pred_check_branch
          %736 = sbr.rel (%p734) target = $region100
        $region99: #{tpu_custom_call.1} parent=83 // pred_region
          %738 = dma.done %s731, 16
        $region100: #{tpu_custom_call.1} parent=83 // pred_fallthru
          _
        %s739 = sand.u32 %s45, 1
        %s740 = scalar_lea.sflag [#allocation10], %s739
        %s741 = sand.u32 %s247, 1
        %s742 = scalar_lea.vmem [#allocation11], %s741
        // Predicated region
        $region101: #{tpu_custom_call.1} parent=83 // pred_check
          %p743 = pneg %p260
        $region102: #{tpu_custom_call.1} parent=83 // pred_check_branch
          %745 = sbr.rel (%p743) target = $region104
        $region103: #{tpu_custom_call.1} parent=83 // pred_region
          %747 = dma.done %s740, 16
        $region104: #{tpu_custom_call.1} parent=83 // pred_fallthru
          _
        %s748 = sand.u32 %s45, 1
        %s749 = scalar_lea.sflag [#allocation13], %s748
        %s750 = sand.u32 %s273, 1
        %s751 = scalar_lea.vmem [#allocation12], %s750
        // Predicated region
        $region105: #{tpu_custom_call.1} parent=83 // pred_check
          %p752 = pneg %p286
        $region106: #{tpu_custom_call.1} parent=83 // pred_check_branch
          %754 = sbr.rel (%p752) target = $region108
        $region107: #{tpu_custom_call.1} parent=83 // pred_region
          %756 = dma.done %s749, 16
        $region108: #{tpu_custom_call.1} parent=83 // pred_fallthru
          _
        %s757 = sand.u32 %s45, 1
        %s758 = scalar_lea.sflag [#allocation13], %s757
        %s759 = sand.u32 %s325, 1
        %s760 = scalar_lea.vmem [#allocation14], %s759
        // Predicated region
        $region109: #{tpu_custom_call.1} parent=83 // pred_check
          %p761 = pneg %p338
        $region110: #{tpu_custom_call.1} parent=83 // pred_check_branch
          %763 = sbr.rel (%p761) target = $region112
        $region111: #{tpu_custom_call.1} parent=83 // pred_region
          %765 = dma.done %s758, 16
        $region112: #{tpu_custom_call.1} parent=83 // pred_fallthru
          _
        %s766 = sand.u32 %s45, 1
        %s767 = scalar_lea.sflag [#allocation16], %s766
        %s768 = sand.u32 %s377, 1
        %s769 = scalar_lea.vmem [#allocation15], %s768
        // Predicated region
        $region113: #{tpu_custom_call.1} parent=83 // pred_check
          %p770 = pneg %p390
        $region114: #{tpu_custom_call.1} parent=83 // pred_check_branch
          %772 = sbr.rel (%p770) target = $region116
        $region115: #{tpu_custom_call.1} parent=83 // pred_region
          %774 = dma.done %s767, 16
        $region116: #{tpu_custom_call.1} parent=83 // pred_fallthru
          _
        // Predicated region
        $region117: #{tpu_custom_call.1} parent=83 // pred_check
          %p775 = pneg %p411
        $region118: #{tpu_custom_call.1} parent=83 // pred_check_branch
          %777 = sbr.rel (%p775) target = $region120
        $region119: #{tpu_custom_call.1} parent=83 // pred_region
          %779 = dma.done [#allocation16], 64
        $region120: #{tpu_custom_call.1} parent=83 // pred_fallthru
          _
        %s780 = sand.u32 %s65, 1
        %s781 = scalar_lea.sflag [#allocation4], %s780
        %s782 = sand.u32 %s65, 1
        %s783 = smul.addr %s782, 64
        %s784 = scalar_lea.vmem [#allocation3], %s783
        %p785 = pneg %p78
        %p786 = pneg %p75
        %p787 = scmp.lt.s32.totalorder %s50, 1
        %s788 = scalar_select %p787, %s50, 1
        %s789 = scalar_lea.vmem %s1, %s788
        %p790 = pneg %p104
        %p791 = pneg %p101
        %s792 = sand.u32 %s45, 1
        %s793 = scalar_lea.sflag [#allocation7], %s792
        %s794 = sand.u32 %s117, 1
        %s795 = scalar_lea.vmem [#allocation6], %s794
        %p796 = pneg %p130
        %p797 = pneg %p127
        %p798 = scmp.lt.s32.totalorder %s50, 1
        %s799 = scalar_select %p798, %s50, 1
        %s800 = smul.addr %s799, 4
        %s801 = smul.addr %s800, 4
        %s802 = scalar_lea.vmem %s3, %s801
        %p803 = pneg %p156
        %p804 = pneg %p153
        %s805 = sand.u32 %s45, 1
        %s806 = scalar_lea.sflag [#allocation7], %s805
        %s807 = sand.u32 %s169, 1
        %s808 = scalar_lea.vmem [#allocation8], %s807
        %p809 = pneg %p182
        %p810 = pneg %p179
        %p811 = scmp.lt.s32.totalorder %s50, 1
        %s812 = scalar_select %p811, %s50, 1
        %s813 = smul.addr %s812, 4
        %s814 = smul.addr %s813, 4
        %s815 = scalar_lea.vmem %s5, %s814
        %p816 = pneg %p208
        %p817 = pneg %p205
        %s818 = sand.u32 %s45, 1
        %s819 = scalar_lea.sflag [#allocation10], %s818
        %s820 = sand.u32 %s221, 1
        %s821 = scalar_lea.vmem [#allocation9], %s820
        %p822 = pneg %p234
        %p823 = pneg %p231
        %s824 = sand.u32 %s45, 1
        %s825 = scalar_lea.sflag [#allocation10], %s824
        %s826 = sand.u32 %s247, 1
        %s827 = scalar_lea.vmem [#allocation11], %s826
        %p828 = pneg %p260
        %p829 = pneg %p257
        %s830 = sand.u32 %s45, 1
        %s831 = scalar_lea.sflag [#allocation13], %s830
        %s832 = sand.u32 %s273, 1
        %s833 = scalar_lea.vmem [#allocation12], %s832
        %p834 = pneg %p286
        %p835 = pneg %p283
        %p836 = scmp.lt.s32.totalorder %s50, 1
        %s837 = scalar_select %p836, %s50, 1
        %s838 = smul.addr %s837, 4
        %s839 = smul.addr %s838, 4
        %s840 = scalar_lea.vmem %s9, %s839
        %p841 = pneg %p312
        %p842 = pneg %p309
        %s843 = sand.u32 %s45, 1
        %s844 = scalar_lea.sflag [#allocation13], %s843
        %s845 = sand.u32 %s325, 1
        %s846 = scalar_lea.vmem [#allocation14], %s845
        %p847 = pneg %p338
        %p848 = pneg %p335
        %p849 = scmp.lt.s32.totalorder %s50, 1
        %s850 = scalar_select %p849, %s50, 1
        %s851 = smul.addr %s850, 8
        %s852 = smul.addr %s851, 4
        %s853 = scalar_lea.vmem %s11, %s852
        %p854 = pneg %p364
        %p855 = pneg %p361
        %s856 = sand.u32 %s45, 1
        %s857 = scalar_lea.sflag [#allocation16], %s856
        %s858 = sand.u32 %s377, 1
        %s859 = scalar_lea.vmem [#allocation15], %s858
        %p860 = pneg %p390
        %p861 = pneg %p387
        %p862 = pneg %p411
        %p863 = pneg %p408
        %p864 = pneg %p432
        %p865 = pneg %p429
        %p866 = pneg %p453
        %p867 = pneg %p450
        %p868 = pneg %p479
        %p869 = pneg %p476
        %s870 = sand.u32 %s466, 1
        %s871 = scalar_lea.sflag [#allocation5], %s870
        %s872 = sand.u32 %s466, 1
        %s873 = smul.addr %s872, 8
        %s874 = scalar_lea.vmem [#allocation18], %s873
        %s875 = smul.u32 8, %s49
        %p876 = scmp.lt.s32.totalorder %s50, 1
        %s877 = scalar_select %p876, %s50, 1
        %s878 = scalar_lea.vmem %s1, %s877
        %p879 = scmp.lt.s32.totalorder %s50, 1
        %s880 = scalar_select %p879, %s50, 1
        %s881 = smul.addr %s880, 4
        %s882 = smul.addr %s881, 4
        %s883 = scalar_lea.vmem %s3, %s882
        %p884 = scmp.lt.s32.totalorder %s50, 1
        %s885 = scalar_select %p884, %s50, 1
        %s886 = smul.addr %s885, 4
        %s887 = smul.addr %s886, 4
        %s888 = scalar_lea.vmem %s5, %s887
        %p889 = scmp.lt.s32.totalorder %s50, 1
        %s890 = scalar_select %p889, %s50, 1
        %s891 = smul.addr %s890, 4
        %s892 = smul.addr %s891, 4
        %s893 = scalar_lea.vmem %s9, %s892
        %p894 = scmp.lt.s32.totalorder %s50, 1
        %s895 = scalar_select %p894, %s50, 1
        %s896 = smul.addr %s895, 8
        %s897 = smul.addr %s896, 4
        %s898 = scalar_lea.vmem %s11, %s897
        %p900 = scmp.eq.s32.totalorder %s50, 0
        // Predicated region
        $region121: #{tpu_custom_call.1} parent=83 // pred_check
          %p901 = pneg %p900
        $region122: #{tpu_custom_call.1} parent=83 // pred_check_branch
          %903 = sbr.rel (%p901) target = $region124
        $region123: #{tpu_custom_call.1} parent=83 // pred_region
          %v904 = vld [vmem:[%s706] sm:$0xff]
          %v905 = vld [vmem:[%s706 + $0x8] sm:$0xff]
          %v906 = vld [vmem:[%s706 + $0x10] sm:$0xff]
          %v907 = vld [vmem:[%s706 + $0x18] sm:$0xff]
          %v908 = vld [vmem:[%s706 + $0x20] sm:$0xff]
          %v909 = vld [vmem:[%s706 + $0x28] sm:$0xff]
          %v910 = vld [vmem:[%s706 + $0x30] sm:$0xff]
          %v911 = vld [vmem:[%s706 + $0x38] sm:$0xff]
          %vm912 = vcmask 261120
          %913 = vst.msk [vmem:[#allocation2] sm:$0xff] %vm912, %v904
          %914 = vst.msk [vmem:[#allocation2 + $0x8] sm:$0xff] %vm912, %v905
          %915 = vst.msk [vmem:[#allocation2 + $0x10] sm:$0xff] %vm912, %v906
          %916 = vst.msk [vmem:[#allocation2 + $0x18] sm:$0xff] %vm912, %v907
          %917 = vst.msk [vmem:[#allocation2 + $0x20] sm:$0xff] %vm912, %v908
          %918 = vst.msk [vmem:[#allocation2 + $0x28] sm:$0xff] %vm912, %v909
          %919 = vst.msk [vmem:[#allocation2 + $0x30] sm:$0xff] %vm912, %v910
          %920 = vst.msk [vmem:[#allocation2 + $0x38] sm:$0xff] %vm912, %v911
        $region124: #{tpu_custom_call.1} parent=83 // pred_fallthru
          _
        %v921 = vld [vmem:[#allocation2] sm:$0xff]
        %v922 = vld [vmem:[#allocation2 + $0x8] sm:$0xff]
        %v923 = vld [vmem:[#allocation2 + $0x10] sm:$0xff]
        %v924 = vld [vmem:[#allocation2 + $0x18] sm:$0xff]
        %v925 = vld [vmem:[#allocation2 + $0x20] sm:$0xff]
        %v926 = vld [vmem:[#allocation2 + $0x28] sm:$0xff]
        %v927 = vld [vmem:[#allocation2 + $0x30] sm:$0xff]
        %v928 = vld [vmem:[#allocation2 + $0x38] sm:$0xff]
        %v929 = vld [vmem:[%s878] sm:$0x1]
        %v930 = vld [vmem:[%s715] sm:$0x1]
        %vm931 = vcmask 261120
        %v932 = vsel %vm931, %v921, 0.0
        %933 = vadd.xlane.f32.xlu0 %v932
        %v934 = vpop.xlane.xlu0 %933
        %v935 = vsel %vm931, %v922, 0.0
        %936 = vadd.xlane.f32.xlu0 %v935
        %v937 = vpop.xlane.xlu0 %936
        %v938 = vsel %vm931, %v923, 0.0
        %939 = vadd.xlane.f32.xlu0 %v938
        %v940 = vpop.xlane.xlu0 %939
        %v941 = vsel %vm931, %v924, 0.0
        %942 = vadd.xlane.f32.xlu0 %v941
        %v943 = vpop.xlane.xlu0 %942
        %v944 = vsel %vm931, %v925, 0.0
        %945 = vadd.xlane.f32.xlu0 %v944
        %v946 = vpop.xlane.xlu0 %945
        %v947 = vsel %vm931, %v926, 0.0
        %948 = vadd.xlane.f32.xlu0 %v947
        %v949 = vpop.xlane.xlu0 %948
        %v950 = vsel %vm931, %v927, 0.0
        %951 = vadd.xlane.f32.xlu0 %v950
        %v952 = vpop.xlane.xlu0 %951
        %v953 = vsel %vm931, %v928, 0.0
        %954 = vadd.xlane.f32.xlu0 %v953
        %v955 = vpop.xlane.xlu0 %954
        %v956 = vrcp.pop 32.0
        %v957 = vmul.f32 32.0, %v956
        %v958 = vsub.f32 1.0, %v957
        %v959 = vmul.f32 %v956, %v958
        %v960 = vadd.f32 %v956, %v959
        %vm961 = vweird.f32 %v956
        %v962 = vsel %vm961, %v956, %v960
        %v963 = vmul.f32 %v934, %v962
        %v964 = vmul.f32 %v937, %v962
        %v965 = vmul.f32 %v940, %v962
        %v966 = vmul.f32 %v943, %v962
        %v967 = vmul.f32 %v946, %v962
        %v968 = vmul.f32 %v949, %v962
        %v969 = vmul.f32 %v952, %v962
        %v970 = vmul.f32 %v955, %v962
        %v971 = vsub.f32 %v921, %v963
        %v972 = vsub.f32 %v922, %v964
        %v973 = vsub.f32 %v923, %v965
        %v974 = vsub.f32 %v924, %v966
        %v975 = vsub.f32 %v925, %v967
        %v976 = vsub.f32 %v926, %v968
        %v977 = vsub.f32 %v927, %v969
        %v978 = vsub.f32 %v928, %v970
        %v979 = vmul.f32 %v971, %v971
        %v980 = vmul.f32 %v972, %v972
        %v981 = vmul.f32 %v973, %v973
        %v982 = vmul.f32 %v974, %v974
        %v983 = vmul.f32 %v975, %v975
        %v984 = vmul.f32 %v976, %v976
        %v985 = vmul.f32 %v977, %v977
        %v986 = vmul.f32 %v978, %v978
        %v987 = vsel %vm931, %v979, 0.0
        %988 = vadd.xlane.f32.xlu0 %v987
        %v989 = vpop.xlane.xlu0 %988
        %v990 = vsel %vm931, %v980, 0.0
        %991 = vadd.xlane.f32.xlu0 %v990
        %v992 = vpop.xlane.xlu0 %991
        %v993 = vsel %vm931, %v981, 0.0
        %994 = vadd.xlane.f32.xlu0 %v993
        %v995 = vpop.xlane.xlu0 %994
        %v996 = vsel %vm931, %v982, 0.0
        %997 = vadd.xlane.f32.xlu0 %v996
        %v998 = vpop.xlane.xlu0 %997
        %v999 = vsel %vm931, %v983, 0.0
        %1000 = vadd.xlane.f32.xlu0 %v999
        %v1001 = vpop.xlane.xlu0 %1000
        %v1002 = vsel %vm931, %v984, 0.0
        %1003 = vadd.xlane.f32.xlu0 %v1002
        %v1004 = vpop.xlane.xlu0 %1003
        %v1005 = vsel %vm931, %v985, 0.0
        %1006 = vadd.xlane.f32.xlu0 %v1005
        %v1007 = vpop.xlane.xlu0 %1006
        %v1008 = vsel %vm931, %v986, 0.0
        %1009 = vadd.xlane.f32.xlu0 %v1008
        %v1010 = vpop.xlane.xlu0 %1009
        %v1011 = vmul.f32 %v989, %v962
        %v1012 = vmul.f32 %v992, %v962
        %v1013 = vmul.f32 %v995, %v962
        %v1014 = vmul.f32 %v998, %v962
        %v1015 = vmul.f32 %v1001, %v962
        %v1016 = vmul.f32 %v1004, %v962
        %v1017 = vmul.f32 %v1007, %v962
        %v1018 = vmul.f32 %v1010, %v962
        %v1019 = vadd.f32 %v1011, 1e-05
        %v1020 = vadd.f32 %v1012, 1e-05
        %v1021 = vadd.f32 %v1013, 1e-05
        %v1022 = vadd.f32 %v1014, 1e-05
        %v1023 = vadd.f32 %v1015, 1e-05
        %v1024 = vadd.f32 %v1016, 1e-05
        %v1025 = vadd.f32 %v1017, 1e-05
        %v1026 = vadd.f32 %v1018, 1e-05
        %v1027 = vrsqrt.pop %v1019
        %v1028 = vmul.f32 %v1027, %v1019
        %v1029 = vmul.f32 %v1028, %v1027
        %v1030 = vmul.f32 0.5, %v1029
        %v1031 = vsub.f32 1.5, %v1030
        %v1032 = vmul.f32 %v1027, %v1031
        %vm1033 = vweird.f32 %v1019
        %vm1034 = vweird.f32 %v1027
        %vm1035 = vmor %vm1033, %vm1034
        %v1036 = vsel %vm1035, %v1027, %v1032
        %v1037 = vrsqrt.pop %v1020
        %v1038 = vmul.f32 %v1037, %v1020
        %v1039 = vmul.f32 %v1038, %v1037
        %v1040 = vmul.f32 0.5, %v1039
        %v1041 = vsub.f32 1.5, %v1040
        %v1042 = vmul.f32 %v1037, %v1041
        %vm1043 = vweird.f32 %v1020
        %vm1044 = vweird.f32 %v1037
        %vm1045 = vmor %vm1043, %vm1044
        %v1046 = vsel %vm1045, %v1037, %v1042
        %v1047 = vrsqrt.pop %v1021
        %v1048 = vmul.f32 %v1047, %v1021
        %v1049 = vmul.f32 %v1048, %v1047
        %v1050 = vmul.f32 0.5, %v1049
        %v1051 = vsub.f32 1.5, %v1050
        %v1052 = vmul.f32 %v1047, %v1051
        %vm1053 = vweird.f32 %v1021
        %vm1054 = vweird.f32 %v1047
        %vm1055 = vmor %vm1053, %vm1054
        %v1056 = vsel %vm1055, %v1047, %v1052
        %v1057 = vrsqrt.pop %v1022
        %v1058 = vmul.f32 %v1057, %v1022
        %v1059 = vmul.f32 %v1058, %v1057
        %v1060 = vmul.f32 0.5, %v1059
        %v1061 = vsub.f32 1.5, %v1060
        %v1062 = vmul.f32 %v1057, %v1061
        %vm1063 = vweird.f32 %v1022
        %vm1064 = vweird.f32 %v1057
        %vm1065 = vmor %vm1063, %vm1064
        %v1066 = vsel %vm1065, %v1057, %v1062
        %v1067 = vrsqrt.pop %v1023
        %v1068 = vmul.f32 %v1067, %v1023
        %v1069 = vmul.f32 %v1068, %v1067
        %v1070 = vmul.f32 0.5, %v1069
        %v1071 = vsub.f32 1.5, %v1070
        %v1072 = vmul.f32 %v1067, %v1071
        %vm1073 = vweird.f32 %v1023
        %vm1074 = vweird.f32 %v1067
        %vm1075 = vmor %vm1073, %vm1074
        %v1076 = vsel %vm1075, %v1067, %v1072
        %v1077 = vrsqrt.pop %v1024
        %v1078 = vmul.f32 %v1077, %v1024
        %v1079 = vmul.f32 %v1078, %v1077
        %v1080 = vmul.f32 0.5, %v1079
        %v1081 = vsub.f32 1.5, %v1080
        %v1082 = vmul.f32 %v1077, %v1081
        %vm1083 = vweird.f32 %v1024
        %vm1084 = vweird.f32 %v1077
        %vm1085 = vmor %vm1083, %vm1084
        %v1086 = vsel %vm1085, %v1077, %v1082
        %v1087 = vrsqrt.pop %v1025
        %v1088 = vmul.f32 %v1087, %v1025
        %v1089 = vmul.f32 %v1088, %v1087
        %v1090 = vmul.f32 0.5, %v1089
        %v1091 = vsub.f32 1.5, %v1090
        %v1092 = vmul.f32 %v1087, %v1091
        %vm1093 = vweird.f32 %v1025
        %vm1094 = vweird.f32 %v1087
        %vm1095 = vmor %vm1093, %vm1094
        %v1096 = vsel %vm1095, %v1087, %v1092
        %v1097 = vrsqrt.pop %v1026
        %v1098 = vmul.f32 %v1097, %v1026
        %v1099 = vmul.f32 %v1098, %v1097
        %v1100 = vmul.f32 0.5, %v1099
        %v1101 = vsub.f32 1.5, %v1100
        %v1102 = vmul.f32 %v1097, %v1101
        %vm1103 = vweird.f32 %v1026
        %vm1104 = vweird.f32 %v1097
        %vm1105 = vmor %vm1103, %vm1104
        %v1106 = vsel %vm1105, %v1097, %v1102
        %v1107 = vmul.f32 %v971, %v1036
        %v1108 = vmul.f32 %v972, %v1046
        %v1109 = vmul.f32 %v973, %v1056
        %v1110 = vmul.f32 %v974, %v1066
        %v1111 = vmul.f32 %v975, %v1076
        %v1112 = vmul.f32 %v976, %v1086
        %v1113 = vmul.f32 %v977, %v1096
        %v1114 = vmul.f32 %v978, %v1106
        %v1116 = vperm.slane %v929, 0
        %v1118 = vmul.f32 %v1107, %v1116
        %v1119 = vmul.f32 %v1108, %v1116
        %v1120 = vmul.f32 %v1109, %v1116
        %v1121 = vmul.f32 %v1110, %v1116
        %v1122 = vmul.f32 %v1111, %v1116
        %v1123 = vmul.f32 %v1112, %v1116
        %v1124 = vmul.f32 %v1113, %v1116
        %v1125 = vmul.f32 %v1114, %v1116
        %v1127 = vperm.slane %v930, 0
        %v1129 = vadd.f32 %v1118, %v1127
        %v1130 = vadd.f32 %v1119, %v1127
        %v1131 = vadd.f32 %v1120, %v1127
        %v1132 = vadd.f32 %v1121, %v1127
        %v1133 = vadd.f32 %v1122, %v1127
        %v1134 = vadd.f32 %v1123, %v1127
        %v1135 = vadd.f32 %v1124, %v1127
        %v1136 = vadd.f32 %v1125, %v1127
        %p1137 = scmp.gt.s32.totalorder %s50, 0
        %s1138 = scalar_select %p1137, 1, 0
        %s1139 = scvt.s32.f32 %s1138
        %v1140 = vsub.f32 %v1129, %v921
        %v1141 = vsub.f32 %v1130, %v922
        %v1142 = vsub.f32 %v1131, %v923
        %v1143 = vsub.f32 %v1132, %v924
        %v1144 = vsub.f32 %v1133, %v925
        %v1145 = vsub.f32 %v1134, %v926
        %v1146 = vsub.f32 %v1135, %v927
        %v1147 = vsub.f32 %v1136, %v928
        %v1148 = vstv %s1139
        %v1149 = vmul.f32 %v1148, %v1140
        %v1150 = vmul.f32 %v1148, %v1141
        %v1151 = vmul.f32 %v1148, %v1142
        %v1152 = vmul.f32 %v1148, %v1143
        %v1153 = vmul.f32 %v1148, %v1144
        %v1154 = vmul.f32 %v1148, %v1145
        %v1155 = vmul.f32 %v1148, %v1146
        %v1156 = vmul.f32 %v1148, %v1147
        %v1157 = vadd.f32 %v921, %v1149
        %v1158 = vadd.f32 %v922, %v1150
        %v1159 = vadd.f32 %v923, %v1151
        %v1160 = vadd.f32 %v924, %v1152
        %v1161 = vadd.f32 %v925, %v1153
        %v1162 = vadd.f32 %v926, %v1154
        %v1163 = vadd.f32 %v927, %v1155
        %v1164 = vadd.f32 %v928, %v1156
        %v1165 = vpack.c.bf16 %v1158, %v1157
        %v1166 = vpack.c.bf16 %v1160, %v1159
        %v1167 = vpack.c.bf16 %v1162, %v1161
        %v1168 = vpack.c.bf16 %v1164, %v1163
        %v1169 = vld [vmem:[%s883] sm:$0xf]
        %v1170 = vld [vmem:[%s883 + $0x4] sm:$0xf]
        %v1171 = vld [vmem:[%s883 + $0x8] sm:$0xf]
        %v1172 = vld [vmem:[%s883 + $0xc] sm:$0xf]
        %v1173 = vld [vmem:[%s724] sm:$0x1]
        %v1175 = vperm.slane %v1173, 0
        %v1181 = vunpack.c.l.b16 %v1169
        %v1182 = vunpack.c.l.b16 %v1170
        %v1183 = vunpack.c.l.b16 %v1171
        %v1184 = vunpack.c.l.b16 %v1172
        %v1185 = vpack.c.b16 %v1182, %v1181
        %v1186 = vpack.c.b16 %v1184, %v1183
        %v1190 = vsel %vm931, %v1165, 0
        %v1193 = vsel %vm931, %v1166, 0
        %v1196 = vsel %vm931, %v1167, 0
        %v1199 = vsel %vm931, %v1168, 0
        %1201 = vmatpush.bf16.msra.mxu0 0
        %1202 = vmatpush.bf16.msra.mxu0 0
        %1203 = vmatpush.bf16.msra.mxu0 0
        %1204 = vmatpush.bf16.msra.mxu0 0
        %1205 = vmatpush.bf16.msra.mxu0 0
        %1206 = vmatpush.bf16.msra.mxu0 0
        %1207 = vmatpush.bf16.msra.mxu0 %v1186
        %1208 = vmatpush.bf16.msra.mxu0 %v1185
        %1209 = vmatmul.bf16.gmra.mxu0 %v1190
        %v1210 = vpop.f32.mrf.mxu0
        %v1211 = vadd.f32 %v1175, %v1210
        %v1212 = vpop.f32.mrf.mxu0
        %v1213 = vadd.f32 %v1175, %v1212
        %1214 = vmatmul.bf16.gmra.mxu0 %v1193
        %v1215 = vpop.f32.mrf.mxu0
        %v1216 = vadd.f32 %v1175, %v1215
        %v1217 = vpop.f32.mrf.mxu0
        %v1218 = vadd.f32 %v1175, %v1217
        %1219 = vmatmul.bf16.gmra.mxu0 %v1196
        %v1220 = vpop.f32.mrf.mxu0
        %v1221 = vadd.f32 %v1175, %v1220
        %v1222 = vpop.f32.mrf.mxu0
        %v1223 = vadd.f32 %v1175, %v1222
        %1224 = vmatmul.bf16.gmra.mxu0 %v1199
        %v1225 = vpop.f32.mrf.mxu0
        %v1226 = vadd.f32 %v1175, %v1225
        %v1227 = vpop.f32.mrf.mxu0
        %v1228 = vadd.f32 %v1175, %v1227
        %1229 = vdwg.mxu0
        %1238 = vrot.lane.b32.xlu0 %v1211, 120
        %v1239 = vpop.permute.xlu0 %1238
        %1240 = vrot.lane.b32.xlu0 %v1213, 120
        %v1241 = vpop.permute.xlu0 %1240
        %1242 = vrot.lane.b32.xlu0 %v1216, 120
        %v1243 = vpop.permute.xlu0 %1242
        %1244 = vrot.lane.b32.xlu0 %v1218, 120
        %v1245 = vpop.permute.xlu0 %1244
        %1246 = vrot.lane.b32.xlu0 %v1221, 120
        %v1247 = vpop.permute.xlu0 %1246
        %1248 = vrot.lane.b32.xlu0 %v1223, 120
        %v1249 = vpop.permute.xlu0 %1248
        %1250 = vrot.lane.b32.xlu0 %v1226, 120
        %v1251 = vpop.permute.xlu0 %1250
        %1252 = vrot.lane.b32.xlu0 %v1228, 120
        %v1253 = vpop.permute.xlu0 %1252
        %1262 = vrot.lane.b32.xlu0 %v1211, 112
        %v1263 = vpop.permute.xlu0 %1262
        %1264 = vrot.lane.b32.xlu0 %v1213, 112
        %v1265 = vpop.permute.xlu0 %1264
        %1266 = vrot.lane.b32.xlu0 %v1216, 112
        %v1267 = vpop.permute.xlu0 %1266
        %1268 = vrot.lane.b32.xlu0 %v1218, 112
        %v1269 = vpop.permute.xlu0 %1268
        %1270 = vrot.lane.b32.xlu0 %v1221, 112
        %v1271 = vpop.permute.xlu0 %1270
        %1272 = vrot.lane.b32.xlu0 %v1223, 112
        %v1273 = vpop.permute.xlu0 %1272
        %1274 = vrot.lane.b32.xlu0 %v1226, 112
        %v1275 = vpop.permute.xlu0 %1274
        %1276 = vrot.lane.b32.xlu0 %v1228, 112
        %v1277 = vpop.permute.xlu0 %1276
        %1286 = vrot.lane.b32.xlu0 %v1211, 104
        %v1287 = vpop.permute.xlu0 %1286
        %1288 = vrot.lane.b32.xlu0 %v1213, 104
        %v1289 = vpop.permute.xlu0 %1288
        %1290 = vrot.lane.b32.xlu0 %v1216, 104
        %v1291 = vpop.permute.xlu0 %1290
        %1292 = vrot.lane.b32.xlu0 %v1218, 104
        %v1293 = vpop.permute.xlu0 %1292
        %1294 = vrot.lane.b32.xlu0 %v1221, 104
        %v1295 = vpop.permute.xlu0 %1294
        %1296 = vrot.lane.b32.xlu0 %v1223, 104
        %v1297 = vpop.permute.xlu0 %1296
        %1298 = vrot.lane.b32.xlu0 %v1226, 104
        %v1299 = vpop.permute.xlu0 %1298
        %1300 = vrot.lane.b32.xlu0 %v1228, 104
        %v1301 = vpop.permute.xlu0 %1300
        %v1310 = vpack.c.bf16 %v1211, %v1211
        %v1311 = vpack.c.bf16 %v1213, %v1213
        %v1312 = vpack.c.bf16 %v1216, %v1216
        %v1313 = vpack.c.bf16 %v1218, %v1218
        %v1314 = vpack.c.bf16 %v1221, %v1221
        %v1315 = vpack.c.bf16 %v1223, %v1223
        %v1316 = vpack.c.bf16 %v1226, %v1226
        %v1317 = vpack.c.bf16 %v1228, %v1228
        %v1318 = vpack.c.bf16 %v1239, %v1239
        %v1319 = vpack.c.bf16 %v1241, %v1241
        %v1320 = vpack.c.bf16 %v1243, %v1243
        %v1321 = vpack.c.bf16 %v1245, %v1245
        %v1322 = vpack.c.bf16 %v1247, %v1247
        %v1323 = vpack.c.bf16 %v1249, %v1249
        %v1324 = vpack.c.bf16 %v1251, %v1251
        %v1325 = vpack.c.bf16 %v1253, %v1253
        %v1326 = vpack.c.bf16 %v1263, %v1263
        %v1327 = vpack.c.bf16 %v1265, %v1265
        %v1328 = vpack.c.bf16 %v1267, %v1267
        %v1329 = vpack.c.bf16 %v1269, %v1269
        %v1330 = vpack.c.bf16 %v1271, %v1271
        %v1331 = vpack.c.bf16 %v1273, %v1273
        %v1332 = vpack.c.bf16 %v1275, %v1275
        %v1333 = vpack.c.bf16 %v1277, %v1277
        %v1334 = vpack.c.bf16 %v1287, %v1287
        %v1335 = vpack.c.bf16 %v1289, %v1289
        %v1336 = vpack.c.bf16 %v1291, %v1291
        %v1337 = vpack.c.bf16 %v1293, %v1293
        %v1338 = vpack.c.bf16 %v1295, %v1295
        %v1339 = vpack.c.bf16 %v1297, %v1297
        %v1340 = vpack.c.bf16 %v1299, %v1299
        %v1341 = vpack.c.bf16 %v1301, %v1301
        %v1343 = vunpack.c.l.b16 %v1310
        %v1344 = vpack.c.b16 %v1343, %v1343
        %1345 = vrot.lane.b32.xlu0 %v1344, 96
        %v1346 = vpop.permute.xlu0 %1345
        %vm1347 = vcmask 64512
        %v1349 = vsel %vm1347, %v1310, 0
        %v1352 = vsel %vm1347, %v1346, 0
        %1354 = vmatpush.bf16.xpose.msra.mxu0 0
        %1355 = vmatpush.bf16.xpose.msra.mxu0 0
        %1356 = vmatpush.bf16.xpose.msra.mxu0 0
        %1357 = vmatpush.bf16.xpose.msra.mxu0 0
        %1358 = vmatpush.bf16.xpose.msra.mxu0 0
        %1359 = vmatpush.bf16.xpose.msra.mxu0 0
        %1360 = vmatpush.bf16.xpose.msra.mxu0 0
        %1361 = vmatpush.bf16.xpose.msra.mxu0 %v1352
        %1362 = vmatmul.bf16.gmra.mxu0 %v1349
        %v1363 = vpop.f32.mrf.mxu0
        %v1364 = vadd.f32 0.0, %v1363
        %v1365 = vpop.f32.mrf.mxu0
        %1366 = vdwg.mxu0
        %v1368 = vunpack.c.l.b16 %v1311
        %v1369 = vpack.c.b16 %v1368, %v1368
        %1370 = vrot.lane.b32.xlu0 %v1369, 96
        %v1371 = vpop.permute.xlu0 %1370
        %v1373 = vsel %vm1347, %v1311, 0
        %v1376 = vsel %vm1347, %v1371, 0
        %1378 = vmatpush.bf16.xpose.msra.mxu0 0
        %1379 = vmatpush.bf16.xpose.msra.mxu0 0
        %1380 = vmatpush.bf16.xpose.msra.mxu0 0
        %1381 = vmatpush.bf16.xpose.msra.mxu0 0
        %1382 = vmatpush.bf16.xpose.msra.mxu0 0
        %1383 = vmatpush.bf16.xpose.msra.mxu0 0
        %1384 = vmatpush.bf16.xpose.msra.mxu0 0
        %1385 = vmatpush.bf16.xpose.msra.mxu0 %v1376
        %1386 = vmatmul.bf16.gmra.mxu0 %v1373
        %v1387 = vpop.f32.mrf.mxu0
        %v1388 = vadd.f32 0.0, %v1387
        %v1389 = vpop.f32.mrf.mxu0
        %1390 = vdwg.mxu0
        %v1392 = vunpack.c.l.b16 %v1312
        %v1393 = vpack.c.b16 %v1392, %v1392
        %1394 = vrot.lane.b32.xlu0 %v1393, 96
        %v1395 = vpop.permute.xlu0 %1394
        %v1397 = vsel %vm1347, %v1312, 0
        %v1400 = vsel %vm1347, %v1395, 0
        %1402 = vmatpush.bf16.xpose.msra.mxu0 0
        %1403 = vmatpush.bf16.xpose.msra.mxu0 0
        %1404 = vmatpush.bf16.xpose.msra.mxu0 0
        %1405 = vmatpush.bf16.xpose.msra.mxu0 0
        %1406 = vmatpush.bf16.xpose.msra.mxu0 0
        %1407 = vmatpush.bf16.xpose.msra.mxu0 0
        %1408 = vmatpush.bf16.xpose.msra.mxu0 0
        %1409 = vmatpush.bf16.xpose.msra.mxu0 %v1400
        %1410 = vmatmul.bf16.gmra.mxu0 %v1397
        %v1411 = vpop.f32.mrf.mxu0
        %v1412 = vadd.f32 0.0, %v1411
        %v1413 = vpop.f32.mrf.mxu0
        %1414 = vdwg.mxu0
        %v1416 = vunpack.c.l.b16 %v1313
        %v1417 = vpack.c.b16 %v1416, %v1416
        %1418 = vrot.lane.b32.xlu0 %v1417, 96
        %v1419 = vpop.permute.xlu0 %1418
        %v1421 = vsel %vm1347, %v1313, 0
        %v1424 = vsel %vm1347, %v1419, 0
        %1426 = vmatpush.bf16.xpose.msra.mxu0 0
        %1427 = vmatpush.bf16.xpose.msra.mxu0 0
        %1428 = vmatpush.bf16.xpose.msra.mxu0 0
        %1429 = vmatpush.bf16.xpose.msra.mxu0 0
        %1430 = vmatpush.bf16.xpose.msra.mxu0 0
        %1431 = vmatpush.bf16.xpose.msra.mxu0 0
        %1432 = vmatpush.bf16.xpose.msra.mxu0 0
        %1433 = vmatpush.bf16.xpose.msra.mxu0 %v1424
        %1434 = vmatmul.bf16.gmra.mxu0 %v1421
        %v1435 = vpop.f32.mrf.mxu0
        %v1436 = vadd.f32 0.0, %v1435
        %v1437 = vpop.f32.mrf.mxu0
        %1438 = vdwg.mxu0
        %v1440 = vunpack.c.l.b16 %v1314
        %v1441 = vpack.c.b16 %v1440, %v1440
        %1442 = vrot.lane.b32.xlu0 %v1441, 96
        %v1443 = vpop.permute.xlu0 %1442
        %v1445 = vsel %vm1347, %v1314, 0
        %v1448 = vsel %vm1347, %v1443, 0
        %1450 = vmatpush.bf16.xpose.msra.mxu0 0
        %1451 = vmatpush.bf16.xpose.msra.mxu0 0
        %1452 = vmatpush.bf16.xpose.msra.mxu0 0
        %1453 = vmatpush.bf16.xpose.msra.mxu0 0
        %1454 = vmatpush.bf16.xpose.msra.mxu0 0
        %1455 = vmatpush.bf16.xpose.msra.mxu0 0
        %1456 = vmatpush.bf16.xpose.msra.mxu0 0
        %1457 = vmatpush.bf16.xpose.msra.mxu0 %v1448
        %1458 = vmatmul.bf16.gmra.mxu0 %v1445
        %v1459 = vpop.f32.mrf.mxu0
        %v1460 = vadd.f32 0.0, %v1459
        %v1461 = vpop.f32.mrf.mxu0
        %1462 = vdwg.mxu0
        %v1464 = vunpack.c.l.b16 %v1315
        %v1465 = vpack.c.b16 %v1464, %v1464
        %1466 = vrot.lane.b32.xlu0 %v1465, 96
        %v1467 = vpop.permute.xlu0 %1466
        %v1469 = vsel %vm1347, %v1315, 0
        %v1472 = vsel %vm1347, %v1467, 0
        %1474 = vmatpush.bf16.xpose.msra.mxu0 0
        %1475 = vmatpush.bf16.xpose.msra.mxu0 0
        %1476 = vmatpush.bf16.xpose.msra.mxu0 0
        %1477 = vmatpush.bf16.xpose.msra.mxu0 0
        %1478 = vmatpush.bf16.xpose.msra.mxu0 0
        %1479 = vmatpush.bf16.xpose.msra.mxu0 0
        %1480 = vmatpush.bf16.xpose.msra.mxu0 0
        %1481 = vmatpush.bf16.xpose.msra.mxu0 %v1472
        %1482 = vmatmul.bf16.gmra.mxu0 %v1469
        %v1483 = vpop.f32.mrf.mxu0
        %v1484 = vadd.f32 0.0, %v1483
        %v1485 = vpop.f32.mrf.mxu0
        %1486 = vdwg.mxu0
        %v1488 = vunpack.c.l.b16 %v1316
        %v1489 = vpack.c.b16 %v1488, %v1488
        %1490 = vrot.lane.b32.xlu0 %v1489, 96
        %v1491 = vpop.permute.xlu0 %1490
        %v1493 = vsel %vm1347, %v1316, 0
        %v1496 = vsel %vm1347, %v1491, 0
        %1498 = vmatpush.bf16.xpose.msra.mxu0 0
        %1499 = vmatpush.bf16.xpose.msra.mxu0 0
        %1500 = vmatpush.bf16.xpose.msra.mxu0 0
        %1501 = vmatpush.bf16.xpose.msra.mxu0 0
        %1502 = vmatpush.bf16.xpose.msra.mxu0 0
        %1503 = vmatpush.bf16.xpose.msra.mxu0 0
        %1504 = vmatpush.bf16.xpose.msra.mxu0 0
        %1505 = vmatpush.bf16.xpose.msra.mxu0 %v1496
        %1506 = vmatmul.bf16.gmra.mxu0 %v1493
        %v1507 = vpop.f32.mrf.mxu0
        %v1508 = vadd.f32 0.0, %v1507
        %v1509 = vpop.f32.mrf.mxu0
        %1510 = vdwg.mxu0
        %v1512 = vunpack.c.l.b16 %v1317
        %v1513 = vpack.c.b16 %v1512, %v1512
        %1514 = vrot.lane.b32.xlu0 %v1513, 96
        %v1515 = vpop.permute.xlu0 %1514
        %v1517 = vsel %vm1347, %v1317, 0
        %v1520 = vsel %vm1347, %v1515, 0
        %1522 = vmatpush.bf16.xpose.msra.mxu0 0
        %1523 = vmatpush.bf16.xpose.msra.mxu0 0
        %1524 = vmatpush.bf16.xpose.msra.mxu0 0
        %1525 = vmatpush.bf16.xpose.msra.mxu0 0
        %1526 = vmatpush.bf16.xpose.msra.mxu0 0
        %1527 = vmatpush.bf16.xpose.msra.mxu0 0
        %1528 = vmatpush.bf16.xpose.msra.mxu0 0
        %1529 = vmatpush.bf16.xpose.msra.mxu0 %v1520
        %1530 = vmatmul.bf16.gmra.mxu0 %v1517
        %v1531 = vpop.f32.mrf.mxu0
        %v1532 = vadd.f32 0.0, %v1531
        %v1533 = vpop.f32.mrf.mxu0
        %1534 = vdwg.mxu0
        %v1536 = vunpack.c.l.b16 %v1318
        %v1537 = vpack.c.b16 %v1536, %v1536
        %1538 = vrot.lane.b32.xlu0 %v1537, 96
        %v1539 = vpop.permute.xlu0 %1538
        %v1541 = vsel %vm1347, %v1318, 0
        %v1544 = vsel %vm1347, %v1539, 0
        %1546 = vmatpush.bf16.xpose.msra.mxu0 0
        %1547 = vmatpush.bf16.xpose.msra.mxu0 0
        %1548 = vmatpush.bf16.xpose.msra.mxu0 0
        %1549 = vmatpush.bf16.xpose.msra.mxu0 0
        %1550 = vmatpush.bf16.xpose.msra.mxu0 0
        %1551 = vmatpush.bf16.xpose.msra.mxu0 0
        %1552 = vmatpush.bf16.xpose.msra.mxu0 0
        %1553 = vmatpush.bf16.xpose.msra.mxu0 %v1544
        %1554 = vmatmul.bf16.gmra.mxu0 %v1541
        %v1555 = vpop.f32.mrf.mxu0
        %v1556 = vadd.f32 0.0, %v1555
        %v1557 = vpop.f32.mrf.mxu0
        %1558 = vdwg.mxu0
        %v1560 = vunpack.c.l.b16 %v1319
        %v1561 = vpack.c.b16 %v1560, %v1560
        %1562 = vrot.lane.b32.xlu0 %v1561, 96
        %v1563 = vpop.permute.xlu0 %1562
        %v1565 = vsel %vm1347, %v1319, 0
        %v1568 = vsel %vm1347, %v1563, 0
        %1570 = vmatpush.bf16.xpose.msra.mxu0 0
        %1571 = vmatpush.bf16.xpose.msra.mxu0 0
        %1572 = vmatpush.bf16.xpose.msra.mxu0 0
        %1573 = vmatpush.bf16.xpose.msra.mxu0 0
        %1574 = vmatpush.bf16.xpose.msra.mxu0 0
        %1575 = vmatpush.bf16.xpose.msra.mxu0 0
        %1576 = vmatpush.bf16.xpose.msra.mxu0 0
        %1577 = vmatpush.bf16.xpose.msra.mxu0 %v1568
        %1578 = vmatmul.bf16.gmra.mxu0 %v1565
        %v1579 = vpop.f32.mrf.mxu0
        %v1580 = vadd.f32 0.0, %v1579
        %v1581 = vpop.f32.mrf.mxu0
        %1582 = vdwg.mxu0
        %v1584 = vunpack.c.l.b16 %v1320
        %v1585 = vpack.c.b16 %v1584, %v1584
        %1586 = vrot.lane.b32.xlu0 %v1585, 96
        %v1587 = vpop.permute.xlu0 %1586
        %v1589 = vsel %vm1347, %v1320, 0
        %v1592 = vsel %vm1347, %v1587, 0
        %1594 = vmatpush.bf16.xpose.msra.mxu0 0
        %1595 = vmatpush.bf16.xpose.msra.mxu0 0
        %1596 = vmatpush.bf16.xpose.msra.mxu0 0
        %1597 = vmatpush.bf16.xpose.msra.mxu0 0
        %1598 = vmatpush.bf16.xpose.msra.mxu0 0
        %1599 = vmatpush.bf16.xpose.msra.mxu0 0
        %1600 = vmatpush.bf16.xpose.msra.mxu0 0
        %1601 = vmatpush.bf16.xpose.msra.mxu0 %v1592
        %1602 = vmatmul.bf16.gmra.mxu0 %v1589
        %v1603 = vpop.f32.mrf.mxu0
        %v1604 = vadd.f32 0.0, %v1603
        %v1605 = vpop.f32.mrf.mxu0
        %1606 = vdwg.mxu0
        %v1608 = vunpack.c.l.b16 %v1321
        %v1609 = vpack.c.b16 %v1608, %v1608
        %1610 = vrot.lane.b32.xlu0 %v1609, 96
        %v1611 = vpop.permute.xlu0 %1610
        %v1613 = vsel %vm1347, %v1321, 0
        %v1616 = vsel %vm1347, %v1611, 0
        %1618 = vmatpush.bf16.xpose.msra.mxu0 0
        %1619 = vmatpush.bf16.xpose.msra.mxu0 0
        %1620 = vmatpush.bf16.xpose.msra.mxu0 0
        %1621 = vmatpush.bf16.xpose.msra.mxu0 0
        %1622 = vmatpush.bf16.xpose.msra.mxu0 0
        %1623 = vmatpush.bf16.xpose.msra.mxu0 0
        %1624 = vmatpush.bf16.xpose.msra.mxu0 0
        %1625 = vmatpush.bf16.xpose.msra.mxu0 %v1616
        %1626 = vmatmul.bf16.gmra.mxu0 %v1613
        %v1627 = vpop.f32.mrf.mxu0
        %v1628 = vadd.f32 0.0, %v1627
        %v1629 = vpop.f32.mrf.mxu0
        %1630 = vdwg.mxu0
        %v1632 = vunpack.c.l.b16 %v1322
        %v1633 = vpack.c.b16 %v1632, %v1632
        %1634 = vrot.lane.b32.xlu0 %v1633, 96
        %v1635 = vpop.permute.xlu0 %1634
        %v1637 = vsel %vm1347, %v1322, 0
        %v1640 = vsel %vm1347, %v1635, 0
        %1642 = vmatpush.bf16.xpose.msra.mxu0 0
        %1643 = vmatpush.bf16.xpose.msra.mxu0 0
        %1644 = vmatpush.bf16.xpose.msra.mxu0 0
        %1645 = vmatpush.bf16.xpose.msra.mxu0 0
        %1646 = vmatpush.bf16.xpose.msra.mxu0 0
        %1647 = vmatpush.bf16.xpose.msra.mxu0 0
        %1648 = vmatpush.bf16.xpose.msra.mxu0 0
        %1649 = vmatpush.bf16.xpose.msra.mxu0 %v1640
        %1650 = vmatmul.bf16.gmra.mxu0 %v1637
        %v1651 = vpop.f32.mrf.mxu0
        %v1652 = vadd.f32 0.0, %v1651
        %v1653 = vpop.f32.mrf.mxu0
        %1654 = vdwg.mxu0
        %v1656 = vunpack.c.l.b16 %v1323
        %v1657 = vpack.c.b16 %v1656, %v1656
        %1658 = vrot.lane.b32.xlu0 %v1657, 96
        %v1659 = vpop.permute.xlu0 %1658
        %v1661 = vsel %vm1347, %v1323, 0
        %v1664 = vsel %vm1347, %v1659, 0
        %1666 = vmatpush.bf16.xpose.msra.mxu0 0
        %1667 = vmatpush.bf16.xpose.msra.mxu0 0
        %1668 = vmatpush.bf16.xpose.msra.mxu0 0
        %1669 = vmatpush.bf16.xpose.msra.mxu0 0
        %1670 = vmatpush.bf16.xpose.msra.mxu0 0
        %1671 = vmatpush.bf16.xpose.msra.mxu0 0
        %1672 = vmatpush.bf16.xpose.msra.mxu0 0
        %1673 = vmatpush.bf16.xpose.msra.mxu0 %v1664
        %1674 = vmatmul.bf16.gmra.mxu0 %v1661
        %v1675 = vpop.f32.mrf.mxu0
        %v1676 = vadd.f32 0.0, %v1675
        %v1677 = vpop.f32.mrf.mxu0
        %1678 = vdwg.mxu0
        %v1680 = vunpack.c.l.b16 %v1324
        %v1681 = vpack.c.b16 %v1680, %v1680
        %1682 = vrot.lane.b32.xlu0 %v1681, 96
        %v1683 = vpop.permute.xlu0 %1682
        %v1685 = vsel %vm1347, %v1324, 0
        %v1688 = vsel %vm1347, %v1683, 0
        %1690 = vmatpush.bf16.xpose.msra.mxu0 0
        %1691 = vmatpush.bf16.xpose.msra.mxu0 0
        %1692 = vmatpush.bf16.xpose.msra.mxu0 0
        %1693 = vmatpush.bf16.xpose.msra.mxu0 0
        %1694 = vmatpush.bf16.xpose.msra.mxu0 0
        %1695 = vmatpush.bf16.xpose.msra.mxu0 0
        %1696 = vmatpush.bf16.xpose.msra.mxu0 0
        %1697 = vmatpush.bf16.xpose.msra.mxu0 %v1688
        %1698 = vmatmul.bf16.gmra.mxu0 %v1685
        %v1699 = vpop.f32.mrf.mxu0
        %v1700 = vadd.f32 0.0, %v1699
        %v1701 = vpop.f32.mrf.mxu0
        %1702 = vdwg.mxu0
        %v1704 = vunpack.c.l.b16 %v1325
        %v1705 = vpack.c.b16 %v1704, %v1704
        %1706 = vrot.lane.b32.xlu0 %v1705, 96
        %v1707 = vpop.permute.xlu0 %1706
        %v1709 = vsel %vm1347, %v1325, 0
        %v1712 = vsel %vm1347, %v1707, 0
        %1714 = vmatpush.bf16.xpose.msra.mxu0 0
        %1715 = vmatpush.bf16.xpose.msra.mxu0 0
        %1716 = vmatpush.bf16.xpose.msra.mxu0 0
        %1717 = vmatpush.bf16.xpose.msra.mxu0 0
        %1718 = vmatpush.bf16.xpose.msra.mxu0 0
        %1719 = vmatpush.bf16.xpose.msra.mxu0 0
        %1720 = vmatpush.bf16.xpose.msra.mxu0 0
        %1721 = vmatpush.bf16.xpose.msra.mxu0 %v1712
        %1722 = vmatmul.bf16.gmra.mxu0 %v1709
        %v1723 = vpop.f32.mrf.mxu0
        %v1724 = vadd.f32 0.0, %v1723
        %v1725 = vpop.f32.mrf.mxu0
        %1726 = vdwg.mxu0
        %v1728 = vunpack.c.l.b16 %v1326
        %v1729 = vpack.c.b16 %v1728, %v1728
        %1730 = vrot.lane.b32.xlu0 %v1729, 96
        %v1731 = vpop.permute.xlu0 %1730
        %v1733 = vsel %vm1347, %v1326, 0
        %v1736 = vsel %vm1347, %v1731, 0
        %1738 = vmatpush.bf16.xpose.msra.mxu0 0
        %1739 = vmatpush.bf16.xpose.msra.mxu0 0
        %1740 = vmatpush.bf16.xpose.msra.mxu0 0
        %1741 = vmatpush.bf16.xpose.msra.mxu0 0
        %1742 = vmatpush.bf16.xpose.msra.mxu0 0
        %1743 = vmatpush.bf16.xpose.msra.mxu0 0
        %1744 = vmatpush.bf16.xpose.msra.mxu0 0
        %1745 = vmatpush.bf16.xpose.msra.mxu0 %v1736
        %1746 = vmatmul.bf16.gmra.mxu0 %v1733
        %v1747 = vpop.f32.mrf.mxu0
        %v1748 = vadd.f32 0.0, %v1747
        %v1749 = vpop.f32.mrf.mxu0
        %1750 = vdwg.mxu0
        %v1752 = vunpack.c.l.b16 %v1327
        %v1753 = vpack.c.b16 %v1752, %v1752
        %1754 = vrot.lane.b32.xlu0 %v1753, 96
        %v1755 = vpop.permute.xlu0 %1754
        %v1757 = vsel %vm1347, %v1327, 0
        %v1760 = vsel %vm1347, %v1755, 0
        %1762 = vmatpush.bf16.xpose.msra.mxu0 0
        %1763 = vmatpush.bf16.xpose.msra.mxu0 0
        %1764 = vmatpush.bf16.xpose.msra.mxu0 0
        %1765 = vmatpush.bf16.xpose.msra.mxu0 0
        %1766 = vmatpush.bf16.xpose.msra.mxu0 0
        %1767 = vmatpush.bf16.xpose.msra.mxu0 0
        %1768 = vmatpush.bf16.xpose.msra.mxu0 0
        %1769 = vmatpush.bf16.xpose.msra.mxu0 %v1760
        %1770 = vmatmul.bf16.gmra.mxu0 %v1757
        %v1771 = vpop.f32.mrf.mxu0
        %v1772 = vadd.f32 0.0, %v1771
        %v1773 = vpop.f32.mrf.mxu0
        %1774 = vdwg.mxu0
        %v1776 = vunpack.c.l.b16 %v1328
        %v1777 = vpack.c.b16 %v1776, %v1776
        %1778 = vrot.lane.b32.xlu0 %v1777, 96
        %v1779 = vpop.permute.xlu0 %1778
        %v1781 = vsel %vm1347, %v1328, 0
        %v1784 = vsel %vm1347, %v1779, 0
        %1786 = vmatpush.bf16.xpose.msra.mxu0 0
        %1787 = vmatpush.bf16.xpose.msra.mxu0 0
        %1788 = vmatpush.bf16.xpose.msra.mxu0 0
        %1789 = vmatpush.bf16.xpose.msra.mxu0 0
        %1790 = vmatpush.bf16.xpose.msra.mxu0 0
        %1791 = vmatpush.bf16.xpose.msra.mxu0 0
        %1792 = vmatpush.bf16.xpose.msra.mxu0 0
        %1793 = vmatpush.bf16.xpose.msra.mxu0 %v1784
        %1794 = vmatmul.bf16.gmra.mxu0 %v1781
        %v1795 = vpop.f32.mrf.mxu0
        %v1796 = vadd.f32 0.0, %v1795
        %v1797 = vpop.f32.mrf.mxu0
        %1798 = vdwg.mxu0
        %v1800 = vunpack.c.l.b16 %v1329
        %v1801 = vpack.c.b16 %v1800, %v1800
        %1802 = vrot.lane.b32.xlu0 %v1801, 96
        %v1803 = vpop.permute.xlu0 %1802
        %v1805 = vsel %vm1347, %v1329, 0
        %v1808 = vsel %vm1347, %v1803, 0
        %1810 = vmatpush.bf16.xpose.msra.mxu0 0
        %1811 = vmatpush.bf16.xpose.msra.mxu0 0
        %1812 = vmatpush.bf16.xpose.msra.mxu0 0
        %1813 = vmatpush.bf16.xpose.msra.mxu0 0
        %1814 = vmatpush.bf16.xpose.msra.mxu0 0
        %1815 = vmatpush.bf16.xpose.msra.mxu0 0
        %1816 = vmatpush.bf16.xpose.msra.mxu0 0
        %1817 = vmatpush.bf16.xpose.msra.mxu0 %v1808
        %1818 = vmatmul.bf16.gmra.mxu0 %v1805
        %v1819 = vpop.f32.mrf.mxu0
        %v1820 = vadd.f32 0.0, %v1819
        %v1821 = vpop.f32.mrf.mxu0
        %1822 = vdwg.mxu0
        %v1824 = vunpack.c.l.b16 %v1330
        %v1825 = vpack.c.b16 %v1824, %v1824
        %1826 = vrot.lane.b32.xlu0 %v1825, 96
        %v1827 = vpop.permute.xlu0 %1826
        %v1829 = vsel %vm1347, %v1330, 0
        %v1832 = vsel %vm1347, %v1827, 0
        %1834 = vmatpush.bf16.xpose.msra.mxu0 0
        %1835 = vmatpush.bf16.xpose.msra.mxu0 0
        %1836 = vmatpush.bf16.xpose.msra.mxu0 0
        %1837 = vmatpush.bf16.xpose.msra.mxu0 0
        %1838 = vmatpush.bf16.xpose.msra.mxu0 0
        %1839 = vmatpush.bf16.xpose.msra.mxu0 0
        %1840 = vmatpush.bf16.xpose.msra.mxu0 0
        %1841 = vmatpush.bf16.xpose.msra.mxu0 %v1832
        %1842 = vmatmul.bf16.gmra.mxu0 %v1829
        %v1843 = vpop.f32.mrf.mxu0
        %v1844 = vadd.f32 0.0, %v1843
        %v1845 = vpop.f32.mrf.mxu0
        %1846 = vdwg.mxu0
        %v1848 = vunpack.c.l.b16 %v1331
        %v1849 = vpack.c.b16 %v1848, %v1848
        %1850 = vrot.lane.b32.xlu0 %v1849, 96
        %v1851 = vpop.permute.xlu0 %1850
        %v1853 = vsel %vm1347, %v1331, 0
        %v1856 = vsel %vm1347, %v1851, 0
        %1858 = vmatpush.bf16.xpose.msra.mxu0 0
        %1859 = vmatpush.bf16.xpose.msra.mxu0 0
        %1860 = vmatpush.bf16.xpose.msra.mxu0 0
        %1861 = vmatpush.bf16.xpose.msra.mxu0 0
        %1862 = vmatpush.bf16.xpose.msra.mxu0 0
        %1863 = vmatpush.bf16.xpose.msra.mxu0 0
        %1864 = vmatpush.bf16.xpose.msra.mxu0 0
        %1865 = vmatpush.bf16.xpose.msra.mxu0 %v1856
        %1866 = vmatmul.bf16.gmra.mxu0 %v1853
        %v1867 = vpop.f32.mrf.mxu0
        %v1868 = vadd.f32 0.0, %v1867
        %v1869 = vpop.f32.mrf.mxu0
        %1870 = vdwg.mxu0
        %v1872 = vunpack.c.l.b16 %v1332
        %v1873 = vpack.c.b16 %v1872, %v1872
        %1874 = vrot.lane.b32.xlu0 %v1873, 96
        %v1875 = vpop.permute.xlu0 %1874
        %v1877 = vsel %vm1347, %v1332, 0
        %v1880 = vsel %vm1347, %v1875, 0
        %1882 = vmatpush.bf16.xpose.msra.mxu0 0
        %1883 = vmatpush.bf16.xpose.msra.mxu0 0
        %1884 = vmatpush.bf16.xpose.msra.mxu0 0
        %1885 = vmatpush.bf16.xpose.msra.mxu0 0
        %1886 = vmatpush.bf16.xpose.msra.mxu0 0
        %1887 = vmatpush.bf16.xpose.msra.mxu0 0
        %1888 = vmatpush.bf16.xpose.msra.mxu0 0
        %1889 = vmatpush.bf16.xpose.msra.mxu0 %v1880
        %1890 = vmatmul.bf16.gmra.mxu0 %v1877
        %v1891 = vpop.f32.mrf.mxu0
        %v1892 = vadd.f32 0.0, %v1891
        %v1893 = vpop.f32.mrf.mxu0
        %1894 = vdwg.mxu0
        %v1896 = vunpack.c.l.b16 %v1333
        %v1897 = vpack.c.b16 %v1896, %v1896
        %1898 = vrot.lane.b32.xlu0 %v1897, 96
        %v1899 = vpop.permute.xlu0 %1898
        %v1901 = vsel %vm1347, %v1333, 0
        %v1904 = vsel %vm1347, %v1899, 0
        %1906 = vmatpush.bf16.xpose.msra.mxu0 0
        %1907 = vmatpush.bf16.xpose.msra.mxu0 0
        %1908 = vmatpush.bf16.xpose.msra.mxu0 0
        %1909 = vmatpush.bf16.xpose.msra.mxu0 0
        %1910 = vmatpush.bf16.xpose.msra.mxu0 0
        %1911 = vmatpush.bf16.xpose.msra.mxu0 0
        %1912 = vmatpush.bf16.xpose.msra.mxu0 0
        %1913 = vmatpush.bf16.xpose.msra.mxu0 %v1904
        %1914 = vmatmul.bf16.gmra.mxu0 %v1901
        %v1915 = vpop.f32.mrf.mxu0
        %v1916 = vadd.f32 0.0, %v1915
        %v1917 = vpop.f32.mrf.mxu0
        %1918 = vdwg.mxu0
        %v1920 = vunpack.c.l.b16 %v1334
        %v1921 = vpack.c.b16 %v1920, %v1920
        %1922 = vrot.lane.b32.xlu0 %v1921, 96
        %v1923 = vpop.permute.xlu0 %1922
        %v1925 = vsel %vm1347, %v1334, 0
        %v1928 = vsel %vm1347, %v1923, 0
        %1930 = vmatpush.bf16.xpose.msra.mxu0 0
        %1931 = vmatpush.bf16.xpose.msra.mxu0 0
        %1932 = vmatpush.bf16.xpose.msra.mxu0 0
        %1933 = vmatpush.bf16.xpose.msra.mxu0 0
        %1934 = vmatpush.bf16.xpose.msra.mxu0 0
        %1935 = vmatpush.bf16.xpose.msra.mxu0 0
        %1936 = vmatpush.bf16.xpose.msra.mxu0 0
        %1937 = vmatpush.bf16.xpose.msra.mxu0 %v1928
        %1938 = vmatmul.bf16.gmra.mxu0 %v1925
        %v1939 = vpop.f32.mrf.mxu0
        %v1940 = vadd.f32 0.0, %v1939
        %v1941 = vpop.f32.mrf.mxu0
        %1942 = vdwg.mxu0
        %v1944 = vunpack.c.l.b16 %v1335
        %v1945 = vpack.c.b16 %v1944, %v1944
        %1946 = vrot.lane.b32.xlu0 %v1945, 96
        %v1947 = vpop.permute.xlu0 %1946
        %v1949 = vsel %vm1347, %v1335, 0
        %v1952 = vsel %vm1347, %v1947, 0
        %1954 = vmatpush.bf16.xpose.msra.mxu0 0
        %1955 = vmatpush.bf16.xpose.msra.mxu0 0
        %1956 = vmatpush.bf16.xpose.msra.mxu0 0
        %1957 = vmatpush.bf16.xpose.msra.mxu0 0
        %1958 = vmatpush.bf16.xpose.msra.mxu0 0
        %1959 = vmatpush.bf16.xpose.msra.mxu0 0
        %1960 = vmatpush.bf16.xpose.msra.mxu0 0
        %1961 = vmatpush.bf16.xpose.msra.mxu0 %v1952
        %1962 = vmatmul.bf16.gmra.mxu0 %v1949
        %v1963 = vpop.f32.mrf.mxu0
        %v1964 = vadd.f32 0.0, %v1963
        %v1965 = vpop.f32.mrf.mxu0
        %1966 = vdwg.mxu0
        %v1968 = vunpack.c.l.b16 %v1336
        %v1969 = vpack.c.b16 %v1968, %v1968
        %1970 = vrot.lane.b32.xlu0 %v1969, 96
        %v1971 = vpop.permute.xlu0 %1970
        %v1973 = vsel %vm1347, %v1336, 0
        %v1976 = vsel %vm1347, %v1971, 0
        %1978 = vmatpush.bf16.xpose.msra.mxu0 0
        %1979 = vmatpush.bf16.xpose.msra.mxu0 0
        %1980 = vmatpush.bf16.xpose.msra.mxu0 0
        %1981 = vmatpush.bf16.xpose.msra.mxu0 0
        %1982 = vmatpush.bf16.xpose.msra.mxu0 0
        %1983 = vmatpush.bf16.xpose.msra.mxu0 0
        %1984 = vmatpush.bf16.xpose.msra.mxu0 0
        %1985 = vmatpush.bf16.xpose.msra.mxu0 %v1976
        %1986 = vmatmul.bf16.gmra.mxu0 %v1973
        %v1987 = vpop.f32.mrf.mxu0
        %v1988 = vadd.f32 0.0, %v1987
        %v1989 = vpop.f32.mrf.mxu0
        %1990 = vdwg.mxu0
        %v1992 = vunpack.c.l.b16 %v1337
        %v1993 = vpack.c.b16 %v1992, %v1992
        %1994 = vrot.lane.b32.xlu0 %v1993, 96
        %v1995 = vpop.permute.xlu0 %1994
        %v1997 = vsel %vm1347, %v1337, 0
        %v2000 = vsel %vm1347, %v1995, 0
        %2002 = vmatpush.bf16.xpose.msra.mxu0 0
        %2003 = vmatpush.bf16.xpose.msra.mxu0 0
        %2004 = vmatpush.bf16.xpose.msra.mxu0 0
        %2005 = vmatpush.bf16.xpose.msra.mxu0 0
        %2006 = vmatpush.bf16.xpose.msra.mxu0 0
        %2007 = vmatpush.bf16.xpose.msra.mxu0 0
        %2008 = vmatpush.bf16.xpose.msra.mxu0 0
        %2009 = vmatpush.bf16.xpose.msra.mxu0 %v2000
        %2010 = vmatmul.bf16.gmra.mxu0 %v1997
        %v2011 = vpop.f32.mrf.mxu0
        %v2012 = vadd.f32 0.0, %v2011
        %v2013 = vpop.f32.mrf.mxu0
        %2014 = vdwg.mxu0
        %v2016 = vunpack.c.l.b16 %v1338
        %v2017 = vpack.c.b16 %v2016, %v2016
        %2018 = vrot.lane.b32.xlu0 %v2017, 96
        %v2019 = vpop.permute.xlu0 %2018
        %v2021 = vsel %vm1347, %v1338, 0
        %v2024 = vsel %vm1347, %v2019, 0
        %2026 = vmatpush.bf16.xpose.msra.mxu0 0
        %2027 = vmatpush.bf16.xpose.msra.mxu0 0
        %2028 = vmatpush.bf16.xpose.msra.mxu0 0
        %2029 = vmatpush.bf16.xpose.msra.mxu0 0
        %2030 = vmatpush.bf16.xpose.msra.mxu0 0
        %2031 = vmatpush.bf16.xpose.msra.mxu0 0
        %2032 = vmatpush.bf16.xpose.msra.mxu0 0
        %2033 = vmatpush.bf16.xpose.msra.mxu0 %v2024
        %2034 = vmatmul.bf16.gmra.mxu0 %v2021
        %v2035 = vpop.f32.mrf.mxu0
        %v2036 = vadd.f32 0.0, %v2035
        %v2037 = vpop.f32.mrf.mxu0
        %2038 = vdwg.mxu0
        %v2040 = vunpack.c.l.b16 %v1339
        %v2041 = vpack.c.b16 %v2040, %v2040
        %2042 = vrot.lane.b32.xlu0 %v2041, 96
        %v2043 = vpop.permute.xlu0 %2042
        %v2045 = vsel %vm1347, %v1339, 0
        %v2048 = vsel %vm1347, %v2043, 0
        %2050 = vmatpush.bf16.xpose.msra.mxu0 0
        %2051 = vmatpush.bf16.xpose.msra.mxu0 0
        %2052 = vmatpush.bf16.xpose.msra.mxu0 0
        %2053 = vmatpush.bf16.xpose.msra.mxu0 0
        %2054 = vmatpush.bf16.xpose.msra.mxu0 0
        %2055 = vmatpush.bf16.xpose.msra.mxu0 0
        %2056 = vmatpush.bf16.xpose.msra.mxu0 0
        %2057 = vmatpush.bf16.xpose.msra.mxu0 %v2048
        %2058 = vmatmul.bf16.gmra.mxu0 %v2045
        %v2059 = vpop.f32.mrf.mxu0
        %v2060 = vadd.f32 0.0, %v2059
        %v2061 = vpop.f32.mrf.mxu0
        %2062 = vdwg.mxu0
        %v2064 = vunpack.c.l.b16 %v1340
        %v2065 = vpack.c.b16 %v2064, %v2064
        %2066 = vrot.lane.b32.xlu0 %v2065, 96
        %v2067 = vpop.permute.xlu0 %2066
        %v2069 = vsel %vm1347, %v1340, 0
        %v2072 = vsel %vm1347, %v2067, 0
        %2074 = vmatpush.bf16.xpose.msra.mxu0 0
        %2075 = vmatpush.bf16.xpose.msra.mxu0 0
        %2076 = vmatpush.bf16.xpose.msra.mxu0 0
        %2077 = vmatpush.bf16.xpose.msra.mxu0 0
        %2078 = vmatpush.bf16.xpose.msra.mxu0 0
        %2079 = vmatpush.bf16.xpose.msra.mxu0 0
        %2080 = vmatpush.bf16.xpose.msra.mxu0 0
        %2081 = vmatpush.bf16.xpose.msra.mxu0 %v2072
        %2082 = vmatmul.bf16.gmra.mxu0 %v2069
        %v2083 = vpop.f32.mrf.mxu0
        %v2084 = vadd.f32 0.0, %v2083
        %v2085 = vpop.f32.mrf.mxu0
        %2086 = vdwg.mxu0
        %v2088 = vunpack.c.l.b16 %v1341
        %v2089 = vpack.c.b16 %v2088, %v2088
        %2090 = vrot.lane.b32.xlu0 %v2089, 96
        %v2091 = vpop.permute.xlu0 %2090
        %v2093 = vsel %vm1347, %v1341, 0
        %v2096 = vsel %vm1347, %v2091, 0
        %2098 = vmatpush.bf16.xpose.msra.mxu0 0
        %2099 = vmatpush.bf16.xpose.msra.mxu0 0
        %2100 = vmatpush.bf16.xpose.msra.mxu0 0
        %2101 = vmatpush.bf16.xpose.msra.mxu0 0
        %2102 = vmatpush.bf16.xpose.msra.mxu0 0
        %2103 = vmatpush.bf16.xpose.msra.mxu0 0
        %2104 = vmatpush.bf16.xpose.msra.mxu0 0
        %2105 = vmatpush.bf16.xpose.msra.mxu0 %v2096
        %2106 = vmatmul.bf16.gmra.mxu0 %v2093
        %v2107 = vpop.f32.mrf.mxu0
        %v2108 = vadd.f32 0.0, %v2107
        %v2109 = vpop.f32.mrf.mxu0
        %2110 = vdwg.mxu0
        %v2111 = vmul.f32 %v1364, 0.35355338
        %v2112 = vmul.f32 %v1388, 0.35355338
        %v2113 = vmul.f32 %v1412, 0.35355338
        %v2114 = vmul.f32 %v1436, 0.35355338
        %v2115 = vmul.f32 %v1460, 0.35355338
        %v2116 = vmul.f32 %v1484, 0.35355338
        %v2117 = vmul.f32 %v1508, 0.35355338
        %v2118 = vmul.f32 %v1532, 0.35355338
        %v2119 = vmul.f32 %v1556, 0.35355338
        %v2120 = vmul.f32 %v1580, 0.35355338
        %v2121 = vmul.f32 %v1604, 0.35355338
        %v2122 = vmul.f32 %v1628, 0.35355338
        %v2123 = vmul.f32 %v1652, 0.35355338
        %v2124 = vmul.f32 %v1676, 0.35355338
        %v2125 = vmul.f32 %v1700, 0.35355338
        %v2126 = vmul.f32 %v1724, 0.35355338
        %v2127 = vmul.f32 %v1748, 0.35355338
        %v2128 = vmul.f32 %v1772, 0.35355338
        %v2129 = vmul.f32 %v1796, 0.35355338
        %v2130 = vmul.f32 %v1820, 0.35355338
        %v2131 = vmul.f32 %v1844, 0.35355338
        %v2132 = vmul.f32 %v1868, 0.35355338
        %v2133 = vmul.f32 %v1892, 0.35355338
        %v2134 = vmul.f32 %v1916, 0.35355338
        %v2135 = vmul.f32 %v1940, 0.35355338
        %v2136 = vmul.f32 %v1964, 0.35355338
        %v2137 = vmul.f32 %v1988, 0.35355338
        %v2138 = vmul.f32 %v2012, 0.35355338
        %v2139 = vmul.f32 %v2036, 0.35355338
        %v2140 = vmul.f32 %v2060, 0.35355338
        %v2141 = vmul.f32 %v2084, 0.35355338
        %v2142 = vmul.f32 %v2108, 0.35355338
        %v2143 = vlaneseq
        %v2144 = vand.u32 %v2143, 127
        %vm2145 = vcmp.lt.s32.totalorder %v2144, 5
        %v2146 = vsel %vm2145, %v2111, -1e+30
        %v2147 = vsel %vm2145, %v2112, -1e+30
        %v2148 = vsel %vm2145, %v2113, -1e+30
        %v2149 = vsel %vm2145, %v2114, -1e+30
        %v2150 = vsel %vm2145, %v2115, -1e+30
        %v2151 = vsel %vm2145, %v2116, -1e+30
        %v2152 = vsel %vm2145, %v2117, -1e+30
        %v2153 = vsel %vm2145, %v2118, -1e+30
        %v2154 = vsel %vm2145, %v2119, -1e+30
        %v2155 = vsel %vm2145, %v2120, -1e+30
        %v2156 = vsel %vm2145, %v2121, -1e+30
        %v2157 = vsel %vm2145, %v2122, -1e+30
        %v2158 = vsel %vm2145, %v2123, -1e+30
        %v2159 = vsel %vm2145, %v2124, -1e+30
        %v2160 = vsel %vm2145, %v2125, -1e+30
        %v2161 = vsel %vm2145, %v2126, -1e+30
        %v2162 = vsel %vm2145, %v2127, -1e+30
        %v2163 = vsel %vm2145, %v2128, -1e+30
        %v2164 = vsel %vm2145, %v2129, -1e+30
        %v2165 = vsel %vm2145, %v2130, -1e+30
        %v2166 = vsel %vm2145, %v2131, -1e+30
        %v2167 = vsel %vm2145, %v2132, -1e+30
        %v2168 = vsel %vm2145, %v2133, -1e+30
        %v2169 = vsel %vm2145, %v2134, -1e+30
        %v2170 = vsel %vm2145, %v2135, -1e+30
        %v2171 = vsel %vm2145, %v2136, -1e+30
        %v2172 = vsel %vm2145, %v2137, -1e+30
        %v2173 = vsel %vm2145, %v2138, -1e+30
        %v2174 = vsel %vm2145, %v2139, -1e+30
        %v2175 = vsel %vm2145, %v2140, -1e+30
        %v2176 = vsel %vm2145, %v2141, -1e+30
        %v2177 = vsel %vm2145, %v2142, -1e+30
        %v2178 = vsel %vm1347, %v2146, -inf
        %2179 = vmax.xlane.f32.xlu0 %v2178
        %v2180 = vpop.xlane.xlu0 %2179
        %v2181 = vsel %vm1347, %v2147, -inf
        %2182 = vmax.xlane.f32.xlu0 %v2181
        %v2183 = vpop.xlane.xlu0 %2182
        %v2184 = vsel %vm1347, %v2148, -inf
        %2185 = vmax.xlane.f32.xlu0 %v2184
        %v2186 = vpop.xlane.xlu0 %2185
        %v2187 = vsel %vm1347, %v2149, -inf
        %2188 = vmax.xlane.f32.xlu0 %v2187
        %v2189 = vpop.xlane.xlu0 %2188
        %v2190 = vsel %vm1347, %v2150, -inf
        %2191 = vmax.xlane.f32.xlu0 %v2190
        %v2192 = vpop.xlane.xlu0 %2191
        %v2193 = vsel %vm1347, %v2151, -inf
        %2194 = vmax.xlane.f32.xlu0 %v2193
        %v2195 = vpop.xlane.xlu0 %2194
        %v2196 = vsel %vm1347, %v2152, -inf
        %2197 = vmax.xlane.f32.xlu0 %v2196
        %v2198 = vpop.xlane.xlu0 %2197
        %v2199 = vsel %vm1347, %v2153, -inf
        %2200 = vmax.xlane.f32.xlu0 %v2199
        %v2201 = vpop.xlane.xlu0 %2200
        %v2202 = vsel %vm1347, %v2154, -inf
        %2203 = vmax.xlane.f32.xlu0 %v2202
        %v2204 = vpop.xlane.xlu0 %2203
        %v2205 = vsel %vm1347, %v2155, -inf
        %2206 = vmax.xlane.f32.xlu0 %v2205
        %v2207 = vpop.xlane.xlu0 %2206
        %v2208 = vsel %vm1347, %v2156, -inf
        %2209 = vmax.xlane.f32.xlu0 %v2208
        %v2210 = vpop.xlane.xlu0 %2209
        %v2211 = vsel %vm1347, %v2157, -inf
        %2212 = vmax.xlane.f32.xlu0 %v2211
        %v2213 = vpop.xlane.xlu0 %2212
        %v2214 = vsel %vm1347, %v2158, -inf
        %2215 = vmax.xlane.f32.xlu0 %v2214
        %v2216 = vpop.xlane.xlu0 %2215
        %v2217 = vsel %vm1347, %v2159, -inf
        %2218 = vmax.xlane.f32.xlu0 %v2217
        %v2219 = vpop.xlane.xlu0 %2218
        %v2220 = vsel %vm1347, %v2160, -inf
        %2221 = vmax.xlane.f32.xlu0 %v2220
        %v2222 = vpop.xlane.xlu0 %2221
        %v2223 = vsel %vm1347, %v2161, -inf
        %2224 = vmax.xlane.f32.xlu0 %v2223
        %v2225 = vpop.xlane.xlu0 %2224
        %v2226 = vsel %vm1347, %v2162, -inf
        %2227 = vmax.xlane.f32.xlu0 %v2226
        %v2228 = vpop.xlane.xlu0 %2227
        %v2229 = vsel %vm1347, %v2163, -inf
        %2230 = vmax.xlane.f32.xlu0 %v2229
        %v2231 = vpop.xlane.xlu0 %2230
        %v2232 = vsel %vm1347, %v2164, -inf
        %2233 = vmax.xlane.f32.xlu0 %v2232
        %v2234 = vpop.xlane.xlu0 %2233
        %v2235 = vsel %vm1347, %v2165, -inf
        %2236 = vmax.xlane.f32.xlu0 %v2235
        %v2237 = vpop.xlane.xlu0 %2236
        %v2238 = vsel %vm1347, %v2166, -inf
        %2239 = vmax.xlane.f32.xlu0 %v2238
        %v2240 = vpop.xlane.xlu0 %2239
        %v2241 = vsel %vm1347, %v2167, -inf
        %2242 = vmax.xlane.f32.xlu0 %v2241
        %v2243 = vpop.xlane.xlu0 %2242
        %v2244 = vsel %vm1347, %v2168, -inf
        %2245 = vmax.xlane.f32.xlu0 %v2244
        %v2246 = vpop.xlane.xlu0 %2245
        %v2247 = vsel %vm1347, %v2169, -inf
        %2248 = vmax.xlane.f32.xlu0 %v2247
        %v2249 = vpop.xlane.xlu0 %2248
        %v2250 = vsel %vm1347, %v2170, -inf
        %2251 = vmax.xlane.f32.xlu0 %v2250
        %v2252 = vpop.xlane.xlu0 %2251
        %v2253 = vsel %vm1347, %v2171, -inf
        %2254 = vmax.xlane.f32.xlu0 %v2253
        %v2255 = vpop.xlane.xlu0 %2254
        %v2256 = vsel %vm1347, %v2172, -inf
        %2257 = vmax.xlane.f32.xlu0 %v2256
        %v2258 = vpop.xlane.xlu0 %2257
        %v2259 = vsel %vm1347, %v2173, -inf
        %2260 = vmax.xlane.f32.xlu0 %v2259
        %v2261 = vpop.xlane.xlu0 %2260
        %v2262 = vsel %vm1347, %v2174, -inf
        %2263 = vmax.xlane.f32.xlu0 %v2262
        %v2264 = vpop.xlane.xlu0 %2263
        %v2265 = vsel %vm1347, %v2175, -inf
        %2266 = vmax.xlane.f32.xlu0 %v2265
        %v2267 = vpop.xlane.xlu0 %2266
        %v2268 = vsel %vm1347, %v2176, -inf
        %2269 = vmax.xlane.f32.xlu0 %v2268
        %v2270 = vpop.xlane.xlu0 %2269
        %v2271 = vsel %vm1347, %v2177, -inf
        %2272 = vmax.xlane.f32.xlu0 %v2271
        %v2273 = vpop.xlane.xlu0 %2272
        %v2274 = vsub.f32 %v2146, %v2180
        %v2275 = vsub.f32 %v2147, %v2183
        %v2276 = vsub.f32 %v2148, %v2186
        %v2277 = vsub.f32 %v2149, %v2189
        %v2278 = vsub.f32 %v2150, %v2192
        %v2279 = vsub.f32 %v2151, %v2195
        %v2280 = vsub.f32 %v2152, %v2198
        %v2281 = vsub.f32 %v2153, %v2201
        %v2282 = vsub.f32 %v2154, %v2204
        %v2283 = vsub.f32 %v2155, %v2207
        %v2284 = vsub.f32 %v2156, %v2210
        %v2285 = vsub.f32 %v2157, %v2213
        %v2286 = vsub.f32 %v2158, %v2216
        %v2287 = vsub.f32 %v2159, %v2219
        %v2288 = vsub.f32 %v2160, %v2222
        %v2289 = vsub.f32 %v2161, %v2225
        %v2290 = vsub.f32 %v2162, %v2228
        %v2291 = vsub.f32 %v2163, %v2231
        %v2292 = vsub.f32 %v2164, %v2234
        %v2293 = vsub.f32 %v2165, %v2237
        %v2294 = vsub.f32 %v2166, %v2240
        %v2295 = vsub.f32 %v2167, %v2243
        %v2296 = vsub.f32 %v2168, %v2246
        %v2297 = vsub.f32 %v2169, %v2249
        %v2298 = vsub.f32 %v2170, %v2252
        %v2299 = vsub.f32 %v2171, %v2255
        %v2300 = vsub.f32 %v2172, %v2258
        %v2301 = vsub.f32 %v2173, %v2261
        %v2302 = vsub.f32 %v2174, %v2264
        %v2303 = vsub.f32 %v2175, %v2267
        %v2304 = vsub.f32 %v2176, %v2270
        %v2305 = vsub.f32 %v2177, %v2273
        %v2306 = vmul.f32 %v2274, 1.442695
        %v2307 = vpow.pop %v2306
        %v2308 = vmul.f32 %v2275, 1.442695
        %v2309 = vpow.pop %v2308
        %v2310 = vmul.f32 %v2276, 1.442695
        %v2311 = vpow.pop %v2310
        %v2312 = vmul.f32 %v2277, 1.442695
        %v2313 = vpow.pop %v2312
        %v2314 = vmul.f32 %v2278, 1.442695
        %v2315 = vpow.pop %v2314
        %v2316 = vmul.f32 %v2279, 1.442695
        %v2317 = vpow.pop %v2316
        %v2318 = vmul.f32 %v2280, 1.442695
        %v2319 = vpow.pop %v2318
        %v2320 = vmul.f32 %v2281, 1.442695
        %v2321 = vpow.pop %v2320
        %v2322 = vmul.f32 %v2282, 1.442695
        %v2323 = vpow.pop %v2322
        %v2324 = vmul.f32 %v2283, 1.442695
        %v2325 = vpow.pop %v2324
        %v2326 = vmul.f32 %v2284, 1.442695
        %v2327 = vpow.pop %v2326
        %v2328 = vmul.f32 %v2285, 1.442695
        %v2329 = vpow.pop %v2328
        %v2330 = vmul.f32 %v2286, 1.442695
        %v2331 = vpow.pop %v2330
        %v2332 = vmul.f32 %v2287, 1.442695
        %v2333 = vpow.pop %v2332
        %v2334 = vmul.f32 %v2288, 1.442695
        %v2335 = vpow.pop %v2334
        %v2336 = vmul.f32 %v2289, 1.442695
        %v2337 = vpow.pop %v2336
        %v2338 = vmul.f32 %v2290, 1.442695
        %v2339 = vpow.pop %v2338
        %v2340 = vmul.f32 %v2291, 1.442695
        %v2341 = vpow.pop %v2340
        %v2342 = vmul.f32 %v2292, 1.442695
        %v2343 = vpow.pop %v2342
        %v2344 = vmul.f32 %v2293, 1.442695
        %v2345 = vpow.pop %v2344
        %v2346 = vmul.f32 %v2294, 1.442695
        %v2347 = vpow.pop %v2346
        %v2348 = vmul.f32 %v2295, 1.442695
        %v2349 = vpow.pop %v2348
        %v2350 = vmul.f32 %v2296, 1.442695
        %v2351 = vpow.pop %v2350
        %v2352 = vmul.f32 %v2297, 1.442695
        %v2353 = vpow.pop %v2352
        %v2354 = vmul.f32 %v2298, 1.442695
        %v2355 = vpow.pop %v2354
        %v2356 = vmul.f32 %v2299, 1.442695
        %v2357 = vpow.pop %v2356
        %v2358 = vmul.f32 %v2300, 1.442695
        %v2359 = vpow.pop %v2358
        %v2360 = vmul.f32 %v2301, 1.442695
        %v2361 = vpow.pop %v2360
        %v2362 = vmul.f32 %v2302, 1.442695
        %v2363 = vpow.pop %v2362
        %v2364 = vmul.f32 %v2303, 1.442695
        %v2365 = vpow.pop %v2364
        %v2366 = vmul.f32 %v2304, 1.442695
        %v2367 = vpow.pop %v2366
        %v2368 = vmul.f32 %v2305, 1.442695
        %v2369 = vpow.pop %v2368
        %v2370 = vsel %vm1347, %v2307, 0.0
        %2371 = vadd.xlane.f32.xlu0 %v2370
        %v2372 = vpop.xlane.xlu0 %2371
        %v2373 = vsel %vm1347, %v2309, 0.0
        %2374 = vadd.xlane.f32.xlu0 %v2373
        %v2375 = vpop.xlane.xlu0 %2374
        %v2376 = vsel %vm1347, %v2311, 0.0
        %2377 = vadd.xlane.f32.xlu0 %v2376
        %v2378 = vpop.xlane.xlu0 %2377
        %v2379 = vsel %vm1347, %v2313, 0.0
        %2380 = vadd.xlane.f32.xlu0 %v2379
        %v2381 = vpop.xlane.xlu0 %2380
        %v2382 = vsel %vm1347, %v2315, 0.0
        %2383 = vadd.xlane.f32.xlu0 %v2382
        %v2384 = vpop.xlane.xlu0 %2383
        %v2385 = vsel %vm1347, %v2317, 0.0
        %2386 = vadd.xlane.f32.xlu0 %v2385
        %v2387 = vpop.xlane.xlu0 %2386
        %v2388 = vsel %vm1347, %v2319, 0.0
        %2389 = vadd.xlane.f32.xlu0 %v2388
        %v2390 = vpop.xlane.xlu0 %2389
        %v2391 = vsel %vm1347, %v2321, 0.0
        %2392 = vadd.xlane.f32.xlu0 %v2391
        %v2393 = vpop.xlane.xlu0 %2392
        %v2394 = vsel %vm1347, %v2323, 0.0
        %2395 = vadd.xlane.f32.xlu0 %v2394
        %v2396 = vpop.xlane.xlu0 %2395
        %v2397 = vsel %vm1347, %v2325, 0.0
        %2398 = vadd.xlane.f32.xlu0 %v2397
        %v2399 = vpop.xlane.xlu0 %2398
        %v2400 = vsel %vm1347, %v2327, 0.0
        %2401 = vadd.xlane.f32.xlu0 %v2400
        %v2402 = vpop.xlane.xlu0 %2401
        %v2403 = vsel %vm1347, %v2329, 0.0
        %2404 = vadd.xlane.f32.xlu0 %v2403
        %v2405 = vpop.xlane.xlu0 %2404
        %v2406 = vsel %vm1347, %v2331, 0.0
        %2407 = vadd.xlane.f32.xlu0 %v2406
        %v2408 = vpop.xlane.xlu0 %2407
        %v2409 = vsel %vm1347, %v2333, 0.0
        %2410 = vadd.xlane.f32.xlu0 %v2409
        %v2411 = vpop.xlane.xlu0 %2410
        %v2412 = vsel %vm1347, %v2335, 0.0
        %2413 = vadd.xlane.f32.xlu0 %v2412
        %v2414 = vpop.xlane.xlu0 %2413
        %v2415 = vsel %vm1347, %v2337, 0.0
        %2416 = vadd.xlane.f32.xlu0 %v2415
        %v2417 = vpop.xlane.xlu0 %2416
        %v2418 = vsel %vm1347, %v2339, 0.0
        %2419 = vadd.xlane.f32.xlu0 %v2418
        %v2420 = vpop.xlane.xlu0 %2419
        %v2421 = vsel %vm1347, %v2341, 0.0
        %2422 = vadd.xlane.f32.xlu0 %v2421
        %v2423 = vpop.xlane.xlu0 %2422
        %v2424 = vsel %vm1347, %v2343, 0.0
        %2425 = vadd.xlane.f32.xlu0 %v2424
        %v2426 = vpop.xlane.xlu0 %2425
        %v2427 = vsel %vm1347, %v2345, 0.0
        %2428 = vadd.xlane.f32.xlu0 %v2427
        %v2429 = vpop.xlane.xlu0 %2428
        %v2430 = vsel %vm1347, %v2347, 0.0
        %2431 = vadd.xlane.f32.xlu0 %v2430
        %v2432 = vpop.xlane.xlu0 %2431
        %v2433 = vsel %vm1347, %v2349, 0.0
        %2434 = vadd.xlane.f32.xlu0 %v2433
        %v2435 = vpop.xlane.xlu0 %2434
        %v2436 = vsel %vm1347, %v2351, 0.0
        %2437 = vadd.xlane.f32.xlu0 %v2436
        %v2438 = vpop.xlane.xlu0 %2437
        %v2439 = vsel %vm1347, %v2353, 0.0
        %2440 = vadd.xlane.f32.xlu0 %v2439
        %v2441 = vpop.xlane.xlu0 %2440
        %v2442 = vsel %vm1347, %v2355, 0.0
        %2443 = vadd.xlane.f32.xlu0 %v2442
        %v2444 = vpop.xlane.xlu0 %2443
        %v2445 = vsel %vm1347, %v2357, 0.0
        %2446 = vadd.xlane.f32.xlu0 %v2445
        %v2447 = vpop.xlane.xlu0 %2446
        %v2448 = vsel %vm1347, %v2359, 0.0
        %2449 = vadd.xlane.f32.xlu0 %v2448
        %v2450 = vpop.xlane.xlu0 %2449
        %v2451 = vsel %vm1347, %v2361, 0.0
        %2452 = vadd.xlane.f32.xlu0 %v2451
        %v2453 = vpop.xlane.xlu0 %2452
        %v2454 = vsel %vm1347, %v2363, 0.0
        %2455 = vadd.xlane.f32.xlu0 %v2454
        %v2456 = vpop.xlane.xlu0 %2455
        %v2457 = vsel %vm1347, %v2365, 0.0
        %2458 = vadd.xlane.f32.xlu0 %v2457
        %v2459 = vpop.xlane.xlu0 %2458
        %v2460 = vsel %vm1347, %v2367, 0.0
        %2461 = vadd.xlane.f32.xlu0 %v2460
        %v2462 = vpop.xlane.xlu0 %2461
        %v2463 = vsel %vm1347, %v2369, 0.0
        %2464 = vadd.xlane.f32.xlu0 %v2463
        %v2465 = vpop.xlane.xlu0 %2464
        %v2466 = vrcp.pop %v2372
        %v2467 = vrcp.pop %v2375
        %v2468 = vrcp.pop %v2378
        %v2469 = vrcp.pop %v2381
        %v2470 = vrcp.pop %v2384
        %v2471 = vrcp.pop %v2387
        %v2472 = vrcp.pop %v2390
        %v2473 = vrcp.pop %v2393
        %v2474 = vrcp.pop %v2396
        %v2475 = vrcp.pop %v2399
        %v2476 = vrcp.pop %v2402
        %v2477 = vrcp.pop %v2405
        %v2478 = vrcp.pop %v2408
        %v2479 = vrcp.pop %v2411
        %v2480 = vrcp.pop %v2414
        %v2481 = vrcp.pop %v2417
        %v2482 = vrcp.pop %v2420
        %v2483 = vrcp.pop %v2423
        %v2484 = vrcp.pop %v2426
        %v2485 = vrcp.pop %v2429
        %v2486 = vrcp.pop %v2432
        %v2487 = vrcp.pop %v2435
        %v2488 = vrcp.pop %v2438
        %v2489 = vrcp.pop %v2441
        %v2490 = vrcp.pop %v2444
        %v2491 = vrcp.pop %v2447
        %v2492 = vrcp.pop %v2450
        %v2493 = vrcp.pop %v2453
        %v2494 = vrcp.pop %v2456
        %v2495 = vrcp.pop %v2459
        %v2496 = vrcp.pop %v2462
        %v2497 = vrcp.pop %v2465
        %v2498 = vmul.f32 %v2307, %v2466
        %v2499 = vmul.f32 %v2309, %v2467
        %v2500 = vmul.f32 %v2311, %v2468
        %v2501 = vmul.f32 %v2313, %v2469
        %v2502 = vmul.f32 %v2315, %v2470
        %v2503 = vmul.f32 %v2317, %v2471
        %v2504 = vmul.f32 %v2319, %v2472
        %v2505 = vmul.f32 %v2321, %v2473
        %v2506 = vmul.f32 %v2323, %v2474
        %v2507 = vmul.f32 %v2325, %v2475
        %v2508 = vmul.f32 %v2327, %v2476
        %v2509 = vmul.f32 %v2329, %v2477
        %v2510 = vmul.f32 %v2331, %v2478
        %v2511 = vmul.f32 %v2333, %v2479
        %v2512 = vmul.f32 %v2335, %v2480
        %v2513 = vmul.f32 %v2337, %v2481
        %v2514 = vmul.f32 %v2339, %v2482
        %v2515 = vmul.f32 %v2341, %v2483
        %v2516 = vmul.f32 %v2343, %v2484
        %v2517 = vmul.f32 %v2345, %v2485
        %v2518 = vmul.f32 %v2347, %v2486
        %v2519 = vmul.f32 %v2349, %v2487
        %v2520 = vmul.f32 %v2351, %v2488
        %v2521 = vmul.f32 %v2353, %v2489
        %v2522 = vmul.f32 %v2355, %v2490
        %v2523 = vmul.f32 %v2357, %v2491
        %v2524 = vmul.f32 %v2359, %v2492
        %v2525 = vmul.f32 %v2361, %v2493
        %v2526 = vmul.f32 %v2363, %v2494
        %v2527 = vmul.f32 %v2365, %v2495
        %v2528 = vmul.f32 %v2367, %v2496
        %v2529 = vmul.f32 %v2369, %v2497
        %v2530 = vpack.c.bf16 %v2498, %v2498
        %v2531 = vpack.c.bf16 %v2499, %v2499
        %v2532 = vpack.c.bf16 %v2500, %v2500
        %v2533 = vpack.c.bf16 %v2501, %v2501
        %v2534 = vpack.c.bf16 %v2502, %v2502
        %v2535 = vpack.c.bf16 %v2503, %v2503
        %v2536 = vpack.c.bf16 %v2504, %v2504
        %v2537 = vpack.c.bf16 %v2505, %v2505
        %v2538 = vpack.c.bf16 %v2506, %v2506
        %v2539 = vpack.c.bf16 %v2507, %v2507
        %v2540 = vpack.c.bf16 %v2508, %v2508
        %v2541 = vpack.c.bf16 %v2509, %v2509
        %v2542 = vpack.c.bf16 %v2510, %v2510
        %v2543 = vpack.c.bf16 %v2511, %v2511
        %v2544 = vpack.c.bf16 %v2512, %v2512
        %v2545 = vpack.c.bf16 %v2513, %v2513
        %v2546 = vpack.c.bf16 %v2514, %v2514
        %v2547 = vpack.c.bf16 %v2515, %v2515
        %v2548 = vpack.c.bf16 %v2516, %v2516
        %v2549 = vpack.c.bf16 %v2517, %v2517
        %v2550 = vpack.c.bf16 %v2518, %v2518
        %v2551 = vpack.c.bf16 %v2519, %v2519
        %v2552 = vpack.c.bf16 %v2520, %v2520
        %v2553 = vpack.c.bf16 %v2521, %v2521
        %v2554 = vpack.c.bf16 %v2522, %v2522
        %v2555 = vpack.c.bf16 %v2523, %v2523
        %v2556 = vpack.c.bf16 %v2524, %v2524
        %v2557 = vpack.c.bf16 %v2525, %v2525
        %v2558 = vpack.c.bf16 %v2526, %v2526
        %v2559 = vpack.c.bf16 %v2527, %v2527
        %v2560 = vpack.c.bf16 %v2528, %v2528
        %v2561 = vpack.c.bf16 %v2529, %v2529
        %2562 = vrot.lane.b32.xlu0 %v1344, 64
        %v2563 = vpop.permute.xlu0 %2562
        %v2565 = vsel %vm1347, %v2530, 0
        %vm2567 = vcmask 1043456
        %v2569 = vsel %vm2567, %v2563, 0
        %2571 = vmatpush.bf16.msra.mxu0 0
        %2572 = vmatpush.bf16.msra.mxu0 0
        %2573 = vmatpush.bf16.msra.mxu0 0
        %2574 = vmatpush.bf16.msra.mxu0 0
        %2575 = vmatpush.bf16.msra.mxu0 0
        %2576 = vmatpush.bf16.msra.mxu0 0
        %2577 = vmatpush.bf16.msra.mxu0 0
        %2578 = vmatpush.bf16.msra.mxu0 %v2569
        %2579 = vmatmul.bf16.gmra.mxu0 %v2565
        %v2580 = vpop.f32.mrf.mxu0
        %v2581 = vadd.f32 0.0, %v2580
        %v2582 = vpop.f32.mrf.mxu0
        %2583 = vdwg.mxu0
        %2584 = vrot.lane.b32.xlu0 %v1369, 64
        %v2585 = vpop.permute.xlu0 %2584
        %v2587 = vsel %vm1347, %v2531, 0
        %v2590 = vsel %vm2567, %v2585, 0
        %2592 = vmatpush.bf16.msra.mxu0 0
        %2593 = vmatpush.bf16.msra.mxu0 0
        %2594 = vmatpush.bf16.msra.mxu0 0
        %2595 = vmatpush.bf16.msra.mxu0 0
        %2596 = vmatpush.bf16.msra.mxu0 0
        %2597 = vmatpush.bf16.msra.mxu0 0
        %2598 = vmatpush.bf16.msra.mxu0 0
        %2599 = vmatpush.bf16.msra.mxu0 %v2590
        %2600 = vmatmul.bf16.gmra.mxu0 %v2587
        %v2601 = vpop.f32.mrf.mxu0
        %v2602 = vadd.f32 0.0, %v2601
        %v2603 = vpop.f32.mrf.mxu0
        %2604 = vdwg.mxu0
        %2605 = vrot.lane.b32.xlu0 %v1393, 64
        %v2606 = vpop.permute.xlu0 %2605
        %v2608 = vsel %vm1347, %v2532, 0
        %v2611 = vsel %vm2567, %v2606, 0
        %2613 = vmatpush.bf16.msra.mxu0 0
        %2614 = vmatpush.bf16.msra.mxu0 0
        %2615 = vmatpush.bf16.msra.mxu0 0
        %2616 = vmatpush.bf16.msra.mxu0 0
        %2617 = vmatpush.bf16.msra.mxu0 0
        %2618 = vmatpush.bf16.msra.mxu0 0
        %2619 = vmatpush.bf16.msra.mxu0 0
        %2620 = vmatpush.bf16.msra.mxu0 %v2611
        %2621 = vmatmul.bf16.gmra.mxu0 %v2608
        %v2622 = vpop.f32.mrf.mxu0
        %v2623 = vadd.f32 0.0, %v2622
        %v2624 = vpop.f32.mrf.mxu0
        %2625 = vdwg.mxu0
        %2626 = vrot.lane.b32.xlu0 %v1417, 64
        %v2627 = vpop.permute.xlu0 %2626
        %v2629 = vsel %vm1347, %v2533, 0
        %v2632 = vsel %vm2567, %v2627, 0
        %2634 = vmatpush.bf16.msra.mxu0 0
        %2635 = vmatpush.bf16.msra.mxu0 0
        %2636 = vmatpush.bf16.msra.mxu0 0
        %2637 = vmatpush.bf16.msra.mxu0 0
        %2638 = vmatpush.bf16.msra.mxu0 0
        %2639 = vmatpush.bf16.msra.mxu0 0
        %2640 = vmatpush.bf16.msra.mxu0 0
        %2641 = vmatpush.bf16.msra.mxu0 %v2632
        %2642 = vmatmul.bf16.gmra.mxu0 %v2629
        %v2643 = vpop.f32.mrf.mxu0
        %v2644 = vadd.f32 0.0, %v2643
        %v2645 = vpop.f32.mrf.mxu0
        %2646 = vdwg.mxu0
        %2647 = vrot.lane.b32.xlu0 %v1441, 64
        %v2648 = vpop.permute.xlu0 %2647
        %v2650 = vsel %vm1347, %v2534, 0
        %v2653 = vsel %vm2567, %v2648, 0
        %2655 = vmatpush.bf16.msra.mxu0 0
        %2656 = vmatpush.bf16.msra.mxu0 0
        %2657 = vmatpush.bf16.msra.mxu0 0
        %2658 = vmatpush.bf16.msra.mxu0 0
        %2659 = vmatpush.bf16.msra.mxu0 0
        %2660 = vmatpush.bf16.msra.mxu0 0
        %2661 = vmatpush.bf16.msra.mxu0 0
        %2662 = vmatpush.bf16.msra.mxu0 %v2653
        %2663 = vmatmul.bf16.gmra.mxu0 %v2650
        %v2664 = vpop.f32.mrf.mxu0
        %v2665 = vadd.f32 0.0, %v2664
        %v2666 = vpop.f32.mrf.mxu0
        %2667 = vdwg.mxu0
        %2668 = vrot.lane.b32.xlu0 %v1465, 64
        %v2669 = vpop.permute.xlu0 %2668
        %v2671 = vsel %vm1347, %v2535, 0
        %v2674 = vsel %vm2567, %v2669, 0
        %2676 = vmatpush.bf16.msra.mxu0 0
        %2677 = vmatpush.bf16.msra.mxu0 0
        %2678 = vmatpush.bf16.msra.mxu0 0
        %2679 = vmatpush.bf16.msra.mxu0 0
        %2680 = vmatpush.bf16.msra.mxu0 0
        %2681 = vmatpush.bf16.msra.mxu0 0
        %2682 = vmatpush.bf16.msra.mxu0 0
        %2683 = vmatpush.bf16.msra.mxu0 %v2674
        %2684 = vmatmul.bf16.gmra.mxu0 %v2671
        %v2685 = vpop.f32.mrf.mxu0
        %v2686 = vadd.f32 0.0, %v2685
        %v2687 = vpop.f32.mrf.mxu0
        %2688 = vdwg.mxu0
        %2689 = vrot.lane.b32.xlu0 %v1489, 64
        %v2690 = vpop.permute.xlu0 %2689
        %v2692 = vsel %vm1347, %v2536, 0
        %v2695 = vsel %vm2567, %v2690, 0
        %2697 = vmatpush.bf16.msra.mxu0 0
        %2698 = vmatpush.bf16.msra.mxu0 0
        %2699 = vmatpush.bf16.msra.mxu0 0
        %2700 = vmatpush.bf16.msra.mxu0 0
        %2701 = vmatpush.bf16.msra.mxu0 0
        %2702 = vmatpush.bf16.msra.mxu0 0
        %2703 = vmatpush.bf16.msra.mxu0 0
        %2704 = vmatpush.bf16.msra.mxu0 %v2695
        %2705 = vmatmul.bf16.gmra.mxu0 %v2692
        %v2706 = vpop.f32.mrf.mxu0
        %v2707 = vadd.f32 0.0, %v2706
        %v2708 = vpop.f32.mrf.mxu0
        %2709 = vdwg.mxu0
        %2710 = vrot.lane.b32.xlu0 %v1513, 64
        %v2711 = vpop.permute.xlu0 %2710
        %v2713 = vsel %vm1347, %v2537, 0
        %v2716 = vsel %vm2567, %v2711, 0
        %2718 = vmatpush.bf16.msra.mxu0 0
        %2719 = vmatpush.bf16.msra.mxu0 0
        %2720 = vmatpush.bf16.msra.mxu0 0
        %2721 = vmatpush.bf16.msra.mxu0 0
        %2722 = vmatpush.bf16.msra.mxu0 0
        %2723 = vmatpush.bf16.msra.mxu0 0
        %2724 = vmatpush.bf16.msra.mxu0 0
        %2725 = vmatpush.bf16.msra.mxu0 %v2716
        %2726 = vmatmul.bf16.gmra.mxu0 %v2713
        %v2727 = vpop.f32.mrf.mxu0
        %v2728 = vadd.f32 0.0, %v2727
        %v2729 = vpop.f32.mrf.mxu0
        %2730 = vdwg.mxu0
        %2731 = vrot.lane.b32.xlu0 %v1537, 64
        %v2732 = vpop.permute.xlu0 %2731
        %v2734 = vsel %vm1347, %v2538, 0
        %v2737 = vsel %vm2567, %v2732, 0
        %2739 = vmatpush.bf16.msra.mxu0 0
        %2740 = vmatpush.bf16.msra.mxu0 0
        %2741 = vmatpush.bf16.msra.mxu0 0
        %2742 = vmatpush.bf16.msra.mxu0 0
        %2743 = vmatpush.bf16.msra.mxu0 0
        %2744 = vmatpush.bf16.msra.mxu0 0
        %2745 = vmatpush.bf16.msra.mxu0 0
        %2746 = vmatpush.bf16.msra.mxu0 %v2737
        %2747 = vmatmul.bf16.gmra.mxu0 %v2734
        %v2748 = vpop.f32.mrf.mxu0
        %v2749 = vadd.f32 0.0, %v2748
        %v2750 = vpop.f32.mrf.mxu0
        %2751 = vdwg.mxu0
        %2752 = vrot.lane.b32.xlu0 %v1561, 64
        %v2753 = vpop.permute.xlu0 %2752
        %v2755 = vsel %vm1347, %v2539, 0
        %v2758 = vsel %vm2567, %v2753, 0
        %2760 = vmatpush.bf16.msra.mxu0 0
        %2761 = vmatpush.bf16.msra.mxu0 0
        %2762 = vmatpush.bf16.msra.mxu0 0
        %2763 = vmatpush.bf16.msra.mxu0 0
        %2764 = vmatpush.bf16.msra.mxu0 0
        %2765 = vmatpush.bf16.msra.mxu0 0
        %2766 = vmatpush.bf16.msra.mxu0 0
        %2767 = vmatpush.bf16.msra.mxu0 %v2758
        %2768 = vmatmul.bf16.gmra.mxu0 %v2755
        %v2769 = vpop.f32.mrf.mxu0
        %v2770 = vadd.f32 0.0, %v2769
        %v2771 = vpop.f32.mrf.mxu0
        %2772 = vdwg.mxu0
        %2773 = vrot.lane.b32.xlu0 %v1585, 64
        %v2774 = vpop.permute.xlu0 %2773
        %v2776 = vsel %vm1347, %v2540, 0
        %v2779 = vsel %vm2567, %v2774, 0
        %2781 = vmatpush.bf16.msra.mxu0 0
        %2782 = vmatpush.bf16.msra.mxu0 0
        %2783 = vmatpush.bf16.msra.mxu0 0
        %2784 = vmatpush.bf16.msra.mxu0 0
        %2785 = vmatpush.bf16.msra.mxu0 0
        %2786 = vmatpush.bf16.msra.mxu0 0
        %2787 = vmatpush.bf16.msra.mxu0 0
        %2788 = vmatpush.bf16.msra.mxu0 %v2779
        %2789 = vmatmul.bf16.gmra.mxu0 %v2776
        %v2790 = vpop.f32.mrf.mxu0
        %v2791 = vadd.f32 0.0, %v2790
        %v2792 = vpop.f32.mrf.mxu0
        %2793 = vdwg.mxu0
        %2794 = vrot.lane.b32.xlu0 %v1609, 64
        %v2795 = vpop.permute.xlu0 %2794
        %v2797 = vsel %vm1347, %v2541, 0
        %v2800 = vsel %vm2567, %v2795, 0
        %2802 = vmatpush.bf16.msra.mxu0 0
        %2803 = vmatpush.bf16.msra.mxu0 0
        %2804 = vmatpush.bf16.msra.mxu0 0
        %2805 = vmatpush.bf16.msra.mxu0 0
        %2806 = vmatpush.bf16.msra.mxu0 0
        %2807 = vmatpush.bf16.msra.mxu0 0
        %2808 = vmatpush.bf16.msra.mxu0 0
        %2809 = vmatpush.bf16.msra.mxu0 %v2800
        %2810 = vmatmul.bf16.gmra.mxu0 %v2797
        %v2811 = vpop.f32.mrf.mxu0
        %v2812 = vadd.f32 0.0, %v2811
        %v2813 = vpop.f32.mrf.mxu0
        %2814 = vdwg.mxu0
        %2815 = vrot.lane.b32.xlu0 %v1633, 64
        %v2816 = vpop.permute.xlu0 %2815
        %v2818 = vsel %vm1347, %v2542, 0
        %v2821 = vsel %vm2567, %v2816, 0
        %2823 = vmatpush.bf16.msra.mxu0 0
        %2824 = vmatpush.bf16.msra.mxu0 0
        %2825 = vmatpush.bf16.msra.mxu0 0
        %2826 = vmatpush.bf16.msra.mxu0 0
        %2827 = vmatpush.bf16.msra.mxu0 0
        %2828 = vmatpush.bf16.msra.mxu0 0
        %2829 = vmatpush.bf16.msra.mxu0 0
        %2830 = vmatpush.bf16.msra.mxu0 %v2821
        %2831 = vmatmul.bf16.gmra.mxu0 %v2818
        %v2832 = vpop.f32.mrf.mxu0
        %v2833 = vadd.f32 0.0, %v2832
        %v2834 = vpop.f32.mrf.mxu0
        %2835 = vdwg.mxu0
        %2836 = vrot.lane.b32.xlu0 %v1657, 64
        %v2837 = vpop.permute.xlu0 %2836
        %v2839 = vsel %vm1347, %v2543, 0
        %v2842 = vsel %vm2567, %v2837, 0
        %2844 = vmatpush.bf16.msra.mxu0 0
        %2845 = vmatpush.bf16.msra.mxu0 0
        %2846 = vmatpush.bf16.msra.mxu0 0
        %2847 = vmatpush.bf16.msra.mxu0 0
        %2848 = vmatpush.bf16.msra.mxu0 0
        %2849 = vmatpush.bf16.msra.mxu0 0
        %2850 = vmatpush.bf16.msra.mxu0 0
        %2851 = vmatpush.bf16.msra.mxu0 %v2842
        %2852 = vmatmul.bf16.gmra.mxu0 %v2839
        %v2853 = vpop.f32.mrf.mxu0
        %v2854 = vadd.f32 0.0, %v2853
        %v2855 = vpop.f32.mrf.mxu0
        %2856 = vdwg.mxu0
        %2857 = vrot.lane.b32.xlu0 %v1681, 64
        %v2858 = vpop.permute.xlu0 %2857
        %v2860 = vsel %vm1347, %v2544, 0
        %v2863 = vsel %vm2567, %v2858, 0
        %2865 = vmatpush.bf16.msra.mxu0 0
        %2866 = vmatpush.bf16.msra.mxu0 0
        %2867 = vmatpush.bf16.msra.mxu0 0
        %2868 = vmatpush.bf16.msra.mxu0 0
        %2869 = vmatpush.bf16.msra.mxu0 0
        %2870 = vmatpush.bf16.msra.mxu0 0
        %2871 = vmatpush.bf16.msra.mxu0 0
        %2872 = vmatpush.bf16.msra.mxu0 %v2863
        %2873 = vmatmul.bf16.gmra.mxu0 %v2860
        %v2874 = vpop.f32.mrf.mxu0
        %v2875 = vadd.f32 0.0, %v2874
        %v2876 = vpop.f32.mrf.mxu0
        %2877 = vdwg.mxu0
        %2878 = vrot.lane.b32.xlu0 %v1705, 64
        %v2879 = vpop.permute.xlu0 %2878
        %v2881 = vsel %vm1347, %v2545, 0
        %v2884 = vsel %vm2567, %v2879, 0
        %2886 = vmatpush.bf16.msra.mxu0 0
        %2887 = vmatpush.bf16.msra.mxu0 0
        %2888 = vmatpush.bf16.msra.mxu0 0
        %2889 = vmatpush.bf16.msra.mxu0 0
        %2890 = vmatpush.bf16.msra.mxu0 0
        %2891 = vmatpush.bf16.msra.mxu0 0
        %2892 = vmatpush.bf16.msra.mxu0 0
        %2893 = vmatpush.bf16.msra.mxu0 %v2884
        %2894 = vmatmul.bf16.gmra.mxu0 %v2881
        %v2895 = vpop.f32.mrf.mxu0
        %v2896 = vadd.f32 0.0, %v2895
        %v2897 = vpop.f32.mrf.mxu0
        %2898 = vdwg.mxu0
        %2899 = vrot.lane.b32.xlu0 %v1729, 64
        %v2900 = vpop.permute.xlu0 %2899
        %v2902 = vsel %vm1347, %v2546, 0
        %v2905 = vsel %vm2567, %v2900, 0
        %2907 = vmatpush.bf16.msra.mxu0 0
        %2908 = vmatpush.bf16.msra.mxu0 0
        %2909 = vmatpush.bf16.msra.mxu0 0
        %2910 = vmatpush.bf16.msra.mxu0 0
        %2911 = vmatpush.bf16.msra.mxu0 0
        %2912 = vmatpush.bf16.msra.mxu0 0
        %2913 = vmatpush.bf16.msra.mxu0 0
        %2914 = vmatpush.bf16.msra.mxu0 %v2905
        %2915 = vmatmul.bf16.gmra.mxu0 %v2902
        %v2916 = vpop.f32.mrf.mxu0
        %v2917 = vadd.f32 0.0, %v2916
        %v2918 = vpop.f32.mrf.mxu0
        %2919 = vdwg.mxu0
        %2920 = vrot.lane.b32.xlu0 %v1753, 64
        %v2921 = vpop.permute.xlu0 %2920
        %v2923 = vsel %vm1347, %v2547, 0
        %v2926 = vsel %vm2567, %v2921, 0
        %2928 = vmatpush.bf16.msra.mxu0 0
        %2929 = vmatpush.bf16.msra.mxu0 0
        %2930 = vmatpush.bf16.msra.mxu0 0
        %2931 = vmatpush.bf16.msra.mxu0 0
        %2932 = vmatpush.bf16.msra.mxu0 0
        %2933 = vmatpush.bf16.msra.mxu0 0
        %2934 = vmatpush.bf16.msra.mxu0 0
        %2935 = vmatpush.bf16.msra.mxu0 %v2926
        %2936 = vmatmul.bf16.gmra.mxu0 %v2923
        %v2937 = vpop.f32.mrf.mxu0
        %v2938 = vadd.f32 0.0, %v2937
        %v2939 = vpop.f32.mrf.mxu0
        %2940 = vdwg.mxu0
        %2941 = vrot.lane.b32.xlu0 %v1777, 64
        %v2942 = vpop.permute.xlu0 %2941
        %v2944 = vsel %vm1347, %v2548, 0
        %v2947 = vsel %vm2567, %v2942, 0
        %2949 = vmatpush.bf16.msra.mxu0 0
        %2950 = vmatpush.bf16.msra.mxu0 0
        %2951 = vmatpush.bf16.msra.mxu0 0
        %2952 = vmatpush.bf16.msra.mxu0 0
        %2953 = vmatpush.bf16.msra.mxu0 0
        %2954 = vmatpush.bf16.msra.mxu0 0
        %2955 = vmatpush.bf16.msra.mxu0 0
        %2956 = vmatpush.bf16.msra.mxu0 %v2947
        %2957 = vmatmul.bf16.gmra.mxu0 %v2944
        %v2958 = vpop.f32.mrf.mxu0
        %v2959 = vadd.f32 0.0, %v2958
        %v2960 = vpop.f32.mrf.mxu0
        %2961 = vdwg.mxu0
        %2962 = vrot.lane.b32.xlu0 %v1801, 64
        %v2963 = vpop.permute.xlu0 %2962
        %v2965 = vsel %vm1347, %v2549, 0
        %v2968 = vsel %vm2567, %v2963, 0
        %2970 = vmatpush.bf16.msra.mxu0 0
        %2971 = vmatpush.bf16.msra.mxu0 0
        %2972 = vmatpush.bf16.msra.mxu0 0
        %2973 = vmatpush.bf16.msra.mxu0 0
        %2974 = vmatpush.bf16.msra.mxu0 0
        %2975 = vmatpush.bf16.msra.mxu0 0
        %2976 = vmatpush.bf16.msra.mxu0 0
        %2977 = vmatpush.bf16.msra.mxu0 %v2968
        %2978 = vmatmul.bf16.gmra.mxu0 %v2965
        %v2979 = vpop.f32.mrf.mxu0
        %v2980 = vadd.f32 0.0, %v2979
        %v2981 = vpop.f32.mrf.mxu0
        %2982 = vdwg.mxu0
        %2983 = vrot.lane.b32.xlu0 %v1825, 64
        %v2984 = vpop.permute.xlu0 %2983
        %v2986 = vsel %vm1347, %v2550, 0
        %v2989 = vsel %vm2567, %v2984, 0
        %2991 = vmatpush.bf16.msra.mxu0 0
        %2992 = vmatpush.bf16.msra.mxu0 0
        %2993 = vmatpush.bf16.msra.mxu0 0
        %2994 = vmatpush.bf16.msra.mxu0 0
        %2995 = vmatpush.bf16.msra.mxu0 0
        %2996 = vmatpush.bf16.msra.mxu0 0
        %2997 = vmatpush.bf16.msra.mxu0 0
        %2998 = vmatpush.bf16.msra.mxu0 %v2989
        %2999 = vmatmul.bf16.gmra.mxu0 %v2986
        %v3000 = vpop.f32.mrf.mxu0
        %v3001 = vadd.f32 0.0, %v3000
        %v3002 = vpop.f32.mrf.mxu0
        %3003 = vdwg.mxu0
        %3004 = vrot.lane.b32.xlu0 %v1849, 64
        %v3005 = vpop.permute.xlu0 %3004
        %v3007 = vsel %vm1347, %v2551, 0
        %v3010 = vsel %vm2567, %v3005, 0
        %3012 = vmatpush.bf16.msra.mxu0 0
        %3013 = vmatpush.bf16.msra.mxu0 0
        %3014 = vmatpush.bf16.msra.mxu0 0
        %3015 = vmatpush.bf16.msra.mxu0 0
        %3016 = vmatpush.bf16.msra.mxu0 0
        %3017 = vmatpush.bf16.msra.mxu0 0
        %3018 = vmatpush.bf16.msra.mxu0 0
        %3019 = vmatpush.bf16.msra.mxu0 %v3010
        %3020 = vmatmul.bf16.gmra.mxu0 %v3007
        %v3021 = vpop.f32.mrf.mxu0
        %v3022 = vadd.f32 0.0, %v3021
        %v3023 = vpop.f32.mrf.mxu0
        %3024 = vdwg.mxu0
        %3025 = vrot.lane.b32.xlu0 %v1873, 64
        %v3026 = vpop.permute.xlu0 %3025
        %v3028 = vsel %vm1347, %v2552, 0
        %v3031 = vsel %vm2567, %v3026, 0
        %3033 = vmatpush.bf16.msra.mxu0 0
        %3034 = vmatpush.bf16.msra.mxu0 0
        %3035 = vmatpush.bf16.msra.mxu0 0
        %3036 = vmatpush.bf16.msra.mxu0 0
        %3037 = vmatpush.bf16.msra.mxu0 0
        %3038 = vmatpush.bf16.msra.mxu0 0
        %3039 = vmatpush.bf16.msra.mxu0 0
        %3040 = vmatpush.bf16.msra.mxu0 %v3031
        %3041 = vmatmul.bf16.gmra.mxu0 %v3028
        %v3042 = vpop.f32.mrf.mxu0
        %v3043 = vadd.f32 0.0, %v3042
        %v3044 = vpop.f32.mrf.mxu0
        %3045 = vdwg.mxu0
        %3046 = vrot.lane.b32.xlu0 %v1897, 64
        %v3047 = vpop.permute.xlu0 %3046
        %v3049 = vsel %vm1347, %v2553, 0
        %v3052 = vsel %vm2567, %v3047, 0
        %3054 = vmatpush.bf16.msra.mxu0 0
        %3055 = vmatpush.bf16.msra.mxu0 0
        %3056 = vmatpush.bf16.msra.mxu0 0
        %3057 = vmatpush.bf16.msra.mxu0 0
        %3058 = vmatpush.bf16.msra.mxu0 0
        %3059 = vmatpush.bf16.msra.mxu0 0
        %3060 = vmatpush.bf16.msra.mxu0 0
        %3061 = vmatpush.bf16.msra.mxu0 %v3052
        %3062 = vmatmul.bf16.gmra.mxu0 %v3049
        %v3063 = vpop.f32.mrf.mxu0
        %v3064 = vadd.f32 0.0, %v3063
        %v3065 = vpop.f32.mrf.mxu0
        %3066 = vdwg.mxu0
        %3067 = vrot.lane.b32.xlu0 %v1921, 64
        %v3068 = vpop.permute.xlu0 %3067
        %v3070 = vsel %vm1347, %v2554, 0
        %v3073 = vsel %vm2567, %v3068, 0
        %3075 = vmatpush.bf16.msra.mxu0 0
        %3076 = vmatpush.bf16.msra.mxu0 0
        %3077 = vmatpush.bf16.msra.mxu0 0
        %3078 = vmatpush.bf16.msra.mxu0 0
        %3079 = vmatpush.bf16.msra.mxu0 0
        %3080 = vmatpush.bf16.msra.mxu0 0
        %3081 = vmatpush.bf16.msra.mxu0 0
        %3082 = vmatpush.bf16.msra.mxu0 %v3073
        %3083 = vmatmul.bf16.gmra.mxu0 %v3070
        %v3084 = vpop.f32.mrf.mxu0
        %v3085 = vadd.f32 0.0, %v3084
        %v3086 = vpop.f32.mrf.mxu0
        %3087 = vdwg.mxu0
        %3088 = vrot.lane.b32.xlu0 %v1945, 64
        %v3089 = vpop.permute.xlu0 %3088
        %v3091 = vsel %vm1347, %v2555, 0
        %v3094 = vsel %vm2567, %v3089, 0
        %3096 = vmatpush.bf16.msra.mxu0 0
        %3097 = vmatpush.bf16.msra.mxu0 0
        %3098 = vmatpush.bf16.msra.mxu0 0
        %3099 = vmatpush.bf16.msra.mxu0 0
        %3100 = vmatpush.bf16.msra.mxu0 0
        %3101 = vmatpush.bf16.msra.mxu0 0
        %3102 = vmatpush.bf16.msra.mxu0 0
        %3103 = vmatpush.bf16.msra.mxu0 %v3094
        %3104 = vmatmul.bf16.gmra.mxu0 %v3091
        %v3105 = vpop.f32.mrf.mxu0
        %v3106 = vadd.f32 0.0, %v3105
        %v3107 = vpop.f32.mrf.mxu0
        %3108 = vdwg.mxu0
        %3109 = vrot.lane.b32.xlu0 %v1969, 64
        %v3110 = vpop.permute.xlu0 %3109
        %v3112 = vsel %vm1347, %v2556, 0
        %v3115 = vsel %vm2567, %v3110, 0
        %3117 = vmatpush.bf16.msra.mxu0 0
        %3118 = vmatpush.bf16.msra.mxu0 0
        %3119 = vmatpush.bf16.msra.mxu0 0
        %3120 = vmatpush.bf16.msra.mxu0 0
        %3121 = vmatpush.bf16.msra.mxu0 0
        %3122 = vmatpush.bf16.msra.mxu0 0
        %3123 = vmatpush.bf16.msra.mxu0 0
        %3124 = vmatpush.bf16.msra.mxu0 %v3115
        %3125 = vmatmul.bf16.gmra.mxu0 %v3112
        %v3126 = vpop.f32.mrf.mxu0
        %v3127 = vadd.f32 0.0, %v3126
        %v3128 = vpop.f32.mrf.mxu0
        %3129 = vdwg.mxu0
        %3130 = vrot.lane.b32.xlu0 %v1993, 64
        %v3131 = vpop.permute.xlu0 %3130
        %v3133 = vsel %vm1347, %v2557, 0
        %v3136 = vsel %vm2567, %v3131, 0
        %3138 = vmatpush.bf16.msra.mxu0 0
        %3139 = vmatpush.bf16.msra.mxu0 0
        %3140 = vmatpush.bf16.msra.mxu0 0
        %3141 = vmatpush.bf16.msra.mxu0 0
        %3142 = vmatpush.bf16.msra.mxu0 0
        %3143 = vmatpush.bf16.msra.mxu0 0
        %3144 = vmatpush.bf16.msra.mxu0 0
        %3145 = vmatpush.bf16.msra.mxu0 %v3136
        %3146 = vmatmul.bf16.gmra.mxu0 %v3133
        %v3147 = vpop.f32.mrf.mxu0
        %v3148 = vadd.f32 0.0, %v3147
        %v3149 = vpop.f32.mrf.mxu0
        %3150 = vdwg.mxu0
        %3151 = vrot.lane.b32.xlu0 %v2017, 64
        %v3152 = vpop.permute.xlu0 %3151
        %v3154 = vsel %vm1347, %v2558, 0
        %v3157 = vsel %vm2567, %v3152, 0
        %3159 = vmatpush.bf16.msra.mxu0 0
        %3160 = vmatpush.bf16.msra.mxu0 0
        %3161 = vmatpush.bf16.msra.mxu0 0
        %3162 = vmatpush.bf16.msra.mxu0 0
        %3163 = vmatpush.bf16.msra.mxu0 0
        %3164 = vmatpush.bf16.msra.mxu0 0
        %3165 = vmatpush.bf16.msra.mxu0 0
        %3166 = vmatpush.bf16.msra.mxu0 %v3157
        %3167 = vmatmul.bf16.gmra.mxu0 %v3154
        %v3168 = vpop.f32.mrf.mxu0
        %v3169 = vadd.f32 0.0, %v3168
        %v3170 = vpop.f32.mrf.mxu0
        %3171 = vdwg.mxu0
        %3172 = vrot.lane.b32.xlu0 %v2041, 64
        %v3173 = vpop.permute.xlu0 %3172
        %v3175 = vsel %vm1347, %v2559, 0
        %v3178 = vsel %vm2567, %v3173, 0
        %3180 = vmatpush.bf16.msra.mxu0 0
        %3181 = vmatpush.bf16.msra.mxu0 0
        %3182 = vmatpush.bf16.msra.mxu0 0
        %3183 = vmatpush.bf16.msra.mxu0 0
        %3184 = vmatpush.bf16.msra.mxu0 0
        %3185 = vmatpush.bf16.msra.mxu0 0
        %3186 = vmatpush.bf16.msra.mxu0 0
        %3187 = vmatpush.bf16.msra.mxu0 %v3178
        %3188 = vmatmul.bf16.gmra.mxu0 %v3175
        %v3189 = vpop.f32.mrf.mxu0
        %v3190 = vadd.f32 0.0, %v3189
        %v3191 = vpop.f32.mrf.mxu0
        %3192 = vdwg.mxu0
        %3193 = vrot.lane.b32.xlu0 %v2065, 64
        %v3194 = vpop.permute.xlu0 %3193
        %v3196 = vsel %vm1347, %v2560, 0
        %v3199 = vsel %vm2567, %v3194, 0
        %3201 = vmatpush.bf16.msra.mxu0 0
        %3202 = vmatpush.bf16.msra.mxu0 0
        %3203 = vmatpush.bf16.msra.mxu0 0
        %3204 = vmatpush.bf16.msra.mxu0 0
        %3205 = vmatpush.bf16.msra.mxu0 0
        %3206 = vmatpush.bf16.msra.mxu0 0
        %3207 = vmatpush.bf16.msra.mxu0 0
        %3208 = vmatpush.bf16.msra.mxu0 %v3199
        %3209 = vmatmul.bf16.gmra.mxu0 %v3196
        %v3210 = vpop.f32.mrf.mxu0
        %v3211 = vadd.f32 0.0, %v3210
        %v3212 = vpop.f32.mrf.mxu0
        %3213 = vdwg.mxu0
        %3214 = vrot.lane.b32.xlu0 %v2089, 64
        %v3215 = vpop.permute.xlu0 %3214
        %v3217 = vsel %vm1347, %v2561, 0
        %v3220 = vsel %vm2567, %v3215, 0
        %3222 = vmatpush.bf16.msra.mxu0 0
        %3223 = vmatpush.bf16.msra.mxu0 0
        %3224 = vmatpush.bf16.msra.mxu0 0
        %3225 = vmatpush.bf16.msra.mxu0 0
        %3226 = vmatpush.bf16.msra.mxu0 0
        %3227 = vmatpush.bf16.msra.mxu0 0
        %3228 = vmatpush.bf16.msra.mxu0 0
        %3229 = vmatpush.bf16.msra.mxu0 %v3220
        %3230 = vmatmul.bf16.gmra.mxu0 %v3217
        %v3231 = vpop.f32.mrf.mxu0
        %v3232 = vadd.f32 0.0, %v3231
        %v3233 = vpop.f32.mrf.mxu0
        %3234 = vdwg.mxu0
        %3243 = vrot.lane.b32.xlu0 %v2749, 8
        %v3244 = vpop.permute.xlu0 %3243
        %3245 = vrot.lane.b32.xlu0 %v2770, 8
        %v3246 = vpop.permute.xlu0 %3245
        %3247 = vrot.lane.b32.xlu0 %v2791, 8
        %v3248 = vpop.permute.xlu0 %3247
        %3249 = vrot.lane.b32.xlu0 %v2812, 8
        %v3250 = vpop.permute.xlu0 %3249
        %3251 = vrot.lane.b32.xlu0 %v2833, 8
        %v3252 = vpop.permute.xlu0 %3251
        %3253 = vrot.lane.b32.xlu0 %v2854, 8
        %v3254 = vpop.permute.xlu0 %3253
        %3255 = vrot.lane.b32.xlu0 %v2875, 8
        %v3256 = vpop.permute.xlu0 %3255
        %3257 = vrot.lane.b32.xlu0 %v2896, 8
        %v3258 = vpop.permute.xlu0 %3257
        %3275 = vrot.lane.b32.xlu0 %v2917, 16
        %v3276 = vpop.permute.xlu0 %3275
        %3277 = vrot.lane.b32.xlu0 %v2938, 16
        %v3278 = vpop.permute.xlu0 %3277
        %3279 = vrot.lane.b32.xlu0 %v2959, 16
        %v3280 = vpop.permute.xlu0 %3279
        %3281 = vrot.lane.b32.xlu0 %v2980, 16
        %v3282 = vpop.permute.xlu0 %3281
        %3283 = vrot.lane.b32.xlu0 %v3001, 16
        %v3284 = vpop.permute.xlu0 %3283
        %3285 = vrot.lane.b32.xlu0 %v3022, 16
        %v3286 = vpop.permute.xlu0 %3285
        %3287 = vrot.lane.b32.xlu0 %v3043, 16
        %v3288 = vpop.permute.xlu0 %3287
        %3289 = vrot.lane.b32.xlu0 %v3064, 16
        %v3290 = vpop.permute.xlu0 %3289
        %3307 = vrot.lane.b32.xlu0 %v3085, 24
        %v3308 = vpop.permute.xlu0 %3307
        %3309 = vrot.lane.b32.xlu0 %v3106, 24
        %v3310 = vpop.permute.xlu0 %3309
        %3311 = vrot.lane.b32.xlu0 %v3127, 24
        %v3312 = vpop.permute.xlu0 %3311
        %3313 = vrot.lane.b32.xlu0 %v3148, 24
        %v3314 = vpop.permute.xlu0 %3313
        %3315 = vrot.lane.b32.xlu0 %v3169, 24
        %v3316 = vpop.permute.xlu0 %3315
        %3317 = vrot.lane.b32.xlu0 %v3190, 24
        %v3318 = vpop.permute.xlu0 %3317
        %3319 = vrot.lane.b32.xlu0 %v3211, 24
        %v3320 = vpop.permute.xlu0 %3319
        %3321 = vrot.lane.b32.xlu0 %v3232, 24
        %v3322 = vpop.permute.xlu0 %3321
        %v3331 = vsel %vm1347, %v2581, %v3244
        %v3332 = vsel %vm1347, %v2602, %v3246
        %v3333 = vsel %vm1347, %v2623, %v3248
        %v3334 = vsel %vm1347, %v2644, %v3250
        %v3335 = vsel %vm1347, %v2665, %v3252
        %v3336 = vsel %vm1347, %v2686, %v3254
        %v3337 = vsel %vm1347, %v2707, %v3256
        %v3338 = vsel %vm1347, %v2728, %v3258
        %vm3339 = vcmask 130048
        %v3340 = vsel %vm3339, %v3331, %v3276
        %v3341 = vsel %vm3339, %v3332, %v3278
        %v3342 = vsel %vm3339, %v3333, %v3280
        %v3343 = vsel %vm3339, %v3334, %v3282
        %v3344 = vsel %vm3339, %v3335, %v3284
        %v3345 = vsel %vm3339, %v3336, %v3286
        %v3346 = vsel %vm3339, %v3337, %v3288
        %v3347 = vsel %vm3339, %v3338, %v3290
        %vm3348 = vcmask 195584
        %v3349 = vsel %vm3348, %v3340, %v3308
        %v3350 = vsel %vm3348, %v3341, %v3310
        %v3351 = vsel %vm3348, %v3342, %v3312
        %v3352 = vsel %vm3348, %v3343, %v3314
        %v3353 = vsel %vm3348, %v3344, %v3316
        %v3354 = vsel %vm3348, %v3345, %v3318
        %v3355 = vsel %vm3348, %v3346, %v3320
        %v3356 = vsel %vm3348, %v3347, %v3322
        %v3357 = vpack.c.bf16 %v3350, %v3349
        %v3358 = vpack.c.bf16 %v3352, %v3351
        %v3359 = vpack.c.bf16 %v3354, %v3353
        %v3360 = vpack.c.bf16 %v3356, %v3355
        %v3361 = vld [vmem:[%s888] sm:$0xf]
        %v3362 = vld [vmem:[%s888 + $0x4] sm:$0xf]
        %v3363 = vld [vmem:[%s888 + $0x8] sm:$0xf]
        %v3364 = vld [vmem:[%s888 + $0xc] sm:$0xf]
        %v3365 = vld [vmem:[%s733] sm:$0x1]
        %v3367 = vperm.slane %v3365, 0
        %v3373 = vunpack.c.l.b16 %v3361
        %v3374 = vunpack.c.l.b16 %v3362
        %v3375 = vunpack.c.l.b16 %v3363
        %v3376 = vunpack.c.l.b16 %v3364
        %v3377 = vpack.c.b16 %v3374, %v3373
        %v3378 = vpack.c.b16 %v3376, %v3375
        %v3382 = vsel %vm931, %v3357, 0
        %v3385 = vsel %vm931, %v3358, 0
        %v3388 = vsel %vm931, %v3359, 0
        %v3391 = vsel %vm931, %v3360, 0
        %3393 = vmatpush.bf16.msra.mxu0 0
        %3394 = vmatpush.bf16.msra.mxu0 0
        %3395 = vmatpush.bf16.msra.mxu0 0
        %3396 = vmatpush.bf16.msra.mxu0 0
        %3397 = vmatpush.bf16.msra.mxu0 0
        %3398 = vmatpush.bf16.msra.mxu0 0
        %3399 = vmatpush.bf16.msra.mxu0 %v3378
        %3400 = vmatpush.bf16.msra.mxu0 %v3377
        %3401 = vmatmul.bf16.gmra.mxu0 %v3382
        %v3402 = vpop.f32.mrf.mxu0
        %v3403 = vadd.f32 %v3367, %v3402
        %v3404 = vpop.f32.mrf.mxu0
        %v3405 = vadd.f32 %v3367, %v3404
        %3406 = vmatmul.bf16.gmra.mxu0 %v3385
        %v3407 = vpop.f32.mrf.mxu0
        %v3408 = vadd.f32 %v3367, %v3407
        %v3409 = vpop.f32.mrf.mxu0
        %v3410 = vadd.f32 %v3367, %v3409
        %3411 = vmatmul.bf16.gmra.mxu0 %v3388
        %v3412 = vpop.f32.mrf.mxu0
        %v3413 = vadd.f32 %v3367, %v3412
        %v3414 = vpop.f32.mrf.mxu0
        %v3415 = vadd.f32 %v3367, %v3414
        %3416 = vmatmul.bf16.gmra.mxu0 %v3391
        %v3417 = vpop.f32.mrf.mxu0
        %v3418 = vadd.f32 %v3367, %v3417
        %v3419 = vpop.f32.mrf.mxu0
        %v3420 = vadd.f32 %v3367, %v3419
        %3421 = vdwg.mxu0
        %v3422 = vadd.f32 %v921, %v3403
        %v3423 = vadd.f32 %v922, %v3405
        %v3424 = vadd.f32 %v923, %v3408
        %v3425 = vadd.f32 %v924, %v3410
        %v3426 = vadd.f32 %v925, %v3413
        %v3427 = vadd.f32 %v926, %v3415
        %v3428 = vadd.f32 %v927, %v3418
        %v3429 = vadd.f32 %v928, %v3420
        %v3430 = vld [vmem:[%s742] sm:$0x1]
        %v3431 = vld [vmem:[%s751] sm:$0x1]
        %v3432 = vsel %vm931, %v3422, 0.0
        %3433 = vadd.xlane.f32.xlu0 %v3432
        %v3434 = vpop.xlane.xlu0 %3433
        %v3435 = vsel %vm931, %v3423, 0.0
        %3436 = vadd.xlane.f32.xlu0 %v3435
        %v3437 = vpop.xlane.xlu0 %3436
        %v3438 = vsel %vm931, %v3424, 0.0
        %3439 = vadd.xlane.f32.xlu0 %v3438
        %v3440 = vpop.xlane.xlu0 %3439
        %v3441 = vsel %vm931, %v3425, 0.0
        %3442 = vadd.xlane.f32.xlu0 %v3441
        %v3443 = vpop.xlane.xlu0 %3442
        %v3444 = vsel %vm931, %v3426, 0.0
        %3445 = vadd.xlane.f32.xlu0 %v3444
        %v3446 = vpop.xlane.xlu0 %3445
        %v3447 = vsel %vm931, %v3427, 0.0
        %3448 = vadd.xlane.f32.xlu0 %v3447
        %v3449 = vpop.xlane.xlu0 %3448
        %v3450 = vsel %vm931, %v3428, 0.0
        %3451 = vadd.xlane.f32.xlu0 %v3450
        %v3452 = vpop.xlane.xlu0 %3451
        %v3453 = vsel %vm931, %v3429, 0.0
        %3454 = vadd.xlane.f32.xlu0 %v3453
        %v3455 = vpop.xlane.xlu0 %3454
        %v3456 = vmul.f32 %v3434, %v962
        %v3457 = vmul.f32 %v3437, %v962
        %v3458 = vmul.f32 %v3440, %v962
        %v3459 = vmul.f32 %v3443, %v962
        %v3460 = vmul.f32 %v3446, %v962
        %v3461 = vmul.f32 %v3449, %v962
        %v3462 = vmul.f32 %v3452, %v962
        %v3463 = vmul.f32 %v3455, %v962
        %v3464 = vsub.f32 %v3422, %v3456
        %v3465 = vsub.f32 %v3423, %v3457
        %v3466 = vsub.f32 %v3424, %v3458
        %v3467 = vsub.f32 %v3425, %v3459
        %v3468 = vsub.f32 %v3426, %v3460
        %v3469 = vsub.f32 %v3427, %v3461
        %v3470 = vsub.f32 %v3428, %v3462
        %v3471 = vsub.f32 %v3429, %v3463
        %v3472 = vmul.f32 %v3464, %v3464
        %v3473 = vmul.f32 %v3465, %v3465
        %v3474 = vmul.f32 %v3466, %v3466
        %v3475 = vmul.f32 %v3467, %v3467
        %v3476 = vmul.f32 %v3468, %v3468
        %v3477 = vmul.f32 %v3469, %v3469
        %v3478 = vmul.f32 %v3470, %v3470
        %v3479 = vmul.f32 %v3471, %v3471
        %v3480 = vsel %vm931, %v3472, 0.0
        %3481 = vadd.xlane.f32.xlu0 %v3480
        %v3482 = vpop.xlane.xlu0 %3481
        %v3483 = vsel %vm931, %v3473, 0.0
        %3484 = vadd.xlane.f32.xlu0 %v3483
        %v3485 = vpop.xlane.xlu0 %3484
        %v3486 = vsel %vm931, %v3474, 0.0
        %3487 = vadd.xlane.f32.xlu0 %v3486
        %v3488 = vpop.xlane.xlu0 %3487
        %v3489 = vsel %vm931, %v3475, 0.0
        %3490 = vadd.xlane.f32.xlu0 %v3489
        %v3491 = vpop.xlane.xlu0 %3490
        %v3492 = vsel %vm931, %v3476, 0.0
        %3493 = vadd.xlane.f32.xlu0 %v3492
        %v3494 = vpop.xlane.xlu0 %3493
        %v3495 = vsel %vm931, %v3477, 0.0
        %3496 = vadd.xlane.f32.xlu0 %v3495
        %v3497 = vpop.xlane.xlu0 %3496
        %v3498 = vsel %vm931, %v3478, 0.0
        %3499 = vadd.xlane.f32.xlu0 %v3498
        %v3500 = vpop.xlane.xlu0 %3499
        %v3501 = vsel %vm931, %v3479, 0.0
        %3502 = vadd.xlane.f32.xlu0 %v3501
        %v3503 = vpop.xlane.xlu0 %3502
        %v3504 = vmul.f32 %v3482, %v962
        %v3505 = vmul.f32 %v3485, %v962
        %v3506 = vmul.f32 %v3488, %v962
        %v3507 = vmul.f32 %v3491, %v962
        %v3508 = vmul.f32 %v3494, %v962
        %v3509 = vmul.f32 %v3497, %v962
        %v3510 = vmul.f32 %v3500, %v962
        %v3511 = vmul.f32 %v3503, %v962
        %v3512 = vadd.f32 %v3504, 1e-05
        %v3513 = vadd.f32 %v3505, 1e-05
        %v3514 = vadd.f32 %v3506, 1e-05
        %v3515 = vadd.f32 %v3507, 1e-05
        %v3516 = vadd.f32 %v3508, 1e-05
        %v3517 = vadd.f32 %v3509, 1e-05
        %v3518 = vadd.f32 %v3510, 1e-05
        %v3519 = vadd.f32 %v3511, 1e-05
        %v3520 = vrsqrt.pop %v3512
        %v3521 = vmul.f32 %v3520, %v3512
        %v3522 = vmul.f32 %v3521, %v3520
        %v3523 = vmul.f32 0.5, %v3522
        %v3524 = vsub.f32 1.5, %v3523
        %v3525 = vmul.f32 %v3520, %v3524
        %vm3526 = vweird.f32 %v3512
        %vm3527 = vweird.f32 %v3520
        %vm3528 = vmor %vm3526, %vm3527
        %v3529 = vsel %vm3528, %v3520, %v3525
        %v3530 = vrsqrt.pop %v3513
        %v3531 = vmul.f32 %v3530, %v3513
        %v3532 = vmul.f32 %v3531, %v3530
        %v3533 = vmul.f32 0.5, %v3532
        %v3534 = vsub.f32 1.5, %v3533
        %v3535 = vmul.f32 %v3530, %v3534
        %vm3536 = vweird.f32 %v3513
        %vm3537 = vweird.f32 %v3530
        %vm3538 = vmor %vm3536, %vm3537
        %v3539 = vsel %vm3538, %v3530, %v3535
        %v3540 = vrsqrt.pop %v3514
        %v3541 = vmul.f32 %v3540, %v3514
        %v3542 = vmul.f32 %v3541, %v3540
        %v3543 = vmul.f32 0.5, %v3542
        %v3544 = vsub.f32 1.5, %v3543
        %v3545 = vmul.f32 %v3540, %v3544
        %vm3546 = vweird.f32 %v3514
        %vm3547 = vweird.f32 %v3540
        %vm3548 = vmor %vm3546, %vm3547
        %v3549 = vsel %vm3548, %v3540, %v3545
        %v3550 = vrsqrt.pop %v3515
        %v3551 = vmul.f32 %v3550, %v3515
        %v3552 = vmul.f32 %v3551, %v3550
        %v3553 = vmul.f32 0.5, %v3552
        %v3554 = vsub.f32 1.5, %v3553
        %v3555 = vmul.f32 %v3550, %v3554
        %vm3556 = vweird.f32 %v3515
        %vm3557 = vweird.f32 %v3550
        %vm3558 = vmor %vm3556, %vm3557
        %v3559 = vsel %vm3558, %v3550, %v3555
        %v3560 = vrsqrt.pop %v3516
        %v3561 = vmul.f32 %v3560, %v3516
        %v3562 = vmul.f32 %v3561, %v3560
        %v3563 = vmul.f32 0.5, %v3562
        %v3564 = vsub.f32 1.5, %v3563
        %v3565 = vmul.f32 %v3560, %v3564
        %vm3566 = vweird.f32 %v3516
        %vm3567 = vweird.f32 %v3560
        %vm3568 = vmor %vm3566, %vm3567
        %v3569 = vsel %vm3568, %v3560, %v3565
        %v3570 = vrsqrt.pop %v3517
        %v3571 = vmul.f32 %v3570, %v3517
        %v3572 = vmul.f32 %v3571, %v3570
        %v3573 = vmul.f32 0.5, %v3572
        %v3574 = vsub.f32 1.5, %v3573
        %v3575 = vmul.f32 %v3570, %v3574
        %vm3576 = vweird.f32 %v3517
        %vm3577 = vweird.f32 %v3570
        %vm3578 = vmor %vm3576, %vm3577
        %v3579 = vsel %vm3578, %v3570, %v3575
        %v3580 = vrsqrt.pop %v3518
        %v3581 = vmul.f32 %v3580, %v3518
        %v3582 = vmul.f32 %v3581, %v3580
        %v3583 = vmul.f32 0.5, %v3582
        %v3584 = vsub.f32 1.5, %v3583
        %v3585 = vmul.f32 %v3580, %v3584
        %vm3586 = vweird.f32 %v3518
        %vm3587 = vweird.f32 %v3580
        %vm3588 = vmor %vm3586, %vm3587
        %v3589 = vsel %vm3588, %v3580, %v3585
        %v3590 = vrsqrt.pop %v3519
        %v3591 = vmul.f32 %v3590, %v3519
        %v3592 = vmul.f32 %v3591, %v3590
        %v3593 = vmul.f32 0.5, %v3592
        %v3594 = vsub.f32 1.5, %v3593
        %v3595 = vmul.f32 %v3590, %v3594
        %vm3596 = vweird.f32 %v3519
        %vm3597 = vweird.f32 %v3590
        %vm3598 = vmor %vm3596, %vm3597
        %v3599 = vsel %vm3598, %v3590, %v3595
        %v3600 = vmul.f32 %v3464, %v3529
        %v3601 = vmul.f32 %v3465, %v3539
        %v3602 = vmul.f32 %v3466, %v3549
        %v3603 = vmul.f32 %v3467, %v3559
        %v3604 = vmul.f32 %v3468, %v3569
        %v3605 = vmul.f32 %v3469, %v3579
        %v3606 = vmul.f32 %v3470, %v3589
        %v3607 = vmul.f32 %v3471, %v3599
        %v3609 = vperm.slane %v3430, 0
        %v3611 = vmul.f32 %v3600, %v3609
        %v3612 = vmul.f32 %v3601, %v3609
        %v3613 = vmul.f32 %v3602, %v3609
        %v3614 = vmul.f32 %v3603, %v3609
        %v3615 = vmul.f32 %v3604, %v3609
        %v3616 = vmul.f32 %v3605, %v3609
        %v3617 = vmul.f32 %v3606, %v3609
        %v3618 = vmul.f32 %v3607, %v3609
        %v3620 = vperm.slane %v3431, 0
        %v3622 = vadd.f32 %v3611, %v3620
        %v3623 = vadd.f32 %v3612, %v3620
        %v3624 = vadd.f32 %v3613, %v3620
        %v3625 = vadd.f32 %v3614, %v3620
        %v3626 = vadd.f32 %v3615, %v3620
        %v3627 = vadd.f32 %v3616, %v3620
        %v3628 = vadd.f32 %v3617, %v3620
        %v3629 = vadd.f32 %v3618, %v3620
        %v3630 = vpack.c.bf16 %v3623, %v3622
        %v3631 = vpack.c.bf16 %v3625, %v3624
        %v3632 = vpack.c.bf16 %v3627, %v3626
        %v3633 = vpack.c.bf16 %v3629, %v3628
        %v3634 = vld [vmem:[%s893] sm:$0xf]
        %v3635 = vld [vmem:[%s893 + $0x4] sm:$0xf]
        %v3636 = vld [vmem:[%s893 + $0x8] sm:$0xf]
        %v3637 = vld [vmem:[%s893 + $0xc] sm:$0xf]
        %v3638 = vld [vmem:[%s760] sm:$0x1]
        %v3640 = vperm.slane %v3638, 0
        %v3646 = vunpack.c.l.b16 %v3634
        %v3647 = vunpack.c.l.b16 %v3635
        %v3648 = vunpack.c.l.b16 %v3636
        %v3649 = vunpack.c.l.b16 %v3637
        %v3650 = vpack.c.b16 %v3647, %v3646
        %v3651 = vpack.c.b16 %v3649, %v3648
        %v3655 = vsel %vm931, %v3630, 0
        %v3658 = vsel %vm931, %v3631, 0
        %v3661 = vsel %vm931, %v3632, 0
        %v3664 = vsel %vm931, %v3633, 0
        %3666 = vmatpush.bf16.msra.mxu0 0
        %3667 = vmatpush.bf16.msra.mxu0 0
        %3668 = vmatpush.bf16.msra.mxu0 0
        %3669 = vmatpush.bf16.msra.mxu0 0
        %3670 = vmatpush.bf16.msra.mxu0 0
        %3671 = vmatpush.bf16.msra.mxu0 0
        %3672 = vmatpush.bf16.msra.mxu0 %v3651
        %3673 = vmatpush.bf16.msra.mxu0 %v3650
        %3674 = vmatmul.bf16.gmra.mxu0 %v3655
        %v3675 = vpop.f32.mrf.mxu0
        %v3676 = vadd.f32 %v3640, %v3675
        %v3677 = vpop.f32.mrf.mxu0
        %v3678 = vadd.f32 %v3640, %v3677
        %3679 = vmatmul.bf16.gmra.mxu0 %v3658
        %v3680 = vpop.f32.mrf.mxu0
        %v3681 = vadd.f32 %v3640, %v3680
        %v3682 = vpop.f32.mrf.mxu0
        %v3683 = vadd.f32 %v3640, %v3682
        %3684 = vmatmul.bf16.gmra.mxu0 %v3661
        %v3685 = vpop.f32.mrf.mxu0
        %v3686 = vadd.f32 %v3640, %v3685
        %v3687 = vpop.f32.mrf.mxu0
        %v3688 = vadd.f32 %v3640, %v3687
        %3689 = vmatmul.bf16.gmra.mxu0 %v3664
        %v3690 = vpop.f32.mrf.mxu0
        %v3691 = vadd.f32 %v3640, %v3690
        %v3692 = vpop.f32.mrf.mxu0
        %v3693 = vadd.f32 %v3640, %v3692
        %3694 = vdwg.mxu0
        %v3695 = vmax.f32 %v3676, 0.0
        %v3696 = vmax.f32 %v3678, 0.0
        %v3697 = vmax.f32 %v3681, 0.0
        %v3698 = vmax.f32 %v3683, 0.0
        %v3699 = vmax.f32 %v3686, 0.0
        %v3700 = vmax.f32 %v3688, 0.0
        %v3701 = vmax.f32 %v3691, 0.0
        %v3702 = vmax.f32 %v3693, 0.0
        %v3703 = vpack.c.bf16 %v3696, %v3695
        %v3704 = vpack.c.bf16 %v3698, %v3697
        %v3705 = vpack.c.bf16 %v3700, %v3699
        %v3706 = vpack.c.bf16 %v3702, %v3701
        %v3707 = vld [vmem:[%s898] sm:$0xf]
        %v3708 = vld [vmem:[%s898 + $0x4] sm:$0xf]
        %v3709 = vld [vmem:[%s898 + $0x8] sm:$0xf]
        %v3710 = vld [vmem:[%s898 + $0xc] sm:$0xf]
        %v3711 = vld [vmem:[%s898 + $0x10] sm:$0xf]
        %v3712 = vld [vmem:[%s898 + $0x14] sm:$0xf]
        %v3713 = vld [vmem:[%s898 + $0x18] sm:$0xf]
        %v3714 = vld [vmem:[%s898 + $0x1c] sm:$0xf]
        %v3715 = vld [vmem:[%s769] sm:$0x1]
        %v3717 = vperm.slane %v3715, 0
        %v3727 = vunpack.c.l.b16 %v3707
        %v3728 = vunpack.c.l.b16 %v3708
        %v3729 = vunpack.c.l.b16 %v3709
        %v3730 = vunpack.c.l.b16 %v3710
        %v3731 = vunpack.c.l.b16 %v3711
        %v3732 = vunpack.c.l.b16 %v3712
        %v3733 = vunpack.c.l.b16 %v3713
        %v3734 = vunpack.c.l.b16 %v3714
        %v3735 = vpack.c.b16 %v3728, %v3727
        %v3736 = vpack.c.b16 %v3730, %v3729
        %v3737 = vpack.c.b16 %v3732, %v3731
        %v3738 = vpack.c.b16 %v3734, %v3733
        %vm3743 = vcmask 523264
        %v3745 = vsel %vm3743, %v3703, 0
        %v3748 = vsel %vm3743, %v3704, 0
        %v3751 = vsel %vm3743, %v3705, 0
        %v3754 = vsel %vm3743, %v3706, 0
        %3756 = vmatpush.bf16.msra.mxu0 0
        %3757 = vmatpush.bf16.msra.mxu0 0
        %3758 = vmatpush.bf16.msra.mxu0 0
        %3759 = vmatpush.bf16.msra.mxu0 0
        %3760 = vmatpush.bf16.msra.mxu0 %v3738
        %3761 = vmatpush.bf16.msra.mxu0 %v3737
        %3762 = vmatpush.bf16.msra.mxu0 %v3736
        %3763 = vmatpush.bf16.msra.mxu0 %v3735
        %3764 = vmatmul.bf16.gmra.mxu0 %v3745
        %v3765 = vpop.f32.mrf.mxu0
        %v3766 = vadd.f32 %v3717, %v3765
        %v3767 = vpop.f32.mrf.mxu0
        %v3768 = vadd.f32 %v3717, %v3767
        %3769 = vmatmul.bf16.gmra.mxu0 %v3748
        %v3770 = vpop.f32.mrf.mxu0
        %v3771 = vadd.f32 %v3717, %v3770
        %v3772 = vpop.f32.mrf.mxu0
        %v3773 = vadd.f32 %v3717, %v3772
        %3774 = vmatmul.bf16.gmra.mxu0 %v3751
        %v3775 = vpop.f32.mrf.mxu0
        %v3776 = vadd.f32 %v3717, %v3775
        %v3777 = vpop.f32.mrf.mxu0
        %v3778 = vadd.f32 %v3717, %v3777
        %3779 = vmatmul.bf16.gmra.mxu0 %v3754
        %v3780 = vpop.f32.mrf.mxu0
        %v3781 = vadd.f32 %v3717, %v3780
        %v3782 = vpop.f32.mrf.mxu0
        %v3783 = vadd.f32 %v3717, %v3782
        %3784 = vdwg.mxu0
        %v3785 = vadd.f32 %v3422, %v3766
        %v3786 = vadd.f32 %v3423, %v3768
        %v3787 = vadd.f32 %v3424, %v3771
        %v3788 = vadd.f32 %v3425, %v3773
        %v3789 = vadd.f32 %v3426, %v3776
        %v3790 = vadd.f32 %v3427, %v3778
        %v3791 = vadd.f32 %v3428, %v3781
        %v3792 = vadd.f32 %v3429, %v3783
        %3793 = vst.msk [vmem:[#allocation2] sm:$0xff] %vm931, %v3785
        %3794 = vst.msk [vmem:[#allocation2 + $0x8] sm:$0xff] %vm931, %v3786
        %3795 = vst.msk [vmem:[#allocation2 + $0x10] sm:$0xff] %vm931, %v3787
        %3796 = vst.msk [vmem:[#allocation2 + $0x18] sm:$0xff] %vm931, %v3788
        %3797 = vst.msk [vmem:[#allocation2 + $0x20] sm:$0xff] %vm931, %v3789
        %3798 = vst.msk [vmem:[#allocation2 + $0x28] sm:$0xff] %vm931, %v3790
        %3799 = vst.msk [vmem:[#allocation2 + $0x30] sm:$0xff] %vm931, %v3791
        %3800 = vst.msk [vmem:[#allocation2 + $0x38] sm:$0xff] %vm931, %v3792
        %p3801 = scmp.eq.s32.totalorder %s50, 1
        // Predicated region
        $region125: #{tpu_custom_call.1} parent=83 // pred_check
          %p3802 = pneg %p3801
        $region126: #{tpu_custom_call.1} parent=83 // pred_check_branch
          %3804 = sbr.rel (%p3802) target = $region128
        $region127: #{tpu_custom_call.1} parent=83 // pred_region
          %v3805 = vld [vmem:[#allocation17] sm:$0x7]
          %v3806 = vmul.f32 %v3785, %v3805
          %v3807 = vmul.f32 %v3786, %v3805
          %v3808 = vmul.f32 %v3787, %v3805
          %v3809 = vmul.f32 %v3788, %v3805
          %v3810 = vmul.f32 %v3789, %v3805
          %v3811 = vmul.f32 %v3790, %v3805
          %v3812 = vmul.f32 %v3791, %v3805
          %v3813 = vmul.f32 %v3792, %v3805
          %vm3814 = vcmask 256000
          %v3815 = vsel %vm3814, %v3806, 0.0
          %3816 = vadd.xlane.f32.xlu0 %v3815
          %v3817 = vpop.xlane.xlu0 %3816
          %v3818 = vsel %vm3814, %v3807, 0.0
          %3819 = vadd.xlane.f32.xlu0 %v3818
          %v3820 = vpop.xlane.xlu0 %3819
          %v3821 = vsel %vm3814, %v3808, 0.0
          %3822 = vadd.xlane.f32.xlu0 %v3821
          %v3823 = vpop.xlane.xlu0 %3822
          %v3824 = vsel %vm3814, %v3809, 0.0
          %3825 = vadd.xlane.f32.xlu0 %v3824
          %v3826 = vpop.xlane.xlu0 %3825
          %v3827 = vsel %vm3814, %v3810, 0.0
          %3828 = vadd.xlane.f32.xlu0 %v3827
          %v3829 = vpop.xlane.xlu0 %3828
          %v3830 = vsel %vm3814, %v3811, 0.0
          %3831 = vadd.xlane.f32.xlu0 %v3830
          %v3832 = vpop.xlane.xlu0 %3831
          %v3833 = vsel %vm3814, %v3812, 0.0
          %3834 = vadd.xlane.f32.xlu0 %v3833
          %v3835 = vpop.xlane.xlu0 %3834
          %v3836 = vsel %vm3814, %v3813, 0.0
          %3837 = vadd.xlane.f32.xlu0 %v3836
          %v3838 = vpop.xlane.xlu0 %3837
          %3847 = vst.sshfl [vmem:[#allocation1] sm:$0xff pattern:$0x73625140] %v3785
          %s3848 = scalar_lea.vmem [#allocation1], 1
          %v3849 = vld [vmem:[%s3848] ss:$4 sm:$0xff]
          %s3850 = scalar_lea.vmem [#allocation1], 2
          %v3851 = vld [vmem:[%s3850] ss:$4 sm:$0xff]
          %3852 = vst.sshfl [vmem:[#allocation1 + $0x20] sm:$0xff pattern:$0x73625140] %v3786
          %s3853 = scalar_lea.vmem [#allocation1], 33
          %v3854 = vld [vmem:[%s3853] ss:$4 sm:$0xff]
          %s3855 = scalar_lea.vmem [#allocation1], 34
          %v3856 = vld [vmem:[%s3855] ss:$4 sm:$0xff]
          %3857 = vst.sshfl [vmem:[#allocation1] sm:$0xff pattern:$0x73625140] %v3787
          %v3858 = vld [vmem:[%s3848] ss:$4 sm:$0xff]
          %v3859 = vld [vmem:[%s3850] ss:$4 sm:$0xff]
          %3860 = vst.sshfl [vmem:[#allocation1 + $0x20] sm:$0xff pattern:$0x73625140] %v3788
          %v3861 = vld [vmem:[%s3853] ss:$4 sm:$0xff]
          %v3862 = vld [vmem:[%s3855] ss:$4 sm:$0xff]
          %3863 = vst.sshfl [vmem:[#allocation1] sm:$0xff pattern:$0x73625140] %v3789
          %v3864 = vld [vmem:[%s3848] ss:$4 sm:$0xff]
          %v3865 = vld [vmem:[%s3850] ss:$4 sm:$0xff]
          %3866 = vst.sshfl [vmem:[#allocation1 + $0x20] sm:$0xff pattern:$0x73625140] %v3790
          %v3867 = vld [vmem:[%s3853] ss:$4 sm:$0xff]
          %v3868 = vld [vmem:[%s3855] ss:$4 sm:$0xff]
          %3869 = vst.sshfl [vmem:[#allocation1] sm:$0xff pattern:$0x73625140] %v3791
          %v3870 = vld [vmem:[%s3848] ss:$4 sm:$0xff]
          %v3871 = vld [vmem:[%s3850] ss:$4 sm:$0xff]
          %3872 = vst.sshfl [vmem:[#allocation1 + $0x20] sm:$0xff pattern:$0x73625140] %v3792
          %v3873 = vld [vmem:[%s3853] ss:$4 sm:$0xff]
          %v3874 = vld [vmem:[%s3855] ss:$4 sm:$0xff]
          %vm3875 = vcmask 1040384
          %vm3876 = vcmask 1042434
          %vm3877 = vmor %vm3875, %vm3876
          %vm3878 = vcmask 1044484
          %vm3879 = vmor %vm3877, %vm3878
          %vm3880 = vcmask 1046534
          %vm3881 = vmor %vm3879, %vm3880
          %v3882 = vrot.slane %v3849, 7
          %v3883 = vrot.slane %v3882, 2
          %v3884 = vrot.slane %v3851, 7
          %v3885 = vsel %vm3881, %v3883, %v3884
          %v3886 = vrot.slane %v3854, 7
          %v3887 = vrot.slane %v3886, 2
          %v3888 = vrot.slane %v3856, 7
          %v3889 = vsel %vm3881, %v3887, %v3888
          %v3890 = vrot.slane %v3858, 7
          %v3891 = vrot.slane %v3890, 2
          %v3892 = vrot.slane %v3859, 7
          %v3893 = vsel %vm3881, %v3891, %v3892
          %v3894 = vrot.slane %v3861, 7
          %v3895 = vrot.slane %v3894, 2
          %v3896 = vrot.slane %v3862, 7
          %v3897 = vsel %vm3881, %v3895, %v3896
          %v3898 = vrot.slane %v3864, 7
          %v3899 = vrot.slane %v3898, 2
          %v3900 = vrot.slane %v3865, 7
          %v3901 = vsel %vm3881, %v3899, %v3900
          %v3902 = vrot.slane %v3867, 7
          %v3903 = vrot.slane %v3902, 2
          %v3904 = vrot.slane %v3868, 7
          %v3905 = vsel %vm3881, %v3903, %v3904
          %v3906 = vrot.slane %v3870, 7
          %v3907 = vrot.slane %v3906, 2
          %v3908 = vrot.slane %v3871, 7
          %v3909 = vsel %vm3881, %v3907, %v3908
          %v3910 = vrot.slane %v3873, 7
          %v3911 = vrot.slane %v3910, 2
          %v3912 = vrot.slane %v3874, 7
          %v3913 = vsel %vm3881, %v3911, %v3912
          %3914 = vst [vmem:[#allocation1] ss:$4 sm:$0xff] %v3885
          %s3915 = scalar_lea.vmem [#allocation1], 1
          %3916 = vst [vmem:[%s3915] ss:$4 sm:$0xff] %v3889
          %s3917 = scalar_lea.vmem [#allocation1], 2
          %3918 = vst [vmem:[%s3917] ss:$4 sm:$0xff] %v3893
          %s3919 = scalar_lea.vmem [#allocation1], 3
          %3920 = vst [vmem:[%s3919] ss:$4 sm:$0xff] %v3897
          %s3921 = scalar_lea.vmem [#allocation1], 32
          %3922 = vst [vmem:[%s3921] ss:$4 sm:$0xff] %v3901
          %s3923 = scalar_lea.vmem [#allocation1], 33
          %3924 = vst [vmem:[%s3923] ss:$4 sm:$0xff] %v3905
          %s3925 = scalar_lea.vmem [#allocation1], 34
          %3926 = vst [vmem:[%s3925] ss:$4 sm:$0xff] %v3909
          %s3927 = scalar_lea.vmem [#allocation1], 35
          %3928 = vst [vmem:[%s3927] ss:$4 sm:$0xff] %v3913
          %v3929 = vld.sshfl [vmem:[#allocation1] sm:$0xff pattern:$0x73625140]
          %v3930 = vld.sshfl [vmem:[#allocation1 + $0x20] sm:$0xff pattern:$0x73625140]
          %v3933 = vpack.c.bf16 %v3930, %v3929
          %v3934 = vld [vmem:[%s14] sm:$0xf]
          %v3935 = vld [vmem:[%s14 + $0x4] sm:$0xf]
          %v3936 = vld [vmem:[%s14 + $0x8] sm:$0xf]
          %v3937 = vld [vmem:[%s14 + $0xc] sm:$0xf]
          %v3942 = vunpack.c.l.b16 %v3934
          %v3943 = vunpack.c.l.b16 %v3935
          %v3944 = vunpack.c.l.b16 %v3936
          %v3945 = vunpack.c.l.b16 %v3937
          %v3946 = vpack.c.b16 %v3943, %v3942
          %v3947 = vpack.c.b16 %v3945, %v3944
          %v3951 = vsel %vm931, %v3933, 0
          %3953 = vmatpush.bf16.msra.mxu0 0
          %3954 = vmatpush.bf16.msra.mxu0 0
          %3955 = vmatpush.bf16.msra.mxu0 0
          %3956 = vmatpush.bf16.msra.mxu0 0
          %3957 = vmatpush.bf16.msra.mxu0 0
          %3958 = vmatpush.bf16.msra.mxu0 0
          %3959 = vmatpush.bf16.msra.mxu0 %v3947
          %3960 = vmatpush.bf16.msra.mxu0 %v3946
          %3961 = vmatmul.bf16.gmra.mxu0 %v3951
          %v3962 = vpop.f32.mrf.mxu0
          %v3963 = vadd.f32 0.0, %v3962
          %v3964 = vpop.f32.mrf.mxu0
          %v3965 = vadd.f32 0.0, %v3964
          %3966 = vdwg.mxu0
          %v3969 = vrot.slane %v3963, 2
          %v3970 = vrot.slane %v3963, 4
          %v3971 = vrot.slane %v3963, 6
          %v3972 = vrot.slane %v3965, 2
          %v3973 = vrot.slane %v3965, 4
          %v3974 = vrot.slane %v3965, 6
          %v3981 = vld [vmem:[%s15] sm:$0x1]
          %v3983 = vperm.slane %v3981, 0
          %v3985 = vadd.f32 %v3963, %v3983
          %v3986 = vadd.f32 %v3969, %v3983
          %v3987 = vadd.f32 %v3970, %v3983
          %v3988 = vadd.f32 %v3971, %v3983
          %v3989 = vadd.f32 %v3965, %v3983
          %v3990 = vadd.f32 %v3972, %v3983
          %v3991 = vadd.f32 %v3973, %v3983
          %v3992 = vadd.f32 %v3974, %v3983
          %v4001 = vperm.slane %v3817, %v2144
          %v4002 = vperm.slane %v3820, %v2144
          %v4003 = vperm.slane %v3823, %v2144
          %v4004 = vperm.slane %v3826, %v2144
          %v4005 = vperm.slane %v3829, %v2144
          %v4006 = vperm.slane %v3832, %v2144
          %v4007 = vperm.slane %v3835, %v2144
          %v4008 = vperm.slane %v3838, %v2144
          %vm4009 = vcmask 1041409
          %v4010 = vsel %vm4009, %v4002, %v4001
          %v4011 = vsel %vm3876, %v4003, %v4010
          %vm4012 = vcmask 1043459
          %v4013 = vsel %vm4012, %v4004, %v4011
          %v4014 = vsel %vm3878, %v4005, %v4013
          %vm4015 = vcmask 1045509
          %v4016 = vsel %vm4015, %v4006, %v4014
          %v4017 = vsel %vm3880, %v4007, %v4016
          %vm4018 = vcmask 1047559
          %v4019 = vsel %vm4018, %v4008, %v4017
          %v4029 = vperm.slane %v3985, 0
          %v4030 = vperm.slane %v3986, 0
          %v4031 = vperm.slane %v3987, 0
          %v4032 = vperm.slane %v3988, 0
          %v4033 = vperm.slane %v3989, 0
          %v4034 = vperm.slane %v3990, 0
          %v4035 = vperm.slane %v3991, 0
          %v4036 = vperm.slane %v3992, 0
          %v4037 = vsel %vm4009, %v4030, %v4029
          %v4038 = vsel %vm3876, %v4031, %v4037
          %v4039 = vsel %vm4012, %v4032, %v4038
          %v4040 = vsel %vm3878, %v4033, %v4039
          %v4041 = vsel %vm4015, %v4034, %v4040
          %v4042 = vsel %vm3880, %v4035, %v4041
          %v4043 = vsel %vm4018, %v4036, %v4042
          %4044 = vrot.lane.b32.xlu0 %v4043, 3
          %v4045 = vpop.permute.xlu0 %4044
          %v4047 = vperm.slane %v3985, 1
          %v4048 = vperm.slane %v3986, 1
          %v4049 = vperm.slane %v3987, 1
          %v4050 = vperm.slane %v3988, 1
          %v4051 = vperm.slane %v3989, 1
          %v4052 = vperm.slane %v3990, 1
          %v4053 = vperm.slane %v3991, 1
          %v4054 = vperm.slane %v3992, 1
          %v4055 = vsel %vm4009, %v4048, %v4047
          %v4056 = vsel %vm3876, %v4049, %v4055
          %v4057 = vsel %vm4012, %v4050, %v4056
          %v4058 = vsel %vm3878, %v4051, %v4057
          %v4059 = vsel %vm4015, %v4052, %v4058
          %v4060 = vsel %vm3880, %v4053, %v4059
          %v4061 = vsel %vm4018, %v4054, %v4060
          %4062 = vrot.lane.b32.xlu0 %v4061, 3
          %v4063 = vpop.permute.xlu0 %4062
          %vm4065 = vcmask 23552
          %v4066 = vsel %vm4065, %v4019, %v4045
          %vm4067 = vcmask 56320
          %v4068 = vsel %vm4067, %v4066, %v4063
          %vm4069 = vcmask 97280
          %v4070 = vsel %vm4069, %v4068, 0.0
          %4071 = vst [vmem:[%s874] sm:$0xff] %v4070
        $region128: #{tpu_custom_call.1} parent=83 // pred_fallthru
          _
        %s4072 = sand.u32 %s466, 1
        %s4073 = scalar_lea.sflag [#allocation5], %s4072
        %s4074 = sand.u32 %s466, 1
        %s4075 = smul.addr %s4074, 8
        %s4076 = scalar_lea.vmem [#allocation18], %s4075
        // Predicated region
        $region129: #{tpu_custom_call.1} parent=83 // pred_check
          %p4077 = pneg %p476
        $region130: #{tpu_custom_call.1} parent=83 // pred_check_branch
          %4079 = sbr.rel (%p4077) target = $region132
        $region131: #{tpu_custom_call.1} parent=83 // pred_region
          %4081 = vsyncadd %s4073, 0
          %s4082 = smul.addr %s49, 8
          %s4083 = scalar_lea.hbm %s16, %s4082
          %s4085 = sshll.u32 %s4076, 4
          %s4086 = int_to_ptr.vmem [resolvable:$true] %s4085
          %s4087 = sshll.u32 %s4083, 4
          %s4088 = int_to_ptr.hbm [resolvable:$true] %s4087
          %4090 = dma.vmem_to_hbm [thread:$0]  %s4086, 128, %s4088, %s4073
        $region132: #{tpu_custom_call.1} parent=83 // pred_fallthru
          _
      $region84: #{tpu_custom_call.1} parent=5 // pred_fallthru
        _
      %p4091 = scmp.le.s32.totalorder 2, %s40
      // Predicated region
      $region133: #{tpu_custom_call.1} parent=5 // pred_check
        %p4092 = pneg %p4091
      $region134: #{tpu_custom_call.1} parent=5 // pred_check_branch
        %4094 = sbr.rel (%p4092) target = $region136
      $region135: #{tpu_custom_call.1} parent=5 // pred_region
        %s4095 = ssub.s32 %s40, 2
        // Predicated region
        $region137: #{tpu_custom_call.1} parent=135 // pred_check
          %p4096 = pneg %p482
        $region138: #{tpu_custom_call.1} parent=135 // pred_check_branch
          %4098 = sbr.rel (%p4096) target = $region140
        $region139: #{tpu_custom_call.1} parent=135 // pred_region
          %s4099 = sand.u32 %s467, 1
          %s4100 = scalar_lea.sflag [#allocation5], %s4099
          %s4101 = sand.u32 %s467, 1
          %s4102 = smul.addr %s4101, 8
          %s4103 = scalar_lea.vmem [#allocation18], %s4102
          %4105 = dma.done %s4100, 128
        $region140: #{tpu_custom_call.1} parent=135 // pred_fallthru
          _
      $region136: #{tpu_custom_call.1} parent=5 // pred_fallthru
        _
    $region6: #{tpu_custom_call.1} parent=1 // loop_footer
      %s44 = sadd.s32 1, %s40
    $region7: #{tpu_custom_call.1} parent=1 // loop_footer_branch
      %39 = sbr.rel target = $region3
    $region8: #{tpu_custom_call.1} parent=1 // loop_exit
      _
    %4106 = vsyncpa [#allocation4], 1
    %s4107 = scalar_lea.sflag [#allocation4], 1
    %4108 = vsyncpa %s4107, 1
    %4109 = vsyncpa [#allocation7], 1
    %s4110 = scalar_lea.sflag [#allocation7], 1
    %4111 = vsyncpa %s4110, 1
    %4112 = vsyncpa [#allocation10], 1
    %s4113 = scalar_lea.sflag [#allocation10], 1
    %4114 = vsyncpa %s4113, 1
    %4115 = vsyncpa [#allocation13], 1
    %s4116 = scalar_lea.sflag [#allocation13], 1
    %4117 = vsyncpa %s4116, 1
    %4118 = vsyncpa [#allocation16], 1
    %s4119 = scalar_lea.sflag [#allocation16], 1
    %4120 = vsyncpa %s4119, 1
    %4121 = vsyncpa [#allocation5], 1
    %s4122 = scalar_lea.sflag [#allocation5], 1
    %4123 = vsyncpa %s4122, 1

</llo_original>
